<compile_context>
chip_gen: v7x
topology: tpu7x:2x2x1
jax: 0.10.0
libtpu: 0.0.40
codegen_flags: <defaults>
</compile_context>

<pallas_src>
import functools

import jax
import jax.numpy as jnp
from jax import lax
from jax.experimental import pallas as pl
from jax.experimental.pallas import tpu as pltpu

EPS_BN = 1e-5   # nn.BatchNorm1d default eps
EPS_IN = 1e-5   # nn.InstanceNorm1d default eps


# ----------------------------------------------------------------------------
# Fused per-layer kernel (one grid step = one sample), channels-last.
# ----------------------------------------------------------------------------
def _layer_kernel(x_ref, y_ref,
                  w1_ref, s1_ref, t1_ref,
                  w2_ref, s2_ref, t2_ref,
                  w3_ref, s3_ref, t3_ref,
                  sbn_ref, tbn_ref,
                  wq_ref, wk_ref, wv_ref, wo_ref,
                  o_ref, r_sc, *, n_heads, d_model):
    x = x_ref[0].astype(jnp.float32)                       # (L, C)
    y = y_ref[0].astype(jnp.float32)                       # (Lk, C)
    L_out = o_ref.shape[1]

    def conv3_bn(h, w_ref, s_ref, t_ref):
        # conv1d(k=3, pad=1): out[l] = x[l-1]@W0 + x[l]@W1 + x[l+1]@W2.
        # Three tap matmuls; the tap OUTPUTS are shifted by one row with
        # static slices + a zero boundary row (non-negative, unambiguous).
        hb = h.astype(jnp.bfloat16)
        a = jnp.dot(hb, w_ref[0], preferred_element_type=jnp.float32)  # x[l-1] tap
        b = jnp.dot(hb, w_ref[1], preferred_element_type=jnp.float32)  # x[l]   tap
        c = jnp.dot(hb, w_ref[2], preferred_element_type=jnp.float32)  # x[l+1] tap
        zero = jnp.zeros((1, a.shape[1]), jnp.float32)
        out = (b
               + jnp.concatenate([zero, a[:-1, :]], axis=0)    # out[l] += a[l-1]
               + jnp.concatenate([c[1:, :], zero], axis=0))    # out[l] += c[l+1]
        return out * s_ref[...] + t_ref[...]                   # folded BN (+ conv bias)

    # ---- IbnBlock ----
    h = jnp.maximum(conv3_bn(x, w1_ref, s1_ref, t1_ref), 0.0)
    h = jnp.maximum(conv3_bn(h, w2_ref, s2_ref, t2_ref), 0.0)
    h = conv3_bn(h, w3_ref, s3_ref, t3_ref)
    r = x + h                                              # residual
    # InstanceNorm1d (no affine): per channel over L, biased variance (f32).
    mean = jnp.mean(r, axis=0, keepdims=True)
    var = jnp.mean((r - mean) ** 2, axis=0, keepdims=True)
    r = jnp.maximum((r - mean) * lax.rsqrt(var + EPS_IN), 0.0)   # IN + ReLU

    # ---- max_pool1d(kernel_size=2): one max over two stride-2 ref views ----
    r_sc[...] = r
    x_ds = jnp.maximum(r_sc[pl.ds(0, L_out, stride=2), :],
                       r_sc[pl.ds(1, L_out, stride=2), :])       # (L_out, C)

    # ---- norm2 = BatchNorm1d(eval); the residual uses this normalized x ----
    xq = x_ds * sbn_ref[...] + tbn_ref[...]                # (L_out, D)

    # ---- Attention(xq, y, y) + residual (dropout = identity at inference).
    #      Heads via per-head weight blocks: wq/wk/wv (H, D, dh), wo (H, dh, D)
    #      -> no 8-lane activation slices and no lane concat in-kernel. ----
    inv_scale = 1.0 / (d_model ** 0.5)   # reference scales by sqrt(d_model)
    xq_b = xq.astype(jnp.bfloat16)
    y_b = y.astype(jnp.bfloat16)
    attn = jnp.zeros((L_out, d_model), jnp.float32)
    for hh in range(n_heads):                              # static unrolled loop
        qh = jnp.dot(xq_b, wq_ref[hh], preferred_element_type=jnp.float32)
        kh = jnp.dot(y_b, wk_ref[hh], preferred_element_type=jnp.float32)
        vh = jnp.dot(y_b, wv_ref[hh], preferred_element_type=jnp.float32)
        s = lax.dot_general(qh.astype(jnp.bfloat16), kh.astype(jnp.bfloat16),
                            (((1,), (1,)), ((), ())),
                            preferred_element_type=jnp.float32) * inv_scale
        s = s - jnp.max(s, axis=-1, keepdims=True)         # stable softmax (f32)
        p = jnp.exp(s)
        p = p / jnp.sum(p, axis=-1, keepdims=True)
        ctx = jnp.dot(p.astype(jnp.bfloat16), vh.astype(jnp.bfloat16),
                      preferred_element_type=jnp.float32)
        attn = attn + jnp.dot(ctx.astype(jnp.bfloat16), wo_ref[hh],
                              preferred_element_type=jnp.float32)

    o_ref[0] = xq + attn


# ----------------------------------------------------------------------------
# JAX glue
# ----------------------------------------------------------------------------
def _fold_bn(gamma, beta, mean, var, conv_bias=None):
    scale = gamma / jnp.sqrt(var + EPS_BN)
    shift = beta - mean * scale
    if conv_bias is not None:
        shift = shift + conv_bias * scale
    return scale[None, :].astype(jnp.float32), shift[None, :].astype(jnp.float32)


def _full_spec(a):
    return pl.BlockSpec(a.shape, lambda n, _nd=a.ndim: (0,) * _nd)


def sample_encoder_layer(x_nlc, y_nlc, p, n_heads):
    """x_nlc: (N, L, C), y_nlc: (N, Lk, C) -> (N, L//2, C), channels-last."""
    N, L, C = x_nlc.shape
    _, Lk, _ = y_nlc.shape
    L_out = L // 2
    H = n_heads
    dh = C // H
    d = p["down"]
    a = p["attn"]

    # conv1d k=3 weights kept tap-major channels-last (3, Cin, Cout), bf16 for MXU.
    w1 = d["conv1_w"].astype(jnp.bfloat16)
    w2 = d["conv2_w"].astype(jnp.bfloat16)
    w3 = d["conv3_w"].astype(jnp.bfloat16)
    s1, t1 = _fold_bn(d["bn1_g"], d["bn1_b"], d["bn1_m"], d["bn1_v"], d["conv1_b"])
    s2, t2 = _fold_bn(d["bn2_g"], d["bn2_b"], d["bn2_m"], d["bn2_v"], d["conv2_b"])
    s3, t3 = _fold_bn(d["bn3_g"], d["bn3_b"], d["bn3_m"], d["bn3_v"], d["conv3_b"])
    sbn, tbn = _fold_bn(a["bn_g"], a["bn_b"], a["bn_m"], a["bn_v"])

    # Per-head weight blocks: q/k/v take column blocks (H, D, dh); out takes
    # row blocks (H, dh, D).  Matches the reference head split (head-major cols).
    wq = jnp.transpose(a["wq"].reshape(C, H, dh), (1, 0, 2)).astype(jnp.bfloat16)
    wk = jnp.transpose(a["wk"].reshape(C, H, dh), (1, 0, 2)).astype(jnp.bfloat16)
    wv = jnp.transpose(a["wv"].reshape(C, H, dh), (1, 0, 2)).astype(jnp.bfloat16)
    wo = a["wo"].reshape(H, dh, C).astype(jnp.bfloat16)

    args = (x_nlc, y_nlc, w1, s1, t1, w2, s2, t2, w3, s3, t3,
            sbn, tbn, wq, wk, wv, wo)

    mid = int(w1.shape[-1])
    flops = (2 * N * L * 3 * (C * mid + mid * mid + mid * C)
             + 2 * N * (2 * L_out * C * C + 2 * Lk * C * C + 2 * L_out * Lk * C))
    transcendentals = N * (H * L_out * Lk + C + H * L_out)
    bytes_accessed = (sum(int(t.size) * int(t.dtype.itemsize) for t in args)
                      + N * L_out * C * 4)

    kernel = functools.partial(_layer_kernel, n_heads=H, d_model=C)
    return pl.pallas_call(
        kernel,
        out_shape=jax.ShapeDtypeStruct((N, L_out, C), jnp.float32),
        grid=(N,),
        in_specs=[pl.BlockSpec((1, L, C), lambda n: (n, 0, 0)),
                  pl.BlockSpec((1, Lk, C), lambda n: (n, 0, 0))]
                 + [_full_spec(t) for t in args[2:]],
        out_specs=pl.BlockSpec((1, L_out, C), lambda n: (n, 0, 0)),
        scratch_shapes=[pltpu.VMEM((L, C), jnp.float32)],
        compiler_params=pltpu.CompilerParams(dimension_semantics=("parallel",)),
        cost_estimate=pl.CostEstimate(flops=flops,
                                      transcendentals=transcendentals,
                                      bytes_accessed=bytes_accessed),
    )(*args)


def sample_encoder(x_ndl, examples_ndl, params, n_heads):
    """x: (N, D, L); examples: list of (N, D, Lk) -> list of (N, D, L_i)."""
    # TODO(synk): self_attention branch omitted — the reference constructor
    # never supplies the `self_attention` flag; treated as False.
    # TODO(synk): lane dim stays at C=32 (<128); padding channels / packing
    # samples along lanes would make stores unmasked but needs padded weights.
    x = jnp.transpose(x_ndl, (0, 2, 1))              # channels-last once at entry
    outs = []
    for ex, p in zip(examples_ndl, params):
        y = jnp.transpose(ex, (0, 2, 1))             # reference: y.permute(0, 2, 1)
        x = sample_encoder_layer(x, y, p, n_heads)   # stays channels-last
        outs.append(jnp.transpose(x, (0, 2, 1)))     # PyTorch (N, D, L) for outputs
    return outs


# ----------------------------------------------------------------------------
# Deterministic parameter init (synthetic; shapes follow the module __init__)
# ----------------------------------------------------------------------------
def init_layer_params(key, d, mid):
    keys = jax.random.split(key, 14)

    def bn(k, c):
        k1, k2, k3, k4 = jax.random.split(k, 4)
        return (1.0 + 0.1 * jax.random.normal(k1, (c,), jnp.float32),
                0.1 * jax.random.normal(k2, (c,), jnp.float32),
                0.1 * jax.random.normal(k3, (c,), jnp.float32),
                1.0 + 0.1 * jnp.abs(jax.random.normal(k4, (c,), jnp.float32)))

    b1, b2, b3, b4 = bn(keys[3], mid), bn(keys[4], mid), bn(keys[5], d), bn(keys[6], d)
    down = dict(
        # conv weights stored tap-major, channels-last: (3, Cin, Cout);
        # tap t pairs with x[l + t - 1] (t=0 <-> x[l-1]).
        conv1_w=0.1 * jax.random.normal(keys[0], (3, d, mid), jnp.float32),
        conv1_b=0.1 * jax.random.normal(keys[7], (mid,), jnp.float32),
        conv2_w=0.1 * jax.random.normal(keys[1], (3, mid, mid), jnp.float32),
        conv2_b=0.1 * jax.random.normal(keys[8], (mid,), jnp.float32),
        conv3_w=0.1 * jax.random.normal(keys[2], (3, mid, d), jnp.float32),
        conv3_b=0.1 * jax.random.normal(keys[9], (d,), jnp.float32),
        bn1_g=b1[0], bn1_b=b1[1], bn1_m=b1[2], bn1_v=b1[3],
        bn2_g=b2[0], bn2_b=b2[1], bn2_m=b2[2], bn2_v=b2[3],
        bn3_g=b3[0], bn3_b=b3[1], bn3_m=b3[2], bn3_v=b3[3],
    )
    sc = 1.0 / (d ** 0.5)
    attn = dict(
        bn_g=b4[0], bn_b=b4[1], bn_m=b4[2], bn_v=b4[3],
        # Linear weights stored already transposed: kernel computes x @ W.
        wq=sc * jax.random.normal(keys[10], (d, d), jnp.float32),
        wk=sc * jax.random.normal(keys[11], (d, d), jnp.float32),
        wv=sc * jax.random.normal(keys[12], (d, d), jnp.float32),
        wo=sc * jax.random.normal(keys[13], (d, d), jnp.float32),
    )
    return dict(down=down, attn=attn)


if __name__ == "__main__":
    N, D, MID, HEADS, N_LAYERS = 2, 32, 64, 4, 2
    L0, L_EX = 16, 8

    key = jax.random.PRNGKey(0)
    k_x, k_e, k_p = jax.random.split(key, 3)
    x = jax.random.normal(k_x, (N, D, L0), jnp.float32)
    examples = [jax.random.normal(jax.random.fold_in(k_e, i), (N, D, L_EX), jnp.float32)
                for i in range(N_LAYERS)]
    params = [init_layer_params(jax.random.fold_in(k_p, i), D, MID)
              for i in range(N_LAYERS)]

    outs = sample_encoder(x, examples, params, HEADS)
    outs = [jax.block_until_ready(o) for o in outs]

    assert outs[0].shape == (N, D, L0 // 2), outs[0].shape
    assert outs[1].shape == (N, D, L0 // 4), outs[1].shape
    assert all(bool(jnp.all(jnp.isfinite(o))) for o in outs)
    print("KERNEL_OK")
</pallas_src>

<mosaic_0001>
module attributes {stable_mosaic.version = 11 : i64} {
  func.func @_layer_kernel(%arg0: i32, %arg1: memref<1x16x32xf32, #tpu.memory_space<vmem>>, %arg2: memref<1x8x32xf32, #tpu.memory_space<vmem>>, %arg3: memref<3x32x64xbf16, #tpu.memory_space<vmem>>, %arg4: memref<1x64xf32, #tpu.memory_space<vmem>>, %arg5: memref<1x64xf32, #tpu.memory_space<vmem>>, %arg6: memref<3x64x64xbf16, #tpu.memory_space<vmem>>, %arg7: memref<1x64xf32, #tpu.memory_space<vmem>>, %arg8: memref<1x64xf32, #tpu.memory_space<vmem>>, %arg9: memref<3x64x32xbf16, #tpu.memory_space<vmem>>, %arg10: memref<1x32xf32, #tpu.memory_space<vmem>>, %arg11: memref<1x32xf32, #tpu.memory_space<vmem>>, %arg12: memref<1x32xf32, #tpu.memory_space<vmem>>, %arg13: memref<1x32xf32, #tpu.memory_space<vmem>>, %arg14: memref<4x32x8xbf16, #tpu.memory_space<vmem>>, %arg15: memref<4x32x8xbf16, #tpu.memory_space<vmem>>, %arg16: memref<4x32x8xbf16, #tpu.memory_space<vmem>>, %arg17: memref<4x8x32xbf16, #tpu.memory_space<vmem>>, %arg18: memref<1x8x32xf32, #tpu.memory_space<vmem>>, %arg19: memref<16x32xf32, #tpu.memory_space<vmem>>) attributes {dimension_semantics = [#tpu.dimension_semantics<parallel>], iteration_bounds = array<i64: 2>, scalar_prefetch = 0 : i64, scratch_operands = 1 : i64, tpu.core_type = #tpu.core_type<tc>, window_params = [{transform_indices = @transform_0, window_bounds = array<i64: 1, 16, 32>}, {transform_indices = @transform_1, window_bounds = array<i64: 1, 8, 32>}, {pipeline_mode = #tpu.pipeline_mode<synchronous>, transform_indices = @transform_2, window_bounds = array<i64: 3, 32, 64>}, {pipeline_mode = #tpu.pipeline_mode<synchronous>, transform_indices = @transform_3, window_bounds = array<i64: 1, 64>}, {pipeline_mode = #tpu.pipeline_mode<synchronous>, transform_indices = @transform_4, window_bounds = array<i64: 1, 64>}, {pipeline_mode = #tpu.pipeline_mode<synchronous>, transform_indices = @transform_5, window_bounds = array<i64: 3, 64, 64>}, {pipeline_mode = #tpu.pipeline_mode<synchronous>, transform_indices = @transform_6, window_bounds = array<i64: 1, 64>}, {pipeline_mode = #tpu.pipeline_mode<synchronous>, transform_indices = @transform_7, window_bounds = array<i64: 1, 64>}, {pipeline_mode = #tpu.pipeline_mode<synchronous>, transform_indices = @transform_8, window_bounds = array<i64: 3, 64, 32>}, {pipeline_mode = #tpu.pipeline_mode<synchronous>, transform_indices = @transform_9, window_bounds = array<i64: 1, 32>}, {pipeline_mode = #tpu.pipeline_mode<synchronous>, transform_indices = @transform_10, window_bounds = array<i64: 1, 32>}, {pipeline_mode = #tpu.pipeline_mode<synchronous>, transform_indices = @transform_11, window_bounds = array<i64: 1, 32>}, {pipeline_mode = #tpu.pipeline_mode<synchronous>, transform_indices = @transform_12, window_bounds = array<i64: 1, 32>}, {pipeline_mode = #tpu.pipeline_mode<synchronous>, transform_indices = @transform_13, window_bounds = array<i64: 4, 32, 8>}, {pipeline_mode = #tpu.pipeline_mode<synchronous>, transform_indices = @transform_14, window_bounds = array<i64: 4, 32, 8>}, {pipeline_mode = #tpu.pipeline_mode<synchronous>, transform_indices = @transform_15, window_bounds = array<i64: 4, 32, 8>}, {pipeline_mode = #tpu.pipeline_mode<synchronous>, transform_indices = @transform_16, window_bounds = array<i64: 4, 8, 32>}, {transform_indices = @transform_17, window_bounds = array<i64: 1, 8, 32>}]} {
    %c0 = arith.constant 0 : index
    %c0_0 = arith.constant 0 : index
    %c0_1 = arith.constant 0 : index
    %0 = vector.load %arg1[%c0, %c0_0, %c0_1] : memref<1x16x32xf32, #tpu.memory_space<vmem>>, vector<1x16x32xf32>
    %1 = vector.shape_cast %0 : vector<1x16x32xf32> to vector<16x32xf32>
    %c0_2 = arith.constant 0 : index
    %c0_3 = arith.constant 0 : index
    %c0_4 = arith.constant 0 : index
    %2 = vector.load %arg2[%c0_2, %c0_3, %c0_4] : memref<1x8x32xf32, #tpu.memory_space<vmem>>, vector<1x8x32xf32>
    %3 = vector.shape_cast %2 : vector<1x8x32xf32> to vector<8x32xf32>
    %4 = arith.truncf %1 : vector<16x32xf32> to vector<16x32xbf16>
    %c0_5 = arith.constant 0 : index
    %c0_6 = arith.constant 0 : index
    %c0_7 = arith.constant 0 : index
    %5 = vector.load %arg3[%c0_5, %c0_6, %c0_7] : memref<3x32x64xbf16, #tpu.memory_space<vmem>>, vector<1x32x64xbf16>
    %6 = vector.shape_cast %5 : vector<1x32x64xbf16> to vector<32x64xbf16>
    %cst = arith.constant dense<0.000000e+00> : vector<16x64xf32>
    %7 = tpu.matmul %4, %6, %cst {dimension_numbers = #tpu.dot_dimension_numbers<[1], [0], [0], [1], [0, 0, 1, 1], [], []>} : vector<16x32xbf16>, vector<32x64xbf16>, vector<16x64xf32> -> vector<16x64xf32>
    %c1 = arith.constant 1 : index
    %c0_8 = arith.constant 0 : index
    %c0_9 = arith.constant 0 : index
    %8 = vector.load %arg3[%c1, %c0_8, %c0_9] : memref<3x32x64xbf16, #tpu.memory_space<vmem>>, vector<1x32x64xbf16>
    %9 = vector.shape_cast %8 : vector<1x32x64xbf16> to vector<32x64xbf16>
    %cst_10 = arith.constant dense<0.000000e+00> : vector<16x64xf32>
    %10 = tpu.matmul %4, %9, %cst_10 {dimension_numbers = #tpu.dot_dimension_numbers<[1], [0], [0], [1], [0, 0, 1, 1], [], []>} : vector<16x32xbf16>, vector<32x64xbf16>, vector<16x64xf32> -> vector<16x64xf32>
    %c2 = arith.constant 2 : index
    %c0_11 = arith.constant 0 : index
    %c0_12 = arith.constant 0 : index
    %11 = vector.load %arg3[%c2, %c0_11, %c0_12] : memref<3x32x64xbf16, #tpu.memory_space<vmem>>, vector<1x32x64xbf16>
    %12 = vector.shape_cast %11 : vector<1x32x64xbf16> to vector<32x64xbf16>
    %cst_13 = arith.constant dense<0.000000e+00> : vector<16x64xf32>
    %13 = tpu.matmul %4, %12, %cst_13 {dimension_numbers = #tpu.dot_dimension_numbers<[1], [0], [0], [1], [0, 0, 1, 1], [], []>} : vector<16x32xbf16>, vector<32x64xbf16>, vector<16x64xf32> -> vector<16x64xf32>
    %cst_14 = arith.constant 0.000000e+00 : f32
    %14 = vector.broadcast %cst_14 : f32 to vector<1x64xf32>
    %15 = vector.extract_strided_slice %7 {offsets = [0, 0], sizes = [15, 64], strides = [1, 1]} : vector<16x64xf32> to vector<15x64xf32>
    %16 = tpu.concatenate %14, %15 in 0 : vector<1x64xf32>, vector<15x64xf32> -> vector<16x64xf32>
    %17 = arith.addf %10, %16 : vector<16x64xf32>
    %18 = vector.extract_strided_slice %13 {offsets = [1, 0], sizes = [15, 64], strides = [1, 1]} : vector<16x64xf32> to vector<15x64xf32>
    %19 = tpu.concatenate %18, %14 in 0 : vector<15x64xf32>, vector<1x64xf32> -> vector<16x64xf32>
    %20 = arith.addf %17, %19 : vector<16x64xf32>
    %c0_15 = arith.constant 0 : index
    %c0_16 = arith.constant 0 : index
    %21 = vector.load %arg4[%c0_15, %c0_16] : memref<1x64xf32, #tpu.memory_space<vmem>>, vector<1x64xf32>
    %22 = vector.broadcast %21 : vector<1x64xf32> to vector<16x64xf32>
    %23 = arith.mulf %20, %22 : vector<16x64xf32>
    %c0_17 = arith.constant 0 : index
    %c0_18 = arith.constant 0 : index
    %24 = vector.load %arg5[%c0_17, %c0_18] : memref<1x64xf32, #tpu.memory_space<vmem>>, vector<1x64xf32>
    %25 = vector.broadcast %24 : vector<1x64xf32> to vector<16x64xf32>
    %26 = arith.addf %23, %25 : vector<16x64xf32>
    %cst_19 = arith.constant 0.000000e+00 : f32
    %27 = vector.broadcast %cst_19 : f32 to vector<16x64xf32>
    %28 = arith.maximumf %26, %27 : vector<16x64xf32>
    %29 = arith.truncf %28 : vector<16x64xf32> to vector<16x64xbf16>
    %c0_20 = arith.constant 0 : index
    %c0_21 = arith.constant 0 : index
    %c0_22 = arith.constant 0 : index
    %30 = vector.load %arg6[%c0_20, %c0_21, %c0_22] : memref<3x64x64xbf16, #tpu.memory_space<vmem>>, vector<1x64x64xbf16>
    %31 = vector.shape_cast %30 : vector<1x64x64xbf16> to vector<64x64xbf16>
    %cst_23 = arith.constant dense<0.000000e+00> : vector<16x64xf32>
    %32 = tpu.matmul %29, %31, %cst_23 {dimension_numbers = #tpu.dot_dimension_numbers<[1], [0], [0], [1], [0, 0, 1, 1], [], []>} : vector<16x64xbf16>, vector<64x64xbf16>, vector<16x64xf32> -> vector<16x64xf32>
    %c1_24 = arith.constant 1 : index
    %c0_25 = arith.constant 0 : index
    %c0_26 = arith.constant 0 : index
    %33 = vector.load %arg6[%c1_24, %c0_25, %c0_26] : memref<3x64x64xbf16, #tpu.memory_space<vmem>>, vector<1x64x64xbf16>
    %34 = vector.shape_cast %33 : vector<1x64x64xbf16> to vector<64x64xbf16>
    %cst_27 = arith.constant dense<0.000000e+00> : vector<16x64xf32>
    %35 = tpu.matmul %29, %34, %cst_27 {dimension_numbers = #tpu.dot_dimension_numbers<[1], [0], [0], [1], [0, 0, 1, 1], [], []>} : vector<16x64xbf16>, vector<64x64xbf16>, vector<16x64xf32> -> vector<16x64xf32>
    %c2_28 = arith.constant 2 : index
    %c0_29 = arith.constant 0 : index
    %c0_30 = arith.constant 0 : index
    %36 = vector.load %arg6[%c2_28, %c0_29, %c0_30] : memref<3x64x64xbf16, #tpu.memory_space<vmem>>, vector<1x64x64xbf16>
    %37 = vector.shape_cast %36 : vector<1x64x64xbf16> to vector<64x64xbf16>
    %cst_31 = arith.constant dense<0.000000e+00> : vector<16x64xf32>
    %38 = tpu.matmul %29, %37, %cst_31 {dimension_numbers = #tpu.dot_dimension_numbers<[1], [0], [0], [1], [0, 0, 1, 1], [], []>} : vector<16x64xbf16>, vector<64x64xbf16>, vector<16x64xf32> -> vector<16x64xf32>
    %cst_32 = arith.constant 0.000000e+00 : f32
    %39 = vector.broadcast %cst_32 : f32 to vector<1x64xf32>
    %40 = vector.extract_strided_slice %32 {offsets = [0, 0], sizes = [15, 64], strides = [1, 1]} : vector<16x64xf32> to vector<15x64xf32>
    %41 = tpu.concatenate %39, %40 in 0 : vector<1x64xf32>, vector<15x64xf32> -> vector<16x64xf32>
    %42 = arith.addf %35, %41 : vector<16x64xf32>
    %43 = vector.extract_strided_slice %38 {offsets = [1, 0], sizes = [15, 64], strides = [1, 1]} : vector<16x64xf32> to vector<15x64xf32>
    %44 = tpu.concatenate %43, %39 in 0 : vector<15x64xf32>, vector<1x64xf32> -> vector<16x64xf32>
    %45 = arith.addf %42, %44 : vector<16x64xf32>
    %c0_33 = arith.constant 0 : index
    %c0_34 = arith.constant 0 : index
    %46 = vector.load %arg7[%c0_33, %c0_34] : memref<1x64xf32, #tpu.memory_space<vmem>>, vector<1x64xf32>
    %47 = vector.broadcast %46 : vector<1x64xf32> to vector<16x64xf32>
    %48 = arith.mulf %45, %47 : vector<16x64xf32>
    %c0_35 = arith.constant 0 : index
    %c0_36 = arith.constant 0 : index
    %49 = vector.load %arg8[%c0_35, %c0_36] : memref<1x64xf32, #tpu.memory_space<vmem>>, vector<1x64xf32>
    %50 = vector.broadcast %49 : vector<1x64xf32> to vector<16x64xf32>
    %51 = arith.addf %48, %50 : vector<16x64xf32>
    %cst_37 = arith.constant 0.000000e+00 : f32
    %52 = vector.broadcast %cst_37 : f32 to vector<16x64xf32>
    %53 = arith.maximumf %51, %52 : vector<16x64xf32>
    %54 = arith.truncf %53 : vector<16x64xf32> to vector<16x64xbf16>
    %c0_38 = arith.constant 0 : index
    %c0_39 = arith.constant 0 : index
    %c0_40 = arith.constant 0 : index
    %55 = vector.load %arg9[%c0_38, %c0_39, %c0_40] : memref<3x64x32xbf16, #tpu.memory_space<vmem>>, vector<1x64x32xbf16>
    %56 = vector.shape_cast %55 : vector<1x64x32xbf16> to vector<64x32xbf16>
    %cst_41 = arith.constant dense<0.000000e+00> : vector<16x32xf32>
    %57 = tpu.matmul %54, %56, %cst_41 {dimension_numbers = #tpu.dot_dimension_numbers<[1], [0], [0], [1], [0, 0, 1, 1], [], []>} : vector<16x64xbf16>, vector<64x32xbf16>, vector<16x32xf32> -> vector<16x32xf32>
    %c1_42 = arith.constant 1 : index
    %c0_43 = arith.constant 0 : index
    %c0_44 = arith.constant 0 : index
    %58 = vector.load %arg9[%c1_42, %c0_43, %c0_44] : memref<3x64x32xbf16, #tpu.memory_space<vmem>>, vector<1x64x32xbf16>
    %59 = vector.shape_cast %58 : vector<1x64x32xbf16> to vector<64x32xbf16>
    %cst_45 = arith.constant dense<0.000000e+00> : vector<16x32xf32>
    %60 = tpu.matmul %54, %59, %cst_45 {dimension_numbers = #tpu.dot_dimension_numbers<[1], [0], [0], [1], [0, 0, 1, 1], [], []>} : vector<16x64xbf16>, vector<64x32xbf16>, vector<16x32xf32> -> vector<16x32xf32>
    %c2_46 = arith.constant 2 : index
    %c0_47 = arith.constant 0 : index
    %c0_48 = arith.constant 0 : index
    %61 = vector.load %arg9[%c2_46, %c0_47, %c0_48] : memref<3x64x32xbf16, #tpu.memory_space<vmem>>, vector<1x64x32xbf16>
    %62 = vector.shape_cast %61 : vector<1x64x32xbf16> to vector<64x32xbf16>
    %cst_49 = arith.constant dense<0.000000e+00> : vector<16x32xf32>
    %63 = tpu.matmul %54, %62, %cst_49 {dimension_numbers = #tpu.dot_dimension_numbers<[1], [0], [0], [1], [0, 0, 1, 1], [], []>} : vector<16x64xbf16>, vector<64x32xbf16>, vector<16x32xf32> -> vector<16x32xf32>
    %cst_50 = arith.constant 0.000000e+00 : f32
    %64 = vector.broadcast %cst_50 : f32 to vector<1x32xf32>
    %65 = vector.extract_strided_slice %57 {offsets = [0, 0], sizes = [15, 32], strides = [1, 1]} : vector<16x32xf32> to vector<15x32xf32>
    %66 = tpu.concatenate %64, %65 in 0 : vector<1x32xf32>, vector<15x32xf32> -> vector<16x32xf32>
    %67 = arith.addf %60, %66 : vector<16x32xf32>
    %68 = vector.extract_strided_slice %63 {offsets = [1, 0], sizes = [15, 32], strides = [1, 1]} : vector<16x32xf32> to vector<15x32xf32>
    %69 = tpu.concatenate %68, %64 in 0 : vector<15x32xf32>, vector<1x32xf32> -> vector<16x32xf32>
    %70 = arith.addf %67, %69 : vector<16x32xf32>
    %c0_51 = arith.constant 0 : index
    %c0_52 = arith.constant 0 : index
    %71 = vector.load %arg10[%c0_51, %c0_52] : memref<1x32xf32, #tpu.memory_space<vmem>>, vector<1x32xf32>
    %72 = vector.broadcast %71 : vector<1x32xf32> to vector<16x32xf32>
    %73 = arith.mulf %70, %72 : vector<16x32xf32>
    %c0_53 = arith.constant 0 : index
    %c0_54 = arith.constant 0 : index
    %74 = vector.load %arg11[%c0_53, %c0_54] : memref<1x32xf32, #tpu.memory_space<vmem>>, vector<1x32xf32>
    %75 = vector.broadcast %74 : vector<1x32xf32> to vector<16x32xf32>
    %76 = arith.addf %73, %75 : vector<16x32xf32>
    %77 = arith.addf %1, %76 : vector<16x32xf32>
    %cst_55 = arith.constant dense<0.000000e+00> : vector<32xf32>
    %78 = vector.multi_reduction <add>, %77, %cst_55 [0] : vector<16x32xf32> to vector<32xf32>
    %79 = vector.shape_cast %78 : vector<32xf32> to vector<1x32xf32>
    %cst_56 = arith.constant 1.600000e+01 : f32
    %80 = vector.broadcast %cst_56 : f32 to vector<1x32xf32>
    %81 = arith.divf %79, %80 : vector<1x32xf32>
    %82 = vector.broadcast %81 : vector<1x32xf32> to vector<16x32xf32>
    %83 = arith.subf %77, %82 : vector<16x32xf32>
    %84 = arith.mulf %83, %83 : vector<16x32xf32>
    %cst_57 = arith.constant dense<0.000000e+00> : vector<32xf32>
    %85 = vector.multi_reduction <add>, %84, %cst_57 [0] : vector<16x32xf32> to vector<32xf32>
    %86 = vector.shape_cast %85 : vector<32xf32> to vector<1x32xf32>
    %cst_58 = arith.constant 1.600000e+01 : f32
    %87 = vector.broadcast %cst_58 : f32 to vector<1x32xf32>
    %88 = arith.divf %86, %87 : vector<1x32xf32>
    %89 = vector.broadcast %81 : vector<1x32xf32> to vector<16x32xf32>
    %90 = arith.subf %77, %89 : vector<16x32xf32>
    %cst_59 = arith.constant 9.99999974E-6 : f32
    %91 = vector.broadcast %cst_59 : f32 to vector<1x32xf32>
    %92 = arith.addf %88, %91 : vector<1x32xf32>
    %93 = math.rsqrt %92 : vector<1x32xf32>
    %94 = vector.broadcast %93 : vector<1x32xf32> to vector<16x32xf32>
    %95 = arith.mulf %90, %94 : vector<16x32xf32>
    %cst_60 = arith.constant 0.000000e+00 : f32
    %96 = vector.broadcast %cst_60 : f32 to vector<16x32xf32>
    %97 = arith.maximumf %95, %96 : vector<16x32xf32>
    %c0_61 = arith.constant 0 : index
    %c0_62 = arith.constant 0 : index
    %98 = vector.load %arg19[%c0_61, %c0_62] : memref<16x32xf32, #tpu.memory_space<vmem>>, vector<16x32xf32>
    tpu.vector_store %arg19[%c0_61, %c0_62], %97 {strides = array<i32>} : memref<16x32xf32, #tpu.memory_space<vmem>>, vector<16x32xf32>,
    %c0_63 = arith.constant 0 : index
    %c0_64 = arith.constant 0 : index
    %99 = tpu.strided_load %arg19[%c0_63, %c0_64] {strides = array<i32: 2, 1>} : memref<16x32xf32, #tpu.memory_space<vmem>>, vector<8x32xf32>
    %c1_65 = arith.constant 1 : index
    %c0_66 = arith.constant 0 : index
    %100 = tpu.strided_load %arg19[%c1_65, %c0_66] {strides = array<i32: 2, 1>} : memref<16x32xf32, #tpu.memory_space<vmem>>, vector<8x32xf32>
    %101 = arith.maximumf %99, %100 : vector<8x32xf32>
    %c0_67 = arith.constant 0 : index
    %c0_68 = arith.constant 0 : index
    %102 = vector.load %arg12[%c0_67, %c0_68] : memref<1x32xf32, #tpu.memory_space<vmem>>, vector<1x32xf32>
    %103 = vector.broadcast %102 : vector<1x32xf32> to vector<8x32xf32>
    %104 = arith.mulf %101, %103 : vector<8x32xf32>
    %c0_69 = arith.constant 0 : index
    %c0_70 = arith.constant 0 : index
    %105 = vector.load %arg13[%c0_69, %c0_70] : memref<1x32xf32, #tpu.memory_space<vmem>>, vector<1x32xf32>
    %106 = vector.broadcast %105 : vector<1x32xf32> to vector<8x32xf32>
    %107 = arith.addf %104, %106 : vector<8x32xf32>
    %108 = arith.truncf %107 : vector<8x32xf32> to vector<8x32xbf16>
    %109 = arith.truncf %3 : vector<8x32xf32> to vector<8x32xbf16>
    %cst_71 = arith.constant 0.000000e+00 : f32
    %110 = vector.broadcast %cst_71 : f32 to vector<8x32xf32>
    %c0_72 = arith.constant 0 : index
    %c0_73 = arith.constant 0 : index
    %c0_74 = arith.constant 0 : index
    %111 = vector.load %arg14[%c0_72, %c0_73, %c0_74] : memref<4x32x8xbf16, #tpu.memory_space<vmem>>, vector<1x32x8xbf16>
    %112 = vector.shape_cast %111 : vector<1x32x8xbf16> to vector<32x8xbf16>
    %cst_75 = arith.constant dense<0.000000e+00> : vector<8x8xf32>
    %113 = tpu.matmul %108, %112, %cst_75 {dimension_numbers = #tpu.dot_dimension_numbers<[1], [0], [0], [1], [0, 0, 1, 1], [], []>} : vector<8x32xbf16>, vector<32x8xbf16>, vector<8x8xf32> -> vector<8x8xf32>
    %c0_76 = arith.constant 0 : index
    %c0_77 = arith.constant 0 : index
    %c0_78 = arith.constant 0 : index
    %114 = vector.load %arg15[%c0_76, %c0_77, %c0_78] : memref<4x32x8xbf16, #tpu.memory_space<vmem>>, vector<1x32x8xbf16>
    %115 = vector.shape_cast %114 : vector<1x32x8xbf16> to vector<32x8xbf16>
    %cst_79 = arith.constant dense<0.000000e+00> : vector<8x8xf32>
    %116 = tpu.matmul %109, %115, %cst_79 {dimension_numbers = #tpu.dot_dimension_numbers<[1], [0], [0], [1], [0, 0, 1, 1], [], []>} : vector<8x32xbf16>, vector<32x8xbf16>, vector<8x8xf32> -> vector<8x8xf32>
    %c0_80 = arith.constant 0 : index
    %c0_81 = arith.constant 0 : index
    %c0_82 = arith.constant 0 : index
    %117 = vector.load %arg16[%c0_80, %c0_81, %c0_82] : memref<4x32x8xbf16, #tpu.memory_space<vmem>>, vector<1x32x8xbf16>
    %118 = vector.shape_cast %117 : vector<1x32x8xbf16> to vector<32x8xbf16>
    %cst_83 = arith.constant dense<0.000000e+00> : vector<8x8xf32>
    %119 = tpu.matmul %109, %118, %cst_83 {dimension_numbers = #tpu.dot_dimension_numbers<[1], [0], [0], [1], [0, 0, 1, 1], [], []>} : vector<8x32xbf16>, vector<32x8xbf16>, vector<8x8xf32> -> vector<8x8xf32>
    %120 = arith.truncf %113 : vector<8x8xf32> to vector<8x8xbf16>
    %121 = arith.truncf %116 : vector<8x8xf32> to vector<8x8xbf16>
    %cst_84 = arith.constant dense<0.000000e+00> : vector<8x8xf32>
    %122 = tpu.matmul %120, %121, %cst_84 {dimension_numbers = #tpu.dot_dimension_numbers<[1], [1], [0], [0], [0, 0, 1, 0], [], []>} : vector<8x8xbf16>, vector<8x8xbf16>, vector<8x8xf32> -> vector<8x8xf32>
    %cst_85 = arith.constant 0.176776692 : f32
    %123 = vector.broadcast %cst_85 : f32 to vector<8x8xf32>
    %124 = arith.mulf %122, %123 : vector<8x8xf32>
    %cst_86 = arith.constant dense<0xFF800000> : vector<8xf32>
    %125 = vector.multi_reduction <maximumf>, %124, %cst_86 [1] : vector<8x8xf32> to vector<8xf32>
    %126 = vector.shape_cast %125 : vector<8xf32> to vector<8x1xf32>
    %127 = vector.broadcast %126 : vector<8x1xf32> to vector<8x8xf32>
    %128 = arith.subf %124, %127 : vector<8x8xf32>
    %129 = math.exp %128 : vector<8x8xf32>
    %cst_87 = arith.constant dense<0.000000e+00> : vector<8xf32>
    %130 = vector.multi_reduction <add>, %129, %cst_87 [1] : vector<8x8xf32> to vector<8xf32>
    %131 = vector.shape_cast %130 : vector<8xf32> to vector<8x1xf32>
    %132 = vector.broadcast %131 : vector<8x1xf32> to vector<8x8xf32>
    %133 = arith.divf %129, %132 : vector<8x8xf32>
    %134 = arith.truncf %133 : vector<8x8xf32> to vector<8x8xbf16>
    %135 = arith.truncf %119 : vector<8x8xf32> to vector<8x8xbf16>
    %cst_88 = arith.constant dense<0.000000e+00> : vector<8x8xf32>
    %136 = tpu.matmul %134, %135, %cst_88 {dimension_numbers = #tpu.dot_dimension_numbers<[1], [0], [0], [1], [0, 0, 1, 1], [], []>} : vector<8x8xbf16>, vector<8x8xbf16>, vector<8x8xf32> -> vector<8x8xf32>
    %137 = arith.truncf %136 : vector<8x8xf32> to vector<8x8xbf16>
    %c0_89 = arith.constant 0 : index
    %c0_90 = arith.constant 0 : index
    %c0_91 = arith.constant 0 : index
    %138 = vector.load %arg17[%c0_89, %c0_90, %c0_91] : memref<4x8x32xbf16, #tpu.memory_space<vmem>>, vector<1x8x32xbf16>
    %139 = vector.shape_cast %138 : vector<1x8x32xbf16> to vector<8x32xbf16>
    %cst_92 = arith.constant dense<0.000000e+00> : vector<8x32xf32>
    %140 = tpu.matmul %137, %139, %cst_92 {dimension_numbers = #tpu.dot_dimension_numbers<[1], [0], [0], [1], [0, 0, 1, 1], [], []>} : vector<8x8xbf16>, vector<8x32xbf16>, vector<8x32xf32> -> vector<8x32xf32>
    %141 = arith.addf %110, %140 : vector<8x32xf32>
    %c1_93 = arith.constant 1 : index
    %c0_94 = arith.constant 0 : index
    %c0_95 = arith.constant 0 : index
    %142 = vector.load %arg14[%c1_93, %c0_94, %c0_95] : memref<4x32x8xbf16, #tpu.memory_space<vmem>>, vector<1x32x8xbf16>
    %143 = vector.shape_cast %142 : vector<1x32x8xbf16> to vector<32x8xbf16>
    %cst_96 = arith.constant dense<0.000000e+00> : vector<8x8xf32>
    %144 = tpu.matmul %108, %143, %cst_96 {dimension_numbers = #tpu.dot_dimension_numbers<[1], [0], [0], [1], [0, 0, 1, 1], [], []>} : vector<8x32xbf16>, vector<32x8xbf16>, vector<8x8xf32> -> vector<8x8xf32>
    %c1_97 = arith.constant 1 : index
    %c0_98 = arith.constant 0 : index
    %c0_99 = arith.constant 0 : index
    %145 = vector.load %arg15[%c1_97, %c0_98, %c0_99] : memref<4x32x8xbf16, #tpu.memory_space<vmem>>, vector<1x32x8xbf16>
    %146 = vector.shape_cast %145 : vector<1x32x8xbf16> to vector<32x8xbf16>
    %cst_100 = arith.constant dense<0.000000e+00> : vector<8x8xf32>
    %147 = tpu.matmul %109, %146, %cst_100 {dimension_numbers = #tpu.dot_dimension_numbers<[1], [0], [0], [1], [0, 0, 1, 1], [], []>} : vector<8x32xbf16>, vector<32x8xbf16>, vector<8x8xf32> -> vector<8x8xf32>
    %c1_101 = arith.constant 1 : index
    %c0_102 = arith.constant 0 : index
    %c0_103 = arith.constant 0 : index
    %148 = vector.load %arg16[%c1_101, %c0_102, %c0_103] : memref<4x32x8xbf16, #tpu.memory_space<vmem>>, vector<1x32x8xbf16>
    %149 = vector.shape_cast %148 : vector<1x32x8xbf16> to vector<32x8xbf16>
    %cst_104 = arith.constant dense<0.000000e+00> : vector<8x8xf32>
    %150 = tpu.matmul %109, %149, %cst_104 {dimension_numbers = #tpu.dot_dimension_numbers<[1], [0], [0], [1], [0, 0, 1, 1], [], []>} : vector<8x32xbf16>, vector<32x8xbf16>, vector<8x8xf32> -> vector<8x8xf32>
    %151 = arith.truncf %144 : vector<8x8xf32> to vector<8x8xbf16>
    %152 = arith.truncf %147 : vector<8x8xf32> to vector<8x8xbf16>
    %cst_105 = arith.constant dense<0.000000e+00> : vector<8x8xf32>
    %153 = tpu.matmul %151, %152, %cst_105 {dimension_numbers = #tpu.dot_dimension_numbers<[1], [1], [0], [0], [0, 0, 1, 0], [], []>} : vector<8x8xbf16>, vector<8x8xbf16>, vector<8x8xf32> -> vector<8x8xf32>
    %cst_106 = arith.constant 0.176776692 : f32
    %154 = vector.broadcast %cst_106 : f32 to vector<8x8xf32>
    %155 = arith.mulf %153, %154 : vector<8x8xf32>
    %cst_107 = arith.constant dense<0xFF800000> : vector<8xf32>
    %156 = vector.multi_reduction <maximumf>, %155, %cst_107 [1] : vector<8x8xf32> to vector<8xf32>
    %157 = vector.shape_cast %156 : vector<8xf32> to vector<8x1xf32>
    %158 = vector.broadcast %157 : vector<8x1xf32> to vector<8x8xf32>
    %159 = arith.subf %155, %158 : vector<8x8xf32>
    %160 = math.exp %159 : vector<8x8xf32>
    %cst_108 = arith.constant dense<0.000000e+00> : vector<8xf32>
    %161 = vector.multi_reduction <add>, %160, %cst_108 [1] : vector<8x8xf32> to vector<8xf32>
    %162 = vector.shape_cast %161 : vector<8xf32> to vector<8x1xf32>
    %163 = vector.broadcast %162 : vector<8x1xf32> to vector<8x8xf32>
    %164 = arith.divf %160, %163 : vector<8x8xf32>
    %165 = arith.truncf %164 : vector<8x8xf32> to vector<8x8xbf16>
    %166 = arith.truncf %150 : vector<8x8xf32> to vector<8x8xbf16>
    %cst_109 = arith.constant dense<0.000000e+00> : vector<8x8xf32>
    %167 = tpu.matmul %165, %166, %cst_109 {dimension_numbers = #tpu.dot_dimension_numbers<[1], [0], [0], [1], [0, 0, 1, 1], [], []>} : vector<8x8xbf16>, vector<8x8xbf16>, vector<8x8xf32> -> vector<8x8xf32>
    %168 = arith.truncf %167 : vector<8x8xf32> to vector<8x8xbf16>
    %c1_110 = arith.constant 1 : index
    %c0_111 = arith.constant 0 : index
    %c0_112 = arith.constant 0 : index
    %169 = vector.load %arg17[%c1_110, %c0_111, %c0_112] : memref<4x8x32xbf16, #tpu.memory_space<vmem>>, vector<1x8x32xbf16>
    %170 = vector.shape_cast %169 : vector<1x8x32xbf16> to vector<8x32xbf16>
    %cst_113 = arith.constant dense<0.000000e+00> : vector<8x32xf32>
    %171 = tpu.matmul %168, %170, %cst_113 {dimension_numbers = #tpu.dot_dimension_numbers<[1], [0], [0], [1], [0, 0, 1, 1], [], []>} : vector<8x8xbf16>, vector<8x32xbf16>, vector<8x32xf32> -> vector<8x32xf32>
    %172 = arith.addf %141, %171 : vector<8x32xf32>
    %c2_114 = arith.constant 2 : index
    %c0_115 = arith.constant 0 : index
    %c0_116 = arith.constant 0 : index
    %173 = vector.load %arg14[%c2_114, %c0_115, %c0_116] : memref<4x32x8xbf16, #tpu.memory_space<vmem>>, vector<1x32x8xbf16>
    %174 = vector.shape_cast %173 : vector<1x32x8xbf16> to vector<32x8xbf16>
    %cst_117 = arith.constant dense<0.000000e+00> : vector<8x8xf32>
    %175 = tpu.matmul %108, %174, %cst_117 {dimension_numbers = #tpu.dot_dimension_numbers<[1], [0], [0], [1], [0, 0, 1, 1], [], []>} : vector<8x32xbf16>, vector<32x8xbf16>, vector<8x8xf32> -> vector<8x8xf32>
    %c2_118 = arith.constant 2 : index
    %c0_119 = arith.constant 0 : index
    %c0_120 = arith.constant 0 : index
    %176 = vector.load %arg15[%c2_118, %c0_119, %c0_120] : memref<4x32x8xbf16, #tpu.memory_space<vmem>>, vector<1x32x8xbf16>
    %177 = vector.shape_cast %176 : vector<1x32x8xbf16> to vector<32x8xbf16>
    %cst_121 = arith.constant dense<0.000000e+00> : vector<8x8xf32>
    %178 = tpu.matmul %109, %177, %cst_121 {dimension_numbers = #tpu.dot_dimension_numbers<[1], [0], [0], [1], [0, 0, 1, 1], [], []>} : vector<8x32xbf16>, vector<32x8xbf16>, vector<8x8xf32> -> vector<8x8xf32>
    %c2_122 = arith.constant 2 : index
    %c0_123 = arith.constant 0 : index
    %c0_124 = arith.constant 0 : index
    %179 = vector.load %arg16[%c2_122, %c0_123, %c0_124] : memref<4x32x8xbf16, #tpu.memory_space<vmem>>, vector<1x32x8xbf16>
    %180 = vector.shape_cast %179 : vector<1x32x8xbf16> to vector<32x8xbf16>
    %cst_125 = arith.constant dense<0.000000e+00> : vector<8x8xf32>
    %181 = tpu.matmul %109, %180, %cst_125 {dimension_numbers = #tpu.dot_dimension_numbers<[1], [0], [0], [1], [0, 0, 1, 1], [], []>} : vector<8x32xbf16>, vector<32x8xbf16>, vector<8x8xf32> -> vector<8x8xf32>
    %182 = arith.truncf %175 : vector<8x8xf32> to vector<8x8xbf16>
    %183 = arith.truncf %178 : vector<8x8xf32> to vector<8x8xbf16>
    %cst_126 = arith.constant dense<0.000000e+00> : vector<8x8xf32>
    %184 = tpu.matmul %182, %183, %cst_126 {dimension_numbers = #tpu.dot_dimension_numbers<[1], [1], [0], [0], [0, 0, 1, 0], [], []>} : vector<8x8xbf16>, vector<8x8xbf16>, vector<8x8xf32> -> vector<8x8xf32>
    %cst_127 = arith.constant 0.176776692 : f32
    %185 = vector.broadcast %cst_127 : f32 to vector<8x8xf32>
    %186 = arith.mulf %184, %185 : vector<8x8xf32>
    %cst_128 = arith.constant dense<0xFF800000> : vector<8xf32>
    %187 = vector.multi_reduction <maximumf>, %186, %cst_128 [1] : vector<8x8xf32> to vector<8xf32>
    %188 = vector.shape_cast %187 : vector<8xf32> to vector<8x1xf32>
    %189 = vector.broadcast %188 : vector<8x1xf32> to vector<8x8xf32>
    %190 = arith.subf %186, %189 : vector<8x8xf32>
    %191 = math.exp %190 : vector<8x8xf32>
    %cst_129 = arith.constant dense<0.000000e+00> : vector<8xf32>
    %192 = vector.multi_reduction <add>, %191, %cst_129 [1] : vector<8x8xf32> to vector<8xf32>
    %193 = vector.shape_cast %192 : vector<8xf32> to vector<8x1xf32>
    %194 = vector.broadcast %193 : vector<8x1xf32> to vector<8x8xf32>
    %195 = arith.divf %191, %194 : vector<8x8xf32>
    %196 = arith.truncf %195 : vector<8x8xf32> to vector<8x8xbf16>
    %197 = arith.truncf %181 : vector<8x8xf32> to vector<8x8xbf16>
    %cst_130 = arith.constant dense<0.000000e+00> : vector<8x8xf32>
    %198 = tpu.matmul %196, %197, %cst_130 {dimension_numbers = #tpu.dot_dimension_numbers<[1], [0], [0], [1], [0, 0, 1, 1], [], []>} : vector<8x8xbf16>, vector<8x8xbf16>, vector<8x8xf32> -> vector<8x8xf32>
    %199 = arith.truncf %198 : vector<8x8xf32> to vector<8x8xbf16>
    %c2_131 = arith.constant 2 : index
    %c0_132 = arith.constant 0 : index
    %c0_133 = arith.constant 0 : index
    %200 = vector.load %arg17[%c2_131, %c0_132, %c0_133] : memref<4x8x32xbf16, #tpu.memory_space<vmem>>, vector<1x8x32xbf16>
    %201 = vector.shape_cast %200 : vector<1x8x32xbf16> to vector<8x32xbf16>
    %cst_134 = arith.constant dense<0.000000e+00> : vector<8x32xf32>
    %202 = tpu.matmul %199, %201, %cst_134 {dimension_numbers = #tpu.dot_dimension_numbers<[1], [0], [0], [1], [0, 0, 1, 1], [], []>} : vector<8x8xbf16>, vector<8x32xbf16>, vector<8x32xf32> -> vector<8x32xf32>
    %203 = arith.addf %172, %202 : vector<8x32xf32>
    %c3 = arith.constant 3 : index
    %c0_135 = arith.constant 0 : index
    %c0_136 = arith.constant 0 : index
    %204 = vector.load %arg14[%c3, %c0_135, %c0_136] : memref<4x32x8xbf16, #tpu.memory_space<vmem>>, vector<1x32x8xbf16>
    %205 = vector.shape_cast %204 : vector<1x32x8xbf16> to vector<32x8xbf16>
    %cst_137 = arith.constant dense<0.000000e+00> : vector<8x8xf32>
    %206 = tpu.matmul %108, %205, %cst_137 {dimension_numbers = #tpu.dot_dimension_numbers<[1], [0], [0], [1], [0, 0, 1, 1], [], []>} : vector<8x32xbf16>, vector<32x8xbf16>, vector<8x8xf32> -> vector<8x8xf32>
    %c3_138 = arith.constant 3 : index
    %c0_139 = arith.constant 0 : index
    %c0_140 = arith.constant 0 : index
    %207 = vector.load %arg15[%c3_138, %c0_139, %c0_140] : memref<4x32x8xbf16, #tpu.memory_space<vmem>>, vector<1x32x8xbf16>
    %208 = vector.shape_cast %207 : vector<1x32x8xbf16> to vector<32x8xbf16>
    %cst_141 = arith.constant dense<0.000000e+00> : vector<8x8xf32>
    %209 = tpu.matmul %109, %208, %cst_141 {dimension_numbers = #tpu.dot_dimension_numbers<[1], [0], [0], [1], [0, 0, 1, 1], [], []>} : vector<8x32xbf16>, vector<32x8xbf16>, vector<8x8xf32> -> vector<8x8xf32>
    %c3_142 = arith.constant 3 : index
    %c0_143 = arith.constant 0 : index
    %c0_144 = arith.constant 0 : index
    %210 = vector.load %arg16[%c3_142, %c0_143, %c0_144] : memref<4x32x8xbf16, #tpu.memory_space<vmem>>, vector<1x32x8xbf16>
    %211 = vector.shape_cast %210 : vector<1x32x8xbf16> to vector<32x8xbf16>
    %cst_145 = arith.constant dense<0.000000e+00> : vector<8x8xf32>
    %212 = tpu.matmul %109, %211, %cst_145 {dimension_numbers = #tpu.dot_dimension_numbers<[1], [0], [0], [1], [0, 0, 1, 1], [], []>} : vector<8x32xbf16>, vector<32x8xbf16>, vector<8x8xf32> -> vector<8x8xf32>
    %213 = arith.truncf %206 : vector<8x8xf32> to vector<8x8xbf16>
    %214 = arith.truncf %209 : vector<8x8xf32> to vector<8x8xbf16>
    %cst_146 = arith.constant dense<0.000000e+00> : vector<8x8xf32>
    %215 = tpu.matmul %213, %214, %cst_146 {dimension_numbers = #tpu.dot_dimension_numbers<[1], [1], [0], [0], [0, 0, 1, 0], [], []>} : vector<8x8xbf16>, vector<8x8xbf16>, vector<8x8xf32> -> vector<8x8xf32>
    %cst_147 = arith.constant 0.176776692 : f32
    %216 = vector.broadcast %cst_147 : f32 to vector<8x8xf32>
    %217 = arith.mulf %215, %216 : vector<8x8xf32>
    %cst_148 = arith.constant dense<0xFF800000> : vector<8xf32>
    %218 = vector.multi_reduction <maximumf>, %217, %cst_148 [1] : vector<8x8xf32> to vector<8xf32>
    %219 = vector.shape_cast %218 : vector<8xf32> to vector<8x1xf32>
    %220 = vector.broadcast %219 : vector<8x1xf32> to vector<8x8xf32>
    %221 = arith.subf %217, %220 : vector<8x8xf32>
    %222 = math.exp %221 : vector<8x8xf32>
    %cst_149 = arith.constant dense<0.000000e+00> : vector<8xf32>
    %223 = vector.multi_reduction <add>, %222, %cst_149 [1] : vector<8x8xf32> to vector<8xf32>
    %224 = vector.shape_cast %223 : vector<8xf32> to vector<8x1xf32>
    %225 = vector.broadcast %224 : vector<8x1xf32> to vector<8x8xf32>
    %226 = arith.divf %222, %225 : vector<8x8xf32>
    %227 = arith.truncf %226 : vector<8x8xf32> to vector<8x8xbf16>
    %228 = arith.truncf %212 : vector<8x8xf32> to vector<8x8xbf16>
    %cst_150 = arith.constant dense<0.000000e+00> : vector<8x8xf32>
    %229 = tpu.matmul %227, %228, %cst_150 {dimension_numbers = #tpu.dot_dimension_numbers<[1], [0], [0], [1], [0, 0, 1, 1], [], []>} : vector<8x8xbf16>, vector<8x8xbf16>, vector<8x8xf32> -> vector<8x8xf32>
    %230 = arith.truncf %229 : vector<8x8xf32> to vector<8x8xbf16>
    %c3_151 = arith.constant 3 : index
    %c0_152 = arith.constant 0 : index
    %c0_153 = arith.constant 0 : index
    %231 = vector.load %arg17[%c3_151, %c0_152, %c0_153] : memref<4x8x32xbf16, #tpu.memory_space<vmem>>, vector<1x8x32xbf16>
    %232 = vector.shape_cast %231 : vector<1x8x32xbf16> to vector<8x32xbf16>
    %cst_154 = arith.constant dense<0.000000e+00> : vector<8x32xf32>
    %233 = tpu.matmul %230, %232, %cst_154 {dimension_numbers = #tpu.dot_dimension_numbers<[1], [0], [0], [1], [0, 0, 1, 1], [], []>} : vector<8x8xbf16>, vector<8x32xbf16>, vector<8x32xf32> -> vector<8x32xf32>
    %234 = arith.addf %203, %233 : vector<8x32xf32>
    %235 = arith.addf %107, %234 : vector<8x32xf32>
    %c0_155 = arith.constant 0 : index
    %c0_156 = arith.constant 0 : index
    %c0_157 = arith.constant 0 : index
    %236 = vector.load %arg18[%c0_155, %c0_156, %c0_157] : memref<1x8x32xf32, #tpu.memory_space<vmem>>, vector<1x8x32xf32>
    %237 = vector.shape_cast %236 : vector<1x8x32xf32> to vector<8x32xf32>
    %238 = vector.shape_cast %235 : vector<8x32xf32> to vector<1x8x32xf32>
    tpu.vector_store %arg18[%c0_155, %c0_156, %c0_157], %238 {strides = array<i32>} : memref<1x8x32xf32, #tpu.memory_space<vmem>>, vector<1x8x32xf32>,
    return
  }
  func.func @transform_0(%arg0: i32) -> (i32, i32, i32) {
    %c0_i32 = arith.constant 0 : i32
    %c0_i32_0 = arith.constant 0 : i32
    %c0_i32_1 = arith.constant 0 : i32
    return %arg0, %c0_i32, %c0_i32_0 : i32, i32, i32
  }
  func.func @transform_1(%arg0: i32) -> (i32, i32, i32) {
    %c0_i32 = arith.constant 0 : i32
    %c0_i32_0 = arith.constant 0 : i32
    %c0_i32_1 = arith.constant 0 : i32
    return %arg0, %c0_i32, %c0_i32_0 : i32, i32, i32
  }
  func.func @transform_2(%arg0: i32) -> (i32, i32, i32) {
    %c0_i32 = arith.constant 0 : i32
    %c0_i32_0 = arith.constant 0 : i32
    %c0_i32_1 = arith.constant 0 : i32
    %c0_i32_2 = arith.constant 0 : i32
    return %c0_i32, %c0_i32_0, %c0_i32_1 : i32, i32, i32
  }
  func.func @transform_3(%arg0: i32) -> (i32, i32) {
    %c0_i32 = arith.constant 0 : i32
    %c0_i32_0 = arith.constant 0 : i32
    %c0_i32_1 = arith.constant 0 : i32
    return %c0_i32, %c0_i32_0 : i32, i32
  }
  func.func @transform_4(%arg0: i32) -> (i32, i32) {
    %c0_i32 = arith.constant 0 : i32
    %c0_i32_0 = arith.constant 0 : i32
    %c0_i32_1 = arith.constant 0 : i32
    return %c0_i32, %c0_i32_0 : i32, i32
  }
  func.func @transform_5(%arg0: i32) -> (i32, i32, i32) {
    %c0_i32 = arith.constant 0 : i32
    %c0_i32_0 = arith.constant 0 : i32
    %c0_i32_1 = arith.constant 0 : i32
    %c0_i32_2 = arith.constant 0 : i32
    return %c0_i32, %c0_i32_0, %c0_i32_1 : i32, i32, i32
  }
  func.func @transform_6(%arg0: i32) -> (i32, i32) {
    %c0_i32 = arith.constant 0 : i32
    %c0_i32_0 = arith.constant 0 : i32
    %c0_i32_1 = arith.constant 0 : i32
    return %c0_i32, %c0_i32_0 : i32, i32
  }
  func.func @transform_7(%arg0: i32) -> (i32, i32) {
    %c0_i32 = arith.constant 0 : i32
    %c0_i32_0 = arith.constant 0 : i32
    %c0_i32_1 = arith.constant 0 : i32
    return %c0_i32, %c0_i32_0 : i32, i32
  }
  func.func @transform_8(%arg0: i32) -> (i32, i32, i32) {
    %c0_i32 = arith.constant 0 : i32
    %c0_i32_0 = arith.constant 0 : i32
    %c0_i32_1 = arith.constant 0 : i32
    %c0_i32_2 = arith.constant 0 : i32
    return %c0_i32, %c0_i32_0, %c0_i32_1 : i32, i32, i32
  }
  func.func @transform_9(%arg0: i32) -> (i32, i32) {
    %c0_i32 = arith.constant 0 : i32
    %c0_i32_0 = arith.constant 0 : i32
    %c0_i32_1 = arith.constant 0 : i32
    return %c0_i32, %c0_i32_0 : i32, i32
  }
  func.func @transform_10(%arg0: i32) -> (i32, i32) {
    %c0_i32 = arith.constant 0 : i32
    %c0_i32_0 = arith.constant 0 : i32
    %c0_i32_1 = arith.constant 0 : i32
    return %c0_i32, %c0_i32_0 : i32, i32
  }
  func.func @transform_11(%arg0: i32) -> (i32, i32) {
    %c0_i32 = arith.constant 0 : i32
    %c0_i32_0 = arith.constant 0 : i32
    %c0_i32_1 = arith.constant 0 : i32
    return %c0_i32, %c0_i32_0 : i32, i32
  }
  func.func @transform_12(%arg0: i32) -> (i32, i32) {
    %c0_i32 = arith.constant 0 : i32
    %c0_i32_0 = arith.constant 0 : i32
    %c0_i32_1 = arith.constant 0 : i32
    return %c0_i32, %c0_i32_0 : i32, i32
  }
  func.func @transform_13(%arg0: i32) -> (i32, i32, i32) {
    %c0_i32 = arith.constant 0 : i32
    %c0_i32_0 = arith.constant 0 : i32
    %c0_i32_1 = arith.constant 0 : i32
    %c0_i32_2 = arith.constant 0 : i32
    return %c0_i32, %c0_i32_0, %c0_i32_1 : i32, i32, i32
  }
  func.func @transform_14(%arg0: i32) -> (i32, i32, i32) {
    %c0_i32 = arith.constant 0 : i32
    %c0_i32_0 = arith.constant 0 : i32
    %c0_i32_1 = arith.constant 0 : i32
    %c0_i32_2 = arith.constant 0 : i32
    return %c0_i32, %c0_i32_0, %c0_i32_1 : i32, i32, i32
  }
  func.func @transform_15(%arg0: i32) -> (i32, i32, i32) {
    %c0_i32 = arith.constant 0 : i32
    %c0_i32_0 = arith.constant 0 : i32
    %c0_i32_1 = arith.constant 0 : i32
    %c0_i32_2 = arith.constant 0 : i32
    return %c0_i32, %c0_i32_0, %c0_i32_1 : i32, i32, i32
  }
  func.func @transform_16(%arg0: i32) -> (i32, i32, i32) {
    %c0_i32 = arith.constant 0 : i32
    %c0_i32_0 = arith.constant 0 : i32
    %c0_i32_1 = arith.constant 0 : i32
    %c0_i32_2 = arith.constant 0 : i32
    return %c0_i32, %c0_i32_0, %c0_i32_1 : i32, i32, i32
  }
  func.func @transform_17(%arg0: i32) -> (i32, i32, i32) {
    %c0_i32 = arith.constant 0 : i32
    %c0_i32_0 = arith.constant 0 : i32
    %c0_i32_1 = arith.constant 0 : i32
    return %arg0, %c0_i32, %c0_i32_0 : i32, i32, i32
  }
}

</mosaic_0001>

<llo_original>
// kernel: tpu_custom_call.1
$region0: #{tpu_custom_call.1}
  #allocation0 [shape = 'u32[]', space=smem, size = 0x4, offset = 0x4, fixed_abs, tag = 'smem constant byte address 0x4 - core index']
  #allocation1 [shape = 'u32[144,128]{1,0:T(1,128)}', space=vmem, size = 0x12000, scoped, tag = 'internal scratch']
  #allocation2 [shape = 'f32[16,32]{1,0:T(8,128)}', space=vmem, size = 0x2000, scoped, tag = 'scratch operand']
  %s0 = inlined_call_operand.vmem [shape: f32[2,16,32], index: 0, kind: input, shape index: {}]
  %s1 = inlined_call_operand.vmem [shape: f32[2,8,32], index: 1, kind: input, shape index: {}]
  %s2 = inlined_call_operand.vmem [shape: bf16[3,32,64], index: 2, kind: input, shape index: {}]
  %s3 = inlined_call_operand.vmem [shape: f32[1,64], index: 3, kind: input, shape index: {}]
  %s4 = inlined_call_operand.vmem [shape: f32[1,64], index: 4, kind: input, shape index: {}]
  %s5 = inlined_call_operand.vmem [shape: bf16[3,64,64], index: 5, kind: input, shape index: {}]
  %s6 = inlined_call_operand.vmem [shape: f32[1,64], index: 6, kind: input, shape index: {}]
  %s7 = inlined_call_operand.vmem [shape: f32[1,64], index: 7, kind: input, shape index: {}]
  %s8 = inlined_call_operand.vmem [shape: bf16[3,64,32], index: 8, kind: input, shape index: {}]
  %s9 = inlined_call_operand.vmem [shape: f32[1,32], index: 9, kind: input, shape index: {}]
  %s10 = inlined_call_operand.vmem [shape: f32[1,32], index: 10, kind: input, shape index: {}]
  %s11 = inlined_call_operand.vmem [shape: f32[1,32], index: 11, kind: input, shape index: {}]
  %s12 = inlined_call_operand.vmem [shape: f32[1,32], index: 12, kind: input, shape index: {}]
  %s13 = inlined_call_operand.vmem [shape: bf16[4,32,8], index: 13, kind: input, shape index: {}]
  %s14 = inlined_call_operand.vmem [shape: bf16[4,32,8], index: 14, kind: input, shape index: {}]
  %s15 = inlined_call_operand.vmem [shape: bf16[4,32,8], index: 15, kind: input, shape index: {}]
  %s16 = inlined_call_operand.vmem [shape: bf16[4,8,32], index: 16, kind: input, shape index: {}]
  %s17 = inlined_call_operand.hbm [shape: f32[2,8,32], index: 17, kind: output, shape index: {}]
  %s18 = sld [smem:[#allocation0]]
  $region101: #{tpu_custom_call.1} parent=0
    _
  %s20 = ssub.s32 1, %s18
  %s21 = scalar_select 0, %s20, %s18
  $region1: #{tpu_custom_call.1} parent=0
    #allocation3 [shape = 'u8[8192]{0}', space=vmem, size = 0x2000, scoped, tag = 'output window, operand 0']
    #allocation4 [shape = 's32[2]{0}', space=sflag, size = 0x8, scoped, tag = 'scoped memory for tpu_custom_call.1']
    %22 = vsyncpa [#allocation4], 0
    %s23 = scalar_lea.sflag [#allocation4], 1
    %24 = vsyncpa %s23, 0
    loop: start=0, step=1, limit=4
    $region2: #{tpu_custom_call.1} parent=1 // loop_pre_header
      _
    $region3: #{tpu_custom_call.1} parent=1 // loop_header
      %s26 = sphi 0, %s30
      %p27 = scmp.ge.s32.totalorder %s26, 4
      %s36 = sphi 0, %s38
      %s39 = sphi 0, %s36
      %s40 = sphi 0, %s39
      %s56 = sphi 0, %s40
      %s62 = sphi 0, %s64
      %s65 = sphi 0, %s62
      %s66 = sphi 0, %s65
      %s82 = sphi 0, %s66
      %s86 = sphi 0, %s86
      %s88 = sphi 0, %s86
      %s89 = sphi 0, %s88
      %s103 = sphi 0, %s89
      %s107 = sphi 0, %s107
      %s109 = sphi 0, %s107
      %s110 = sphi 0, %s109
      %s124 = sphi 0, %s110
      %s128 = sphi 0, %s128
      %s130 = sphi 0, %s128
      %s131 = sphi 0, %s130
      %s145 = sphi 0, %s131
      %s149 = sphi 0, %s149
      %s151 = sphi 0, %s149
      %s152 = sphi 0, %s151
      %s166 = sphi 0, %s152
      %s170 = sphi 0, %s170
      %s172 = sphi 0, %s170
      %s173 = sphi 0, %s172
      %s187 = sphi 0, %s173
      %s191 = sphi 0, %s191
      %s193 = sphi 0, %s191
      %s194 = sphi 0, %s193
      %s208 = sphi 0, %s194
      %s212 = sphi 0, %s212
      %s214 = sphi 0, %s212
      %s215 = sphi 0, %s214
      %s229 = sphi 0, %s215
      %s233 = sphi 0, %s233
      %s235 = sphi 0, %s233
      %s236 = sphi 0, %s235
      %s250 = sphi 0, %s236
      %s254 = sphi 0, %s254
      %s256 = sphi 0, %s254
      %s257 = sphi 0, %s256
      %s271 = sphi 0, %s257
      %s275 = sphi 0, %s275
      %s277 = sphi 0, %s275
      %s278 = sphi 0, %s277
      %s292 = sphi 0, %s278
      %s296 = sphi 0, %s296
      %s298 = sphi 0, %s296
      %s299 = sphi 0, %s298
      %s313 = sphi 0, %s299
      %s317 = sphi 0, %s317
      %s319 = sphi 0, %s317
      %s320 = sphi 0, %s319
      %s334 = sphi 0, %s320
      %s338 = sphi 0, %s338
      %s340 = sphi 0, %s338
      %s341 = sphi 0, %s340
      %s355 = sphi 0, %s341
      %s359 = sphi 0, %s359
      %s361 = sphi 0, %s359
      %s362 = sphi 0, %s361
      %s376 = sphi 0, %s362
      %s380 = sphi 0, %s380
      %s382 = sphi 0, %s380
      %s383 = sphi 0, %s382
      %s397 = sphi 0, %s383
      %s403 = sphi 0, %s405
      %s406 = sphi 0, %s403
      %s407 = sphi 0, %s406
      %s423 = sphi 0, %s407
    $region4: #{tpu_custom_call.1} parent=1 // loop_header_branch
      %29 = sbr.rel (%p27) target = $region8
    $region5: #{tpu_custom_call.1} parent=1 // loop_body
      %s31 = ssub.s32 %s26, 1
      %s32 = ssub.s32 %s26, 2
      %s33 = sadd.s32 %s26, 1
      %s34 = ssub.s32 %s26, %s33
      %p35 = scmp.eq.s32.totalorder %s34, 0
      %s37 = sadd.s32 %s36, 1
      %s38 = scalar_select %p35, %s36, %s37
      %p41 = pneg %p35
      %p42 = scmp.eq.s32.totalorder %s26, 1
      %p43 = por %p41, %p42
      %p44 = scmp.ne.s32.totalorder %s36, %s39
      %p45 = scmp.eq.s32.totalorder %s26, 0
      %p46 = por %p44, %p45
      %p47 = scmp.ne.s32.totalorder %s36, %s39
      %p48 = scmp.eq.s32.totalorder %s31, 1
      %p49 = por %p47, %p48
      %p50 = scmp.ne.s32.totalorder %s39, %s40
      %p51 = scmp.eq.s32.totalorder %s31, 0
      %p52 = por %p50, %p51
      %p53 = scmp.ne.s32.totalorder %s39, %s40
      %p54 = scmp.eq.s32.totalorder %s32, 1
      %p55 = por %p53, %p54
      %p57 = scmp.ne.s32.totalorder %s40, %s56
      %p58 = scmp.eq.s32.totalorder %s32, 0
      %p59 = por %p57, %p58
      %s60 = ssub.s32 %s26, %s33
      %p61 = scmp.eq.s32.totalorder %s60, 0
      %s63 = sadd.s32 %s62, 1
      %s64 = scalar_select %p61, %s62, %s63
      %p67 = pneg %p61
      %p68 = scmp.eq.s32.totalorder %s26, 1
      %p69 = por %p67, %p68
      %p70 = scmp.ne.s32.totalorder %s62, %s65
      %p71 = scmp.eq.s32.totalorder %s26, 0
      %p72 = por %p70, %p71
      %p73 = scmp.ne.s32.totalorder %s62, %s65
      %p74 = scmp.eq.s32.totalorder %s31, 1
      %p75 = por %p73, %p74
      %p76 = scmp.ne.s32.totalorder %s65, %s66
      %p77 = scmp.eq.s32.totalorder %s31, 0
      %p78 = por %p76, %p77
      %p79 = scmp.ne.s32.totalorder %s65, %s66
      %p80 = scmp.eq.s32.totalorder %s32, 1
      %p81 = por %p79, %p80
      %p83 = scmp.ne.s32.totalorder %s66, %s82
      %p84 = scmp.eq.s32.totalorder %s32, 0
      %p85 = por %p83, %p84
      %s87 = sadd.s32 %s86, 1
      %p90 = scmp.eq.s32.totalorder %s26, 1
      %p91 = scmp.ne.s32.totalorder %s86, %s88
      %p92 = scmp.eq.s32.totalorder %s26, 0
      %p93 = por %p91, %p92
      %p94 = scmp.ne.s32.totalorder %s86, %s88
      %p95 = scmp.eq.s32.totalorder %s31, 1
      %p96 = por %p94, %p95
      %p97 = scmp.ne.s32.totalorder %s88, %s89
      %p98 = scmp.eq.s32.totalorder %s31, 0
      %p99 = por %p97, %p98
      %p100 = scmp.ne.s32.totalorder %s88, %s89
      %p101 = scmp.eq.s32.totalorder %s32, 1
      %p102 = por %p100, %p101
      %p104 = scmp.ne.s32.totalorder %s89, %s103
      %p105 = scmp.eq.s32.totalorder %s32, 0
      %p106 = por %p104, %p105
      %s108 = sadd.s32 %s107, 1
      %p111 = scmp.eq.s32.totalorder %s26, 1
      %p112 = scmp.ne.s32.totalorder %s107, %s109
      %p113 = scmp.eq.s32.totalorder %s26, 0
      %p114 = por %p112, %p113
      %p115 = scmp.ne.s32.totalorder %s107, %s109
      %p116 = scmp.eq.s32.totalorder %s31, 1
      %p117 = por %p115, %p116
      %p118 = scmp.ne.s32.totalorder %s109, %s110
      %p119 = scmp.eq.s32.totalorder %s31, 0
      %p120 = por %p118, %p119
      %p121 = scmp.ne.s32.totalorder %s109, %s110
      %p122 = scmp.eq.s32.totalorder %s32, 1
      %p123 = por %p121, %p122
      %p125 = scmp.ne.s32.totalorder %s110, %s124
      %p126 = scmp.eq.s32.totalorder %s32, 0
      %p127 = por %p125, %p126
      %s129 = sadd.s32 %s128, 1
      %p132 = scmp.eq.s32.totalorder %s26, 1
      %p133 = scmp.ne.s32.totalorder %s128, %s130
      %p134 = scmp.eq.s32.totalorder %s26, 0
      %p135 = por %p133, %p134
      %p136 = scmp.ne.s32.totalorder %s128, %s130
      %p137 = scmp.eq.s32.totalorder %s31, 1
      %p138 = por %p136, %p137
      %p139 = scmp.ne.s32.totalorder %s130, %s131
      %p140 = scmp.eq.s32.totalorder %s31, 0
      %p141 = por %p139, %p140
      %p142 = scmp.ne.s32.totalorder %s130, %s131
      %p143 = scmp.eq.s32.totalorder %s32, 1
      %p144 = por %p142, %p143
      %p146 = scmp.ne.s32.totalorder %s131, %s145
      %p147 = scmp.eq.s32.totalorder %s32, 0
      %p148 = por %p146, %p147
      %s150 = sadd.s32 %s149, 1
      %p153 = scmp.eq.s32.totalorder %s26, 1
      %p154 = scmp.ne.s32.totalorder %s149, %s151
      %p155 = scmp.eq.s32.totalorder %s26, 0
      %p156 = por %p154, %p155
      %p157 = scmp.ne.s32.totalorder %s149, %s151
      %p158 = scmp.eq.s32.totalorder %s31, 1
      %p159 = por %p157, %p158
      %p160 = scmp.ne.s32.totalorder %s151, %s152
      %p161 = scmp.eq.s32.totalorder %s31, 0
      %p162 = por %p160, %p161
      %p163 = scmp.ne.s32.totalorder %s151, %s152
      %p164 = scmp.eq.s32.totalorder %s32, 1
      %p165 = por %p163, %p164
      %p167 = scmp.ne.s32.totalorder %s152, %s166
      %p168 = scmp.eq.s32.totalorder %s32, 0
      %p169 = por %p167, %p168
      %s171 = sadd.s32 %s170, 1
      %p174 = scmp.eq.s32.totalorder %s26, 1
      %p175 = scmp.ne.s32.totalorder %s170, %s172
      %p176 = scmp.eq.s32.totalorder %s26, 0
      %p177 = por %p175, %p176
      %p178 = scmp.ne.s32.totalorder %s170, %s172
      %p179 = scmp.eq.s32.totalorder %s31, 1
      %p180 = por %p178, %p179
      %p181 = scmp.ne.s32.totalorder %s172, %s173
      %p182 = scmp.eq.s32.totalorder %s31, 0
      %p183 = por %p181, %p182
      %p184 = scmp.ne.s32.totalorder %s172, %s173
      %p185 = scmp.eq.s32.totalorder %s32, 1
      %p186 = por %p184, %p185
      %p188 = scmp.ne.s32.totalorder %s173, %s187
      %p189 = scmp.eq.s32.totalorder %s32, 0
      %p190 = por %p188, %p189
      %s192 = sadd.s32 %s191, 1
      %p195 = scmp.eq.s32.totalorder %s26, 1
      %p196 = scmp.ne.s32.totalorder %s191, %s193
      %p197 = scmp.eq.s32.totalorder %s26, 0
      %p198 = por %p196, %p197
      %p199 = scmp.ne.s32.totalorder %s191, %s193
      %p200 = scmp.eq.s32.totalorder %s31, 1
      %p201 = por %p199, %p200
      %p202 = scmp.ne.s32.totalorder %s193, %s194
      %p203 = scmp.eq.s32.totalorder %s31, 0
      %p204 = por %p202, %p203
      %p205 = scmp.ne.s32.totalorder %s193, %s194
      %p206 = scmp.eq.s32.totalorder %s32, 1
      %p207 = por %p205, %p206
      %p209 = scmp.ne.s32.totalorder %s194, %s208
      %p210 = scmp.eq.s32.totalorder %s32, 0
      %p211 = por %p209, %p210
      %s213 = sadd.s32 %s212, 1
      %p216 = scmp.eq.s32.totalorder %s26, 1
      %p217 = scmp.ne.s32.totalorder %s212, %s214
      %p218 = scmp.eq.s32.totalorder %s26, 0
      %p219 = por %p217, %p218
      %p220 = scmp.ne.s32.totalorder %s212, %s214
      %p221 = scmp.eq.s32.totalorder %s31, 1
      %p222 = por %p220, %p221
      %p223 = scmp.ne.s32.totalorder %s214, %s215
      %p224 = scmp.eq.s32.totalorder %s31, 0
      %p225 = por %p223, %p224
      %p226 = scmp.ne.s32.totalorder %s214, %s215
      %p227 = scmp.eq.s32.totalorder %s32, 1
      %p228 = por %p226, %p227
      %p230 = scmp.ne.s32.totalorder %s215, %s229
      %p231 = scmp.eq.s32.totalorder %s32, 0
      %p232 = por %p230, %p231
      %s234 = sadd.s32 %s233, 1
      %p237 = scmp.eq.s32.totalorder %s26, 1
      %p238 = scmp.ne.s32.totalorder %s233, %s235
      %p239 = scmp.eq.s32.totalorder %s26, 0
      %p240 = por %p238, %p239
      %p241 = scmp.ne.s32.totalorder %s233, %s235
      %p242 = scmp.eq.s32.totalorder %s31, 1
      %p243 = por %p241, %p242
      %p244 = scmp.ne.s32.totalorder %s235, %s236
      %p245 = scmp.eq.s32.totalorder %s31, 0
      %p246 = por %p244, %p245
      %p247 = scmp.ne.s32.totalorder %s235, %s236
      %p248 = scmp.eq.s32.totalorder %s32, 1
      %p249 = por %p247, %p248
      %p251 = scmp.ne.s32.totalorder %s236, %s250
      %p252 = scmp.eq.s32.totalorder %s32, 0
      %p253 = por %p251, %p252
      %s255 = sadd.s32 %s254, 1
      %p258 = scmp.eq.s32.totalorder %s26, 1
      %p259 = scmp.ne.s32.totalorder %s254, %s256
      %p260 = scmp.eq.s32.totalorder %s26, 0
      %p261 = por %p259, %p260
      %p262 = scmp.ne.s32.totalorder %s254, %s256
      %p263 = scmp.eq.s32.totalorder %s31, 1
      %p264 = por %p262, %p263
      %p265 = scmp.ne.s32.totalorder %s256, %s257
      %p266 = scmp.eq.s32.totalorder %s31, 0
      %p267 = por %p265, %p266
      %p268 = scmp.ne.s32.totalorder %s256, %s257
      %p269 = scmp.eq.s32.totalorder %s32, 1
      %p270 = por %p268, %p269
      %p272 = scmp.ne.s32.totalorder %s257, %s271
      %p273 = scmp.eq.s32.totalorder %s32, 0
      %p274 = por %p272, %p273
      %s276 = sadd.s32 %s275, 1
      %p279 = scmp.eq.s32.totalorder %s26, 1
      %p280 = scmp.ne.s32.totalorder %s275, %s277
      %p281 = scmp.eq.s32.totalorder %s26, 0
      %p282 = por %p280, %p281
      %p283 = scmp.ne.s32.totalorder %s275, %s277
      %p284 = scmp.eq.s32.totalorder %s31, 1
      %p285 = por %p283, %p284
      %p286 = scmp.ne.s32.totalorder %s277, %s278
      %p287 = scmp.eq.s32.totalorder %s31, 0
      %p288 = por %p286, %p287
      %p289 = scmp.ne.s32.totalorder %s277, %s278
      %p290 = scmp.eq.s32.totalorder %s32, 1
      %p291 = por %p289, %p290
      %p293 = scmp.ne.s32.totalorder %s278, %s292
      %p294 = scmp.eq.s32.totalorder %s32, 0
      %p295 = por %p293, %p294
      %s297 = sadd.s32 %s296, 1
      %p300 = scmp.eq.s32.totalorder %s26, 1
      %p301 = scmp.ne.s32.totalorder %s296, %s298
      %p302 = scmp.eq.s32.totalorder %s26, 0
      %p303 = por %p301, %p302
      %p304 = scmp.ne.s32.totalorder %s296, %s298
      %p305 = scmp.eq.s32.totalorder %s31, 1
      %p306 = por %p304, %p305
      %p307 = scmp.ne.s32.totalorder %s298, %s299
      %p308 = scmp.eq.s32.totalorder %s31, 0
      %p309 = por %p307, %p308
      %p310 = scmp.ne.s32.totalorder %s298, %s299
      %p311 = scmp.eq.s32.totalorder %s32, 1
      %p312 = por %p310, %p311
      %p314 = scmp.ne.s32.totalorder %s299, %s313
      %p315 = scmp.eq.s32.totalorder %s32, 0
      %p316 = por %p314, %p315
      %s318 = sadd.s32 %s317, 1
      %p321 = scmp.eq.s32.totalorder %s26, 1
      %p322 = scmp.ne.s32.totalorder %s317, %s319
      %p323 = scmp.eq.s32.totalorder %s26, 0
      %p324 = por %p322, %p323
      %p325 = scmp.ne.s32.totalorder %s317, %s319
      %p326 = scmp.eq.s32.totalorder %s31, 1
      %p327 = por %p325, %p326
      %p328 = scmp.ne.s32.totalorder %s319, %s320
      %p329 = scmp.eq.s32.totalorder %s31, 0
      %p330 = por %p328, %p329
      %p331 = scmp.ne.s32.totalorder %s319, %s320
      %p332 = scmp.eq.s32.totalorder %s32, 1
      %p333 = por %p331, %p332
      %p335 = scmp.ne.s32.totalorder %s320, %s334
      %p336 = scmp.eq.s32.totalorder %s32, 0
      %p337 = por %p335, %p336
      %s339 = sadd.s32 %s338, 1
      %p342 = scmp.eq.s32.totalorder %s26, 1
      %p343 = scmp.ne.s32.totalorder %s338, %s340
      %p344 = scmp.eq.s32.totalorder %s26, 0
      %p345 = por %p343, %p344
      %p346 = scmp.ne.s32.totalorder %s338, %s340
      %p347 = scmp.eq.s32.totalorder %s31, 1
      %p348 = por %p346, %p347
      %p349 = scmp.ne.s32.totalorder %s340, %s341
      %p350 = scmp.eq.s32.totalorder %s31, 0
      %p351 = por %p349, %p350
      %p352 = scmp.ne.s32.totalorder %s340, %s341
      %p353 = scmp.eq.s32.totalorder %s32, 1
      %p354 = por %p352, %p353
      %p356 = scmp.ne.s32.totalorder %s341, %s355
      %p357 = scmp.eq.s32.totalorder %s32, 0
      %p358 = por %p356, %p357
      %s360 = sadd.s32 %s359, 1
      %p363 = scmp.eq.s32.totalorder %s26, 1
      %p364 = scmp.ne.s32.totalorder %s359, %s361
      %p365 = scmp.eq.s32.totalorder %s26, 0
      %p366 = por %p364, %p365
      %p367 = scmp.ne.s32.totalorder %s359, %s361
      %p368 = scmp.eq.s32.totalorder %s31, 1
      %p369 = por %p367, %p368
      %p370 = scmp.ne.s32.totalorder %s361, %s362
      %p371 = scmp.eq.s32.totalorder %s31, 0
      %p372 = por %p370, %p371
      %p373 = scmp.ne.s32.totalorder %s361, %s362
      %p374 = scmp.eq.s32.totalorder %s32, 1
      %p375 = por %p373, %p374
      %p377 = scmp.ne.s32.totalorder %s362, %s376
      %p378 = scmp.eq.s32.totalorder %s32, 0
      %p379 = por %p377, %p378
      %s381 = sadd.s32 %s380, 1
      %p384 = scmp.eq.s32.totalorder %s26, 1
      %p385 = scmp.ne.s32.totalorder %s380, %s382
      %p386 = scmp.eq.s32.totalorder %s26, 0
      %p387 = por %p385, %p386
      %p388 = scmp.ne.s32.totalorder %s380, %s382
      %p389 = scmp.eq.s32.totalorder %s31, 1
      %p390 = por %p388, %p389
      %p391 = scmp.ne.s32.totalorder %s382, %s383
      %p392 = scmp.eq.s32.totalorder %s31, 0
      %p393 = por %p391, %p392
      %p394 = scmp.ne.s32.totalorder %s382, %s383
      %p395 = scmp.eq.s32.totalorder %s32, 1
      %p396 = por %p394, %p395
      %p398 = scmp.ne.s32.totalorder %s383, %s397
      %p399 = scmp.eq.s32.totalorder %s32, 0
      %p400 = por %p398, %p399
      %s401 = ssub.s32 %s26, %s33
      %p402 = scmp.eq.s32.totalorder %s401, 0
      %s404 = sadd.s32 %s403, 1
      %s405 = scalar_select %p402, %s403, %s404
      %p408 = pneg %p402
      %p409 = scmp.eq.s32.totalorder %s26, 1
      %p410 = por %p408, %p409
      %p411 = scmp.ne.s32.totalorder %s403, %s406
      %p412 = scmp.eq.s32.totalorder %s26, 0
      %p413 = por %p411, %p412
      %p414 = scmp.ne.s32.totalorder %s403, %s406
      %p415 = scmp.eq.s32.totalorder %s31, 1
      %p416 = por %p414, %p415
      %p417 = scmp.ne.s32.totalorder %s406, %s407
      %p418 = scmp.eq.s32.totalorder %s31, 0
      %p419 = por %p417, %p418
      %p420 = scmp.ne.s32.totalorder %s406, %s407
      %p421 = scmp.eq.s32.totalorder %s32, 1
      %p422 = por %p420, %p421
      %p424 = scmp.ne.s32.totalorder %s407, %s423
      %p425 = scmp.eq.s32.totalorder %s32, 0
      %p426 = por %p424, %p425
      %p427 = scmp.le.s32.totalorder 1, %s26
      %p428 = scmp.lt.s32.totalorder %s26, 3
      %p429 = pnand %p427, %p428
      %p430 = pneg %p429
      // Predicated region
      $region9: #{tpu_custom_call.1} parent=5 // pred_check
        _
      $region10: #{tpu_custom_call.1} parent=5 // pred_check_branch
        %432 = sbr.rel (%p429) target = $region12
      $region11: #{tpu_custom_call.1} parent=5 // pred_region
        %s433 = ssub.s32 %s26, 1
        // Predicated region
        $region13: #{tpu_custom_call.1} parent=11 // pred_check
          %p434 = pneg %p99
        $region14: #{tpu_custom_call.1} parent=11 // pred_check_branch
          %436 = sbr.rel (%p434) target = $region16
        $region15: #{tpu_custom_call.1} parent=11 // pred_region
          _
        $region16: #{tpu_custom_call.1} parent=11 // pred_fallthru
          _
        // Predicated region
        $region17: #{tpu_custom_call.1} parent=11 // pred_check
          %p437 = pneg %p120
        $region18: #{tpu_custom_call.1} parent=11 // pred_check_branch
          %439 = sbr.rel (%p437) target = $region20
        $region19: #{tpu_custom_call.1} parent=11 // pred_region
          _
        $region20: #{tpu_custom_call.1} parent=11 // pred_fallthru
          _
        // Predicated region
        $region21: #{tpu_custom_call.1} parent=11 // pred_check
          %p440 = pneg %p141
        $region22: #{tpu_custom_call.1} parent=11 // pred_check_branch
          %442 = sbr.rel (%p440) target = $region24
        $region23: #{tpu_custom_call.1} parent=11 // pred_region
          _
        $region24: #{tpu_custom_call.1} parent=11 // pred_fallthru
          _
        // Predicated region
        $region25: #{tpu_custom_call.1} parent=11 // pred_check
          %p443 = pneg %p162
        $region26: #{tpu_custom_call.1} parent=11 // pred_check_branch
          %445 = sbr.rel (%p443) target = $region28
        $region27: #{tpu_custom_call.1} parent=11 // pred_region
          _
        $region28: #{tpu_custom_call.1} parent=11 // pred_fallthru
          _
        // Predicated region
        $region29: #{tpu_custom_call.1} parent=11 // pred_check
          %p446 = pneg %p183
        $region30: #{tpu_custom_call.1} parent=11 // pred_check_branch
          %448 = sbr.rel (%p446) target = $region32
        $region31: #{tpu_custom_call.1} parent=11 // pred_region
          _
        $region32: #{tpu_custom_call.1} parent=11 // pred_fallthru
          _
        // Predicated region
        $region33: #{tpu_custom_call.1} parent=11 // pred_check
          %p449 = pneg %p204
        $region34: #{tpu_custom_call.1} parent=11 // pred_check_branch
          %451 = sbr.rel (%p449) target = $region36
        $region35: #{tpu_custom_call.1} parent=11 // pred_region
          _
        $region36: #{tpu_custom_call.1} parent=11 // pred_fallthru
          _
        // Predicated region
        $region37: #{tpu_custom_call.1} parent=11 // pred_check
          %p452 = pneg %p225
        $region38: #{tpu_custom_call.1} parent=11 // pred_check_branch
          %454 = sbr.rel (%p452) target = $region40
        $region39: #{tpu_custom_call.1} parent=11 // pred_region
          _
        $region40: #{tpu_custom_call.1} parent=11 // pred_fallthru
          _
        // Predicated region
        $region41: #{tpu_custom_call.1} parent=11 // pred_check
          %p455 = pneg %p246
        $region42: #{tpu_custom_call.1} parent=11 // pred_check_branch
          %457 = sbr.rel (%p455) target = $region44
        $region43: #{tpu_custom_call.1} parent=11 // pred_region
          _
        $region44: #{tpu_custom_call.1} parent=11 // pred_fallthru
          _
        // Predicated region
        $region45: #{tpu_custom_call.1} parent=11 // pred_check
          %p458 = pneg %p267
        $region46: #{tpu_custom_call.1} parent=11 // pred_check_branch
          %460 = sbr.rel (%p458) target = $region48
        $region47: #{tpu_custom_call.1} parent=11 // pred_region
          _
        $region48: #{tpu_custom_call.1} parent=11 // pred_fallthru
          _
        // Predicated region
        $region49: #{tpu_custom_call.1} parent=11 // pred_check
          %p461 = pneg %p288
        $region50: #{tpu_custom_call.1} parent=11 // pred_check_branch
          %463 = sbr.rel (%p461) target = $region52
        $region51: #{tpu_custom_call.1} parent=11 // pred_region
          _
        $region52: #{tpu_custom_call.1} parent=11 // pred_fallthru
          _
        // Predicated region
        $region53: #{tpu_custom_call.1} parent=11 // pred_check
          %p464 = pneg %p309
        $region54: #{tpu_custom_call.1} parent=11 // pred_check_branch
          %466 = sbr.rel (%p464) target = $region56
        $region55: #{tpu_custom_call.1} parent=11 // pred_region
          _
        $region56: #{tpu_custom_call.1} parent=11 // pred_fallthru
          _
        // Predicated region
        $region57: #{tpu_custom_call.1} parent=11 // pred_check
          %p467 = pneg %p330
        $region58: #{tpu_custom_call.1} parent=11 // pred_check_branch
          %469 = sbr.rel (%p467) target = $region60
        $region59: #{tpu_custom_call.1} parent=11 // pred_region
          _
        $region60: #{tpu_custom_call.1} parent=11 // pred_fallthru
          _
        // Predicated region
        $region61: #{tpu_custom_call.1} parent=11 // pred_check
          %p470 = pneg %p351
        $region62: #{tpu_custom_call.1} parent=11 // pred_check_branch
          %472 = sbr.rel (%p470) target = $region64
        $region63: #{tpu_custom_call.1} parent=11 // pred_region
          _
        $region64: #{tpu_custom_call.1} parent=11 // pred_fallthru
          _
        // Predicated region
        $region65: #{tpu_custom_call.1} parent=11 // pred_check
          %p473 = pneg %p372
        $region66: #{tpu_custom_call.1} parent=11 // pred_check_branch
          %475 = sbr.rel (%p473) target = $region68
        $region67: #{tpu_custom_call.1} parent=11 // pred_region
          _
        $region68: #{tpu_custom_call.1} parent=11 // pred_fallthru
          _
        // Predicated region
        $region69: #{tpu_custom_call.1} parent=11 // pred_check
          %p476 = pneg %p393
        $region70: #{tpu_custom_call.1} parent=11 // pred_check_branch
          %478 = sbr.rel (%p476) target = $region72
        $region71: #{tpu_custom_call.1} parent=11 // pred_region
          _
        $region72: #{tpu_custom_call.1} parent=11 // pred_fallthru
          _
      $region12: #{tpu_custom_call.1} parent=5 // pred_fallthru
        _
      %p479 = scmp.lt.s32.totalorder %s26, 2
      // Predicated region
      $region73: #{tpu_custom_call.1} parent=5 // pred_check
        %p480 = pneg %p479
      $region74: #{tpu_custom_call.1} parent=5 // pred_check_branch
        %482 = sbr.rel (%p480) target = $region76
      $region75: #{tpu_custom_call.1} parent=5 // pred_region
        // Predicated region
        $region77: #{tpu_custom_call.1} parent=75 // pred_check
          %p483 = pneg %p46
        $region78: #{tpu_custom_call.1} parent=75 // pred_check_branch
          %485 = sbr.rel (%p483) target = $region80
        $region79: #{tpu_custom_call.1} parent=75 // pred_region
          %p486 = scmp.lt.s32.totalorder %s26, 1
          %s487 = scalar_select %p486, %s26, 1
          %s488 = smul.addr %s487, 2
          %s489 = smul.addr %s488, 8
          %s490 = scalar_lea.vmem %s0, %s489
        $region80: #{tpu_custom_call.1} parent=75 // pred_fallthru
          _
        // Predicated region
        $region81: #{tpu_custom_call.1} parent=75 // pred_check
          %p491 = pneg %p72
        $region82: #{tpu_custom_call.1} parent=75 // pred_check_branch
          %493 = sbr.rel (%p491) target = $region84
        $region83: #{tpu_custom_call.1} parent=75 // pred_region
          %p494 = scmp.lt.s32.totalorder %s26, 1
          %s495 = scalar_select %p494, %s26, 1
          %s496 = smul.addr %s495, 8
          %s497 = scalar_lea.vmem %s1, %s496
        $region84: #{tpu_custom_call.1} parent=75 // pred_fallthru
          _
      $region76: #{tpu_custom_call.1} parent=5 // pred_fallthru
        _
      %p498 = scmp.le.s32.totalorder 1, %s26
      %p499 = scmp.lt.s32.totalorder %s26, 3
      %p500 = pnand %p498, %p499
      %p501 = pneg %p500
      // Predicated region
      $region85: #{tpu_custom_call.1} parent=5 // pred_check
        _
      $region86: #{tpu_custom_call.1} parent=5 // pred_check_branch
        %503 = sbr.rel (%p500) target = $region88
      $region87: #{tpu_custom_call.1} parent=5 // pred_region
        %s504 = ssub.s32 %s26, 1
        %p505 = scmp.lt.s32.totalorder %s31, 1
        %s506 = scalar_select %p505, %s31, 1
        %s507 = smul.addr %s506, 2
        %s508 = smul.addr %s507, 8
        %s509 = scalar_lea.vmem %s0, %s508
        %p510 = pneg %p52
        %p511 = pneg %p49
        %p512 = scmp.lt.s32.totalorder %s31, 1
        %s513 = scalar_select %p512, %s31, 1
        %s514 = smul.addr %s513, 8
        %s515 = scalar_lea.vmem %s1, %s514
        %p516 = pneg %p78
        %p517 = pneg %p75
        %p518 = pneg %p99
        %p519 = pneg %p96
        %p520 = pneg %p120
        %p521 = pneg %p117
        %p522 = pneg %p141
        %p523 = pneg %p138
        %p524 = pneg %p162
        %p525 = pneg %p159
        %p526 = pneg %p183
        %p527 = pneg %p180
        %p528 = pneg %p204
        %p529 = pneg %p201
        %p530 = pneg %p225
        %p531 = pneg %p222
        %p532 = pneg %p246
        %p533 = pneg %p243
        %p534 = pneg %p267
        %p535 = pneg %p264
        %p536 = pneg %p288
        %p537 = pneg %p285
        %p538 = pneg %p309
        %p539 = pneg %p306
        %p540 = pneg %p330
        %p541 = pneg %p327
        %p542 = pneg %p351
        %p543 = pneg %p348
        %p544 = pneg %p372
        %p545 = pneg %p369
        %p546 = pneg %p393
        %p547 = pneg %p390
        %p548 = pneg %p419
        %p549 = pneg %p416
        %s550 = sand.u32 %s406, 1
        %s551 = scalar_lea.sflag [#allocation4], %s550
        %s552 = sand.u32 %s406, 1
        %s553 = smul.addr %s552, 8
        %s554 = scalar_lea.vmem [#allocation3], %s553
        %p555 = scmp.lt.s32.totalorder %s31, 1
        %s556 = scalar_select %p555, %s31, 1
        %s557 = smul.addr %s556, 2
        %s558 = smul.addr %s557, 8
        %s559 = scalar_lea.vmem %s0, %s558
        %p560 = scmp.lt.s32.totalorder %s31, 1
        %s561 = scalar_select %p560, %s31, 1
        %s562 = smul.addr %s561, 8
        %s563 = scalar_lea.vmem %s1, %s562
        %v565 = vld [vmem:[%s559] sm:$0xff]
        %v566 = vld [vmem:[%s559 + $0x8] sm:$0xff]
        %v567 = vld [vmem:[%s563] sm:$0xff]
        %v568 = vpack.c.bf16 %v566, %v565
        %v569 = vld [vmem:[%s2] sm:$0xf]
        %v570 = vld [vmem:[%s2 + $0x4] sm:$0xf]
        %v571 = vld [vmem:[%s2 + $0x8] sm:$0xf]
        %v572 = vld [vmem:[%s2 + $0xc] sm:$0xf]
        %v577 = vunpack.c.l.b16 %v569
        %v578 = vunpack.c.l.b16 %v570
        %v579 = vunpack.c.l.b16 %v571
        %v580 = vunpack.c.l.b16 %v572
        %v581 = vpack.c.b16 %v578, %v577
        %v582 = vpack.c.b16 %v580, %v579
        %vm585 = vcmask 261120
        %v587 = vsel %vm585, %v568, 0
        %589 = vmatprep.subr.bf16.mxu0 0
        %590 = vmatpush1.bf16.msra.mxu0 %v581
        %591 = vmatprep.subr.bf16.mxu0 0
        %592 = vmatpush1.bf16.msra.mxu0 %v582
        %593 = vmatprep.subr.bf16.mxu0 0
        %594 = vmatpush1.bf16.msra.mxu0 0
        %595 = vmatprep.subr.bf16.mxu0 0
        %596 = vmatpush1.bf16.msra.mxu0 0
        %597 = vmatprep.subr.bf16.mxu0 0
        %598 = vmatpush1.bf16.msra.mxu0 0
        %599 = vmatprep.subr.bf16.mxu0 0
        %600 = vmatpush1.bf16.msra.mxu0 0
        %601 = vmatprep.subr.bf16.mxu0 0
        %602 = vmatpush1.bf16.msra.mxu0 0
        %603 = vmatprep.subr.bf16.mxu0 0
        %604 = vmatpush1.bf16.msra.mxu0 0
        %605 = vmatprep.subr.bf16.mxu0 0
        %606 = vmatpush1.bf16.msra.mxu0 0
        %607 = vmatprep.subr.bf16.mxu0 0
        %608 = vmatpush1.bf16.msra.mxu0 0
        %609 = vmatprep.subr.bf16.mxu0 0
        %610 = vmatpush1.bf16.msra.mxu0 0
        %611 = vmatprep.subr.bf16.mxu0 0
        %612 = vmatpush1.bf16.msra.mxu0 0
        %613 = vmatprep.subr.bf16.mxu0 0
        %614 = vmatpush1.bf16.msra.mxu0 0
        %615 = vmatprep.subr.bf16.mxu0 0
        %616 = vmatpush1.bf16.msra.mxu0 0
        %617 = vmatprep.subr.bf16.mxu0 0
        %618 = vmatpush1.bf16.msra.mxu0 0
        %619 = vmatprep.subr.bf16.mxu0 0
        %620 = vmatpush1.bf16.msra.mxu0 0
        %621 = vmatprep.mubr.bf16.mxu0 0
        %622 = vmatmul.mubr.bf16.gmra.mrb[0].mxu0 %v587
        %v623 = vpop.f32.mrb[0].mxu0
        %v624 = vadd.f32 0.0, %v623
        %v625 = vpop.f32.mrb[0].mxu0
        %v626 = vpop.f32.mrb[0].mxu0
        %v627 = vadd.f32 0.0, %v626
        %v628 = vpop.f32.mrb[0].mxu0
        %629 = vdwg.mxu0
        %s630 = scalar_lea.vmem %s2, 16
        %v631 = vld [vmem:[%s630] sm:$0xf]
        %v632 = vld [vmem:[%s630 + $0x4] sm:$0xf]
        %v633 = vld [vmem:[%s630 + $0x8] sm:$0xf]
        %v634 = vld [vmem:[%s630 + $0xc] sm:$0xf]
        %s635 = scalar_lea.vmem %s2, 32
        %v636 = vld [vmem:[%s635] sm:$0xf]
        %v637 = vld [vmem:[%s635 + $0x4] sm:$0xf]
        %v638 = vld [vmem:[%s635 + $0x8] sm:$0xf]
        %v639 = vld [vmem:[%s635 + $0xc] sm:$0xf]
        %v644 = vunpack.c.l.b16 %v636
        %v645 = vunpack.c.l.b16 %v637
        %v646 = vunpack.c.l.b16 %v638
        %v647 = vunpack.c.l.b16 %v639
        %v648 = vpack.c.b16 %v645, %v644
        %v649 = vpack.c.b16 %v647, %v646
        %652 = vmatprep.subr.bf16.mxu0 0
        %653 = vmatpush1.bf16.msra.mxu0 %v648
        %654 = vmatprep.subr.bf16.mxu0 0
        %655 = vmatpush1.bf16.msra.mxu0 %v649
        %656 = vmatprep.subr.bf16.mxu0 0
        %657 = vmatpush1.bf16.msra.mxu0 0
        %658 = vmatprep.subr.bf16.mxu0 0
        %659 = vmatpush1.bf16.msra.mxu0 0
        %660 = vmatprep.subr.bf16.mxu0 0
        %661 = vmatpush1.bf16.msra.mxu0 0
        %662 = vmatprep.subr.bf16.mxu0 0
        %663 = vmatpush1.bf16.msra.mxu0 0
        %664 = vmatprep.subr.bf16.mxu0 0
        %665 = vmatpush1.bf16.msra.mxu0 0
        %666 = vmatprep.subr.bf16.mxu0 0
        %667 = vmatpush1.bf16.msra.mxu0 0
        %668 = vmatprep.subr.bf16.mxu0 0
        %669 = vmatpush1.bf16.msra.mxu0 0
        %670 = vmatprep.subr.bf16.mxu0 0
        %671 = vmatpush1.bf16.msra.mxu0 0
        %672 = vmatprep.subr.bf16.mxu0 0
        %673 = vmatpush1.bf16.msra.mxu0 0
        %674 = vmatprep.subr.bf16.mxu0 0
        %675 = vmatpush1.bf16.msra.mxu0 0
        %676 = vmatprep.subr.bf16.mxu0 0
        %677 = vmatpush1.bf16.msra.mxu0 0
        %678 = vmatprep.subr.bf16.mxu0 0
        %679 = vmatpush1.bf16.msra.mxu0 0
        %680 = vmatprep.subr.bf16.mxu0 0
        %681 = vmatpush1.bf16.msra.mxu0 0
        %682 = vmatprep.subr.bf16.mxu0 0
        %683 = vmatpush1.bf16.msra.mxu0 0
        %684 = vmatprep.mubr.bf16.mxu0 0
        %685 = vmatmul.mubr.bf16.gmra.mrb[0].mxu0 %v587
        %v686 = vpop.f32.mrb[0].mxu0
        %v687 = vadd.f32 0.0, %v686
        %v688 = vpop.f32.mrb[0].mxu0
        %v689 = vpop.f32.mrb[0].mxu0
        %v690 = vadd.f32 0.0, %v689
        %v691 = vpop.f32.mrb[0].mxu0
        %692 = vdwg.mxu0
        %vm695 = vcmask 1040384
        %v696 = vrot.slane %v624, 7
        %v697 = vrot.slane %v627, 7
        %v698 = vsel %vm695, %v696, %v697
        %v701 = vsel %vm695, 0.0, %v696
        %v706 = vunpack.c.l.b16 %v631
        %v707 = vunpack.c.l.b16 %v632
        %v708 = vunpack.c.l.b16 %v633
        %v709 = vunpack.c.l.b16 %v634
        %v710 = vpack.c.b16 %v707, %v706
        %v711 = vpack.c.b16 %v709, %v708
        %714 = vmatprep.subr.bf16.mxu0 0
        %715 = vmatpush1.bf16.msra.mxu0 %v710
        %716 = vmatprep.subr.bf16.mxu0 0
        %717 = vmatpush1.bf16.msra.mxu0 %v711
        %718 = vmatprep.subr.bf16.mxu0 0
        %719 = vmatpush1.bf16.msra.mxu0 0
        %720 = vmatprep.subr.bf16.mxu0 0
        %721 = vmatpush1.bf16.msra.mxu0 0
        %722 = vmatprep.subr.bf16.mxu0 0
        %723 = vmatpush1.bf16.msra.mxu0 0
        %724 = vmatprep.subr.bf16.mxu0 0
        %725 = vmatpush1.bf16.msra.mxu0 0
        %726 = vmatprep.subr.bf16.mxu0 0
        %727 = vmatpush1.bf16.msra.mxu0 0
        %728 = vmatprep.subr.bf16.mxu0 0
        %729 = vmatpush1.bf16.msra.mxu0 0
        %730 = vmatprep.subr.bf16.mxu0 0
        %731 = vmatpush1.bf16.msra.mxu0 0
        %732 = vmatprep.subr.bf16.mxu0 0
        %733 = vmatpush1.bf16.msra.mxu0 0
        %734 = vmatprep.subr.bf16.mxu0 0
        %735 = vmatpush1.bf16.msra.mxu0 0
        %736 = vmatprep.subr.bf16.mxu0 0
        %737 = vmatpush1.bf16.msra.mxu0 0
        %738 = vmatprep.subr.bf16.mxu0 0
        %739 = vmatpush1.bf16.msra.mxu0 0
        %740 = vmatprep.subr.bf16.mxu0 0
        %741 = vmatpush1.bf16.msra.mxu0 0
        %742 = vmatprep.subr.bf16.mxu0 0
        %743 = vmatpush1.bf16.msra.mxu0 0
        %744 = vmatprep.subr.bf16.mxu0 0
        %745 = vmatpush1.bf16.msra.mxu0 0
        %746 = vmatprep.mubr.bf16.mxu0 0
        %747 = vmatmul.mubr.bf16.gmra.mrb[0].mxu0 %v587
        %v748 = vpop.f32.mrb[0].mxu0
        %v749 = vadd.f32 %v701, %v748
        %v750 = vpop.f32.mrb[0].mxu0
        %v751 = vpop.f32.mrb[0].mxu0
        %v752 = vadd.f32 %v698, %v751
        %v753 = vpop.f32.mrb[0].mxu0
        %754 = vdwg.mxu0
        %vm757 = vcmask 1046528
        %v758 = vrot.slane %v687, 1
        %v759 = vrot.slane %v690, 1
        %v760 = vsel %vm757, %v758, %v759
        %v763 = vsel %vm757, %v759, 0.0
        %v764 = vadd.f32 %v749, %v760
        %v765 = vadd.f32 %v752, %v763
        %v766 = vld [vmem:[%s3] sm:$0x1]
        %v768 = vlaneseq
        %v769 = vshrl.u32 %v768, 7
        %v770 = vsub.s32 0, %v769
        %v771 = vrot.slane %v766, %v770
        %v773 = vmul.f32 %v764, %v771
        %v774 = vmul.f32 %v765, %v771
        %v775 = vld [vmem:[%s4] sm:$0x1]
        %v777 = vlaneseq
        %v778 = vshrl.u32 %v777, 7
        %v779 = vsub.s32 0, %v778
        %v780 = vrot.slane %v775, %v779
        %v782 = vadd.f32 %v773, %v780
        %v783 = vadd.f32 %v774, %v780
        %v784 = vmax.f32 %v782, 0.0
        %v785 = vmax.f32 %v783, 0.0
        %v786 = vpack.c.bf16 %v785, %v784
        %v787 = vld [vmem:[%s5] sm:$0xf]
        %v788 = vld [vmem:[%s5 + $0x4] sm:$0xf]
        %v789 = vld [vmem:[%s5 + $0x8] sm:$0xf]
        %v790 = vld [vmem:[%s5 + $0xc] sm:$0xf]
        %v791 = vld [vmem:[%s5 + $0x10] sm:$0xf]
        %v792 = vld [vmem:[%s5 + $0x14] sm:$0xf]
        %v793 = vld [vmem:[%s5 + $0x18] sm:$0xf]
        %v794 = vld [vmem:[%s5 + $0x1c] sm:$0xf]
        %v803 = vunpack.c.l.b16 %v787
        %v804 = vunpack.c.l.b16 %v788
        %v805 = vunpack.c.l.b16 %v789
        %v806 = vunpack.c.l.b16 %v790
        %v807 = vunpack.c.l.b16 %v791
        %v808 = vunpack.c.l.b16 %v792
        %v809 = vunpack.c.l.b16 %v793
        %v810 = vunpack.c.l.b16 %v794
        %v811 = vpack.c.b16 %v804, %v803
        %v812 = vpack.c.b16 %v806, %v805
        %v813 = vpack.c.b16 %v808, %v807
        %v814 = vpack.c.b16 %v810, %v809
        %vm819 = vcmask 523264
        %v821 = vsel %vm819, %v786, 0
        %823 = vmatprep.subr.bf16.mxu0 0
        %824 = vmatpush1.bf16.msra.mxu0 %v811
        %825 = vmatprep.subr.bf16.mxu0 0
        %826 = vmatpush1.bf16.msra.mxu0 %v812
        %827 = vmatprep.subr.bf16.mxu0 0
        %828 = vmatpush1.bf16.msra.mxu0 %v813
        %829 = vmatprep.subr.bf16.mxu0 0
        %830 = vmatpush1.bf16.msra.mxu0 %v814
        %831 = vmatprep.subr.bf16.mxu0 0
        %832 = vmatpush1.bf16.msra.mxu0 0
        %833 = vmatprep.subr.bf16.mxu0 0
        %834 = vmatpush1.bf16.msra.mxu0 0
        %835 = vmatprep.subr.bf16.mxu0 0
        %836 = vmatpush1.bf16.msra.mxu0 0
        %837 = vmatprep.subr.bf16.mxu0 0
        %838 = vmatpush1.bf16.msra.mxu0 0
        %839 = vmatprep.subr.bf16.mxu0 0
        %840 = vmatpush1.bf16.msra.mxu0 0
        %841 = vmatprep.subr.bf16.mxu0 0
        %842 = vmatpush1.bf16.msra.mxu0 0
        %843 = vmatprep.subr.bf16.mxu0 0
        %844 = vmatpush1.bf16.msra.mxu0 0
        %845 = vmatprep.subr.bf16.mxu0 0
        %846 = vmatpush1.bf16.msra.mxu0 0
        %847 = vmatprep.subr.bf16.mxu0 0
        %848 = vmatpush1.bf16.msra.mxu0 0
        %849 = vmatprep.subr.bf16.mxu0 0
        %850 = vmatpush1.bf16.msra.mxu0 0
        %851 = vmatprep.subr.bf16.mxu0 0
        %852 = vmatpush1.bf16.msra.mxu0 0
        %853 = vmatprep.subr.bf16.mxu0 0
        %854 = vmatpush1.bf16.msra.mxu0 0
        %855 = vmatprep.mubr.bf16.mxu0 0
        %856 = vmatmul.mubr.bf16.gmra.mrb[0].mxu0 %v821
        %v857 = vpop.f32.mrb[0].mxu0
        %v858 = vadd.f32 0.0, %v857
        %v859 = vpop.f32.mrb[0].mxu0
        %v860 = vpop.f32.mrb[0].mxu0
        %v861 = vadd.f32 0.0, %v860
        %v862 = vpop.f32.mrb[0].mxu0
        %863 = vdwg.mxu0
        %s864 = scalar_lea.vmem %s5, 32
        %v865 = vld [vmem:[%s864] sm:$0xf]
        %v866 = vld [vmem:[%s864 + $0x4] sm:$0xf]
        %v867 = vld [vmem:[%s864 + $0x8] sm:$0xf]
        %v868 = vld [vmem:[%s864 + $0xc] sm:$0xf]
        %v869 = vld [vmem:[%s864 + $0x10] sm:$0xf]
        %v870 = vld [vmem:[%s864 + $0x14] sm:$0xf]
        %v871 = vld [vmem:[%s864 + $0x18] sm:$0xf]
        %v872 = vld [vmem:[%s864 + $0x1c] sm:$0xf]
        %s873 = scalar_lea.vmem %s5, 64
        %v874 = vld [vmem:[%s873] sm:$0xf]
        %v875 = vld [vmem:[%s873 + $0x4] sm:$0xf]
        %v876 = vld [vmem:[%s873 + $0x8] sm:$0xf]
        %v877 = vld [vmem:[%s873 + $0xc] sm:$0xf]
        %v878 = vld [vmem:[%s873 + $0x10] sm:$0xf]
        %v879 = vld [vmem:[%s873 + $0x14] sm:$0xf]
        %v880 = vld [vmem:[%s873 + $0x18] sm:$0xf]
        %v881 = vld [vmem:[%s873 + $0x1c] sm:$0xf]
        %v890 = vunpack.c.l.b16 %v874
        %v891 = vunpack.c.l.b16 %v875
        %v892 = vunpack.c.l.b16 %v876
        %v893 = vunpack.c.l.b16 %v877
        %v894 = vunpack.c.l.b16 %v878
        %v895 = vunpack.c.l.b16 %v879
        %v896 = vunpack.c.l.b16 %v880
        %v897 = vunpack.c.l.b16 %v881
        %v898 = vpack.c.b16 %v891, %v890
        %v899 = vpack.c.b16 %v893, %v892
        %v900 = vpack.c.b16 %v895, %v894
        %v901 = vpack.c.b16 %v897, %v896
        %906 = vmatprep.subr.bf16.mxu0 0
        %907 = vmatpush1.bf16.msra.mxu0 %v898
        %908 = vmatprep.subr.bf16.mxu0 0
        %909 = vmatpush1.bf16.msra.mxu0 %v899
        %910 = vmatprep.subr.bf16.mxu0 0
        %911 = vmatpush1.bf16.msra.mxu0 %v900
        %912 = vmatprep.subr.bf16.mxu0 0
        %913 = vmatpush1.bf16.msra.mxu0 %v901
        %914 = vmatprep.subr.bf16.mxu0 0
        %915 = vmatpush1.bf16.msra.mxu0 0
        %916 = vmatprep.subr.bf16.mxu0 0
        %917 = vmatpush1.bf16.msra.mxu0 0
        %918 = vmatprep.subr.bf16.mxu0 0
        %919 = vmatpush1.bf16.msra.mxu0 0
        %920 = vmatprep.subr.bf16.mxu0 0
        %921 = vmatpush1.bf16.msra.mxu0 0
        %922 = vmatprep.subr.bf16.mxu0 0
        %923 = vmatpush1.bf16.msra.mxu0 0
        %924 = vmatprep.subr.bf16.mxu0 0
        %925 = vmatpush1.bf16.msra.mxu0 0
        %926 = vmatprep.subr.bf16.mxu0 0
        %927 = vmatpush1.bf16.msra.mxu0 0
        %928 = vmatprep.subr.bf16.mxu0 0
        %929 = vmatpush1.bf16.msra.mxu0 0
        %930 = vmatprep.subr.bf16.mxu0 0
        %931 = vmatpush1.bf16.msra.mxu0 0
        %932 = vmatprep.subr.bf16.mxu0 0
        %933 = vmatpush1.bf16.msra.mxu0 0
        %934 = vmatprep.subr.bf16.mxu0 0
        %935 = vmatpush1.bf16.msra.mxu0 0
        %936 = vmatprep.subr.bf16.mxu0 0
        %937 = vmatpush1.bf16.msra.mxu0 0
        %938 = vmatprep.mubr.bf16.mxu0 0
        %939 = vmatmul.mubr.bf16.gmra.mrb[0].mxu0 %v821
        %v940 = vpop.f32.mrb[0].mxu0
        %v941 = vadd.f32 0.0, %v940
        %v942 = vpop.f32.mrb[0].mxu0
        %v943 = vpop.f32.mrb[0].mxu0
        %v944 = vadd.f32 0.0, %v943
        %v945 = vpop.f32.mrb[0].mxu0
        %946 = vdwg.mxu0
        %v949 = vrot.slane %v858, 7
        %v950 = vrot.slane %v861, 7
        %v951 = vsel %vm695, %v949, %v950
        %v954 = vsel %vm695, 0.0, %v949
        %v963 = vunpack.c.l.b16 %v865
        %v964 = vunpack.c.l.b16 %v866
        %v965 = vunpack.c.l.b16 %v867
        %v966 = vunpack.c.l.b16 %v868
        %v967 = vunpack.c.l.b16 %v869
        %v968 = vunpack.c.l.b16 %v870
        %v969 = vunpack.c.l.b16 %v871
        %v970 = vunpack.c.l.b16 %v872
        %v971 = vpack.c.b16 %v964, %v963
        %v972 = vpack.c.b16 %v966, %v965
        %v973 = vpack.c.b16 %v968, %v967
        %v974 = vpack.c.b16 %v970, %v969
        %979 = vmatprep.subr.bf16.mxu0 0
        %980 = vmatpush1.bf16.msra.mxu0 %v971
        %981 = vmatprep.subr.bf16.mxu0 0
        %982 = vmatpush1.bf16.msra.mxu0 %v972
        %983 = vmatprep.subr.bf16.mxu0 0
        %984 = vmatpush1.bf16.msra.mxu0 %v973
        %985 = vmatprep.subr.bf16.mxu0 0
        %986 = vmatpush1.bf16.msra.mxu0 %v974
        %987 = vmatprep.subr.bf16.mxu0 0
        %988 = vmatpush1.bf16.msra.mxu0 0
        %989 = vmatprep.subr.bf16.mxu0 0
        %990 = vmatpush1.bf16.msra.mxu0 0
        %991 = vmatprep.subr.bf16.mxu0 0
        %992 = vmatpush1.bf16.msra.mxu0 0
        %993 = vmatprep.subr.bf16.mxu0 0
        %994 = vmatpush1.bf16.msra.mxu0 0
        %995 = vmatprep.subr.bf16.mxu0 0
        %996 = vmatpush1.bf16.msra.mxu0 0
        %997 = vmatprep.subr.bf16.mxu0 0
        %998 = vmatpush1.bf16.msra.mxu0 0
        %999 = vmatprep.subr.bf16.mxu0 0
        %1000 = vmatpush1.bf16.msra.mxu0 0
        %1001 = vmatprep.subr.bf16.mxu0 0
        %1002 = vmatpush1.bf16.msra.mxu0 0
        %1003 = vmatprep.subr.bf16.mxu0 0
        %1004 = vmatpush1.bf16.msra.mxu0 0
        %1005 = vmatprep.subr.bf16.mxu0 0
        %1006 = vmatpush1.bf16.msra.mxu0 0
        %1007 = vmatprep.subr.bf16.mxu0 0
        %1008 = vmatpush1.bf16.msra.mxu0 0
        %1009 = vmatprep.subr.bf16.mxu0 0
        %1010 = vmatpush1.bf16.msra.mxu0 0
        %1011 = vmatprep.mubr.bf16.mxu0 0
        %1012 = vmatmul.mubr.bf16.gmra.mrb[0].mxu0 %v821
        %v1013 = vpop.f32.mrb[0].mxu0
        %v1014 = vadd.f32 %v954, %v1013
        %v1015 = vpop.f32.mrb[0].mxu0
        %v1016 = vpop.f32.mrb[0].mxu0
        %v1017 = vadd.f32 %v951, %v1016
        %v1018 = vpop.f32.mrb[0].mxu0
        %1019 = vdwg.mxu0
        %v1022 = vrot.slane %v941, 1
        %v1023 = vrot.slane %v944, 1
        %v1024 = vsel %vm757, %v1022, %v1023
        %v1027 = vsel %vm757, %v1023, 0.0
        %v1028 = vadd.f32 %v1014, %v1024
        %v1029 = vadd.f32 %v1017, %v1027
        %v1030 = vld [vmem:[%s6] sm:$0x1]
        %v1032 = vlaneseq
        %v1033 = vshrl.u32 %v1032, 7
        %v1034 = vsub.s32 0, %v1033
        %v1035 = vrot.slane %v1030, %v1034
        %v1037 = vmul.f32 %v1028, %v1035
        %v1038 = vmul.f32 %v1029, %v1035
        %v1039 = vld [vmem:[%s7] sm:$0x1]
        %v1041 = vlaneseq
        %v1042 = vshrl.u32 %v1041, 7
        %v1043 = vsub.s32 0, %v1042
        %v1044 = vrot.slane %v1039, %v1043
        %v1046 = vadd.f32 %v1037, %v1044
        %v1047 = vadd.f32 %v1038, %v1044
        %v1048 = vmax.f32 %v1046, 0.0
        %v1049 = vmax.f32 %v1047, 0.0
        %v1050 = vpack.c.bf16 %v1049, %v1048
        %v1051 = vld [vmem:[%s8] sm:$0xf]
        %v1052 = vld [vmem:[%s8 + $0x4] sm:$0xf]
        %v1053 = vld [vmem:[%s8 + $0x8] sm:$0xf]
        %v1054 = vld [vmem:[%s8 + $0xc] sm:$0xf]
        %v1055 = vld [vmem:[%s8 + $0x10] sm:$0xf]
        %v1056 = vld [vmem:[%s8 + $0x14] sm:$0xf]
        %v1057 = vld [vmem:[%s8 + $0x18] sm:$0xf]
        %v1058 = vld [vmem:[%s8 + $0x1c] sm:$0xf]
        %v1067 = vunpack.c.l.b16 %v1051
        %v1068 = vunpack.c.l.b16 %v1052
        %v1069 = vunpack.c.l.b16 %v1053
        %v1070 = vunpack.c.l.b16 %v1054
        %v1071 = vunpack.c.l.b16 %v1055
        %v1072 = vunpack.c.l.b16 %v1056
        %v1073 = vunpack.c.l.b16 %v1057
        %v1074 = vunpack.c.l.b16 %v1058
        %v1075 = vpack.c.b16 %v1068, %v1067
        %v1076 = vpack.c.b16 %v1070, %v1069
        %v1077 = vpack.c.b16 %v1072, %v1071
        %v1078 = vpack.c.b16 %v1074, %v1073
        %v1084 = vsel %vm819, %v1050, 0
        %1086 = vmatprep.subr.bf16.mxu0 0
        %1087 = vmatpush1.bf16.msra.mxu0 %v1075
        %1088 = vmatprep.subr.bf16.mxu0 0
        %1089 = vmatpush1.bf16.msra.mxu0 %v1076
        %1090 = vmatprep.subr.bf16.mxu0 0
        %1091 = vmatpush1.bf16.msra.mxu0 %v1077
        %1092 = vmatprep.subr.bf16.mxu0 0
        %1093 = vmatpush1.bf16.msra.mxu0 %v1078
        %1094 = vmatprep.subr.bf16.mxu0 0
        %1095 = vmatpush1.bf16.msra.mxu0 0
        %1096 = vmatprep.subr.bf16.mxu0 0
        %1097 = vmatpush1.bf16.msra.mxu0 0
        %1098 = vmatprep.subr.bf16.mxu0 0
        %1099 = vmatpush1.bf16.msra.mxu0 0
        %1100 = vmatprep.subr.bf16.mxu0 0
        %1101 = vmatpush1.bf16.msra.mxu0 0
        %1102 = vmatprep.subr.bf16.mxu0 0
        %1103 = vmatpush1.bf16.msra.mxu0 0
        %1104 = vmatprep.subr.bf16.mxu0 0
        %1105 = vmatpush1.bf16.msra.mxu0 0
        %1106 = vmatprep.subr.bf16.mxu0 0
        %1107 = vmatpush1.bf16.msra.mxu0 0
        %1108 = vmatprep.subr.bf16.mxu0 0
        %1109 = vmatpush1.bf16.msra.mxu0 0
        %1110 = vmatprep.subr.bf16.mxu0 0
        %1111 = vmatpush1.bf16.msra.mxu0 0
        %1112 = vmatprep.subr.bf16.mxu0 0
        %1113 = vmatpush1.bf16.msra.mxu0 0
        %1114 = vmatprep.subr.bf16.mxu0 0
        %1115 = vmatpush1.bf16.msra.mxu0 0
        %1116 = vmatprep.subr.bf16.mxu0 0
        %1117 = vmatpush1.bf16.msra.mxu0 0
        %1118 = vmatprep.mubr.bf16.mxu0 0
        %1119 = vmatmul.mubr.bf16.gmra.mrb[0].mxu0 %v1084
        %v1120 = vpop.f32.mrb[0].mxu0
        %v1121 = vadd.f32 0.0, %v1120
        %v1122 = vpop.f32.mrb[0].mxu0
        %v1123 = vpop.f32.mrb[0].mxu0
        %v1124 = vadd.f32 0.0, %v1123
        %v1125 = vpop.f32.mrb[0].mxu0
        %1126 = vdwg.mxu0
        %s1127 = scalar_lea.vmem %s8, 32
        %v1128 = vld [vmem:[%s1127] sm:$0xf]
        %v1129 = vld [vmem:[%s1127 + $0x4] sm:$0xf]
        %v1130 = vld [vmem:[%s1127 + $0x8] sm:$0xf]
        %v1131 = vld [vmem:[%s1127 + $0xc] sm:$0xf]
        %v1132 = vld [vmem:[%s1127 + $0x10] sm:$0xf]
        %v1133 = vld [vmem:[%s1127 + $0x14] sm:$0xf]
        %v1134 = vld [vmem:[%s1127 + $0x18] sm:$0xf]
        %v1135 = vld [vmem:[%s1127 + $0x1c] sm:$0xf]
        %s1136 = scalar_lea.vmem %s8, 64
        %v1137 = vld [vmem:[%s1136] sm:$0xf]
        %v1138 = vld [vmem:[%s1136 + $0x4] sm:$0xf]
        %v1139 = vld [vmem:[%s1136 + $0x8] sm:$0xf]
        %v1140 = vld [vmem:[%s1136 + $0xc] sm:$0xf]
        %v1141 = vld [vmem:[%s1136 + $0x10] sm:$0xf]
        %v1142 = vld [vmem:[%s1136 + $0x14] sm:$0xf]
        %v1143 = vld [vmem:[%s1136 + $0x18] sm:$0xf]
        %v1144 = vld [vmem:[%s1136 + $0x1c] sm:$0xf]
        %v1153 = vunpack.c.l.b16 %v1137
        %v1154 = vunpack.c.l.b16 %v1138
        %v1155 = vunpack.c.l.b16 %v1139
        %v1156 = vunpack.c.l.b16 %v1140
        %v1157 = vunpack.c.l.b16 %v1141
        %v1158 = vunpack.c.l.b16 %v1142
        %v1159 = vunpack.c.l.b16 %v1143
        %v1160 = vunpack.c.l.b16 %v1144
        %v1161 = vpack.c.b16 %v1154, %v1153
        %v1162 = vpack.c.b16 %v1156, %v1155
        %v1163 = vpack.c.b16 %v1158, %v1157
        %v1164 = vpack.c.b16 %v1160, %v1159
        %1169 = vmatprep.subr.bf16.mxu0 0
        %1170 = vmatpush1.bf16.msra.mxu0 %v1161
        %1171 = vmatprep.subr.bf16.mxu0 0
        %1172 = vmatpush1.bf16.msra.mxu0 %v1162
        %1173 = vmatprep.subr.bf16.mxu0 0
        %1174 = vmatpush1.bf16.msra.mxu0 %v1163
        %1175 = vmatprep.subr.bf16.mxu0 0
        %1176 = vmatpush1.bf16.msra.mxu0 %v1164
        %1177 = vmatprep.subr.bf16.mxu0 0
        %1178 = vmatpush1.bf16.msra.mxu0 0
        %1179 = vmatprep.subr.bf16.mxu0 0
        %1180 = vmatpush1.bf16.msra.mxu0 0
        %1181 = vmatprep.subr.bf16.mxu0 0
        %1182 = vmatpush1.bf16.msra.mxu0 0
        %1183 = vmatprep.subr.bf16.mxu0 0
        %1184 = vmatpush1.bf16.msra.mxu0 0
        %1185 = vmatprep.subr.bf16.mxu0 0
        %1186 = vmatpush1.bf16.msra.mxu0 0
        %1187 = vmatprep.subr.bf16.mxu0 0
        %1188 = vmatpush1.bf16.msra.mxu0 0
        %1189 = vmatprep.subr.bf16.mxu0 0
        %1190 = vmatpush1.bf16.msra.mxu0 0
        %1191 = vmatprep.subr.bf16.mxu0 0
        %1192 = vmatpush1.bf16.msra.mxu0 0
        %1193 = vmatprep.subr.bf16.mxu0 0
        %1194 = vmatpush1.bf16.msra.mxu0 0
        %1195 = vmatprep.subr.bf16.mxu0 0
        %1196 = vmatpush1.bf16.msra.mxu0 0
        %1197 = vmatprep.subr.bf16.mxu0 0
        %1198 = vmatpush1.bf16.msra.mxu0 0
        %1199 = vmatprep.subr.bf16.mxu0 0
        %1200 = vmatpush1.bf16.msra.mxu0 0
        %1201 = vmatprep.mubr.bf16.mxu0 0
        %1202 = vmatmul.mubr.bf16.gmra.mrb[0].mxu0 %v1084
        %v1203 = vpop.f32.mrb[0].mxu0
        %v1204 = vadd.f32 0.0, %v1203
        %v1205 = vpop.f32.mrb[0].mxu0
        %v1206 = vpop.f32.mrb[0].mxu0
        %v1207 = vadd.f32 0.0, %v1206
        %v1208 = vpop.f32.mrb[0].mxu0
        %1209 = vdwg.mxu0
        %v1212 = vrot.slane %v1121, 7
        %v1213 = vrot.slane %v1124, 7
        %v1214 = vsel %vm695, %v1212, %v1213
        %v1217 = vsel %vm695, 0.0, %v1212
        %v1226 = vunpack.c.l.b16 %v1128
        %v1227 = vunpack.c.l.b16 %v1129
        %v1228 = vunpack.c.l.b16 %v1130
        %v1229 = vunpack.c.l.b16 %v1131
        %v1230 = vunpack.c.l.b16 %v1132
        %v1231 = vunpack.c.l.b16 %v1133
        %v1232 = vunpack.c.l.b16 %v1134
        %v1233 = vunpack.c.l.b16 %v1135
        %v1234 = vpack.c.b16 %v1227, %v1226
        %v1235 = vpack.c.b16 %v1229, %v1228
        %v1236 = vpack.c.b16 %v1231, %v1230
        %v1237 = vpack.c.b16 %v1233, %v1232
        %1242 = vmatprep.subr.bf16.mxu0 0
        %1243 = vmatpush1.bf16.msra.mxu0 %v1234
        %1244 = vmatprep.subr.bf16.mxu0 0
        %1245 = vmatpush1.bf16.msra.mxu0 %v1235
        %1246 = vmatprep.subr.bf16.mxu0 0
        %1247 = vmatpush1.bf16.msra.mxu0 %v1236
        %1248 = vmatprep.subr.bf16.mxu0 0
        %1249 = vmatpush1.bf16.msra.mxu0 %v1237
        %1250 = vmatprep.subr.bf16.mxu0 0
        %1251 = vmatpush1.bf16.msra.mxu0 0
        %1252 = vmatprep.subr.bf16.mxu0 0
        %1253 = vmatpush1.bf16.msra.mxu0 0
        %1254 = vmatprep.subr.bf16.mxu0 0
        %1255 = vmatpush1.bf16.msra.mxu0 0
        %1256 = vmatprep.subr.bf16.mxu0 0
        %1257 = vmatpush1.bf16.msra.mxu0 0
        %1258 = vmatprep.subr.bf16.mxu0 0
        %1259 = vmatpush1.bf16.msra.mxu0 0
        %1260 = vmatprep.subr.bf16.mxu0 0
        %1261 = vmatpush1.bf16.msra.mxu0 0
        %1262 = vmatprep.subr.bf16.mxu0 0
        %1263 = vmatpush1.bf16.msra.mxu0 0
        %1264 = vmatprep.subr.bf16.mxu0 0
        %1265 = vmatpush1.bf16.msra.mxu0 0
        %1266 = vmatprep.subr.bf16.mxu0 0
        %1267 = vmatpush1.bf16.msra.mxu0 0
        %1268 = vmatprep.subr.bf16.mxu0 0
        %1269 = vmatpush1.bf16.msra.mxu0 0
        %1270 = vmatprep.subr.bf16.mxu0 0
        %1271 = vmatpush1.bf16.msra.mxu0 0
        %1272 = vmatprep.subr.bf16.mxu0 0
        %1273 = vmatpush1.bf16.msra.mxu0 0
        %1274 = vmatprep.mubr.bf16.mxu0 0
        %1275 = vmatmul.mubr.bf16.gmra.mrb[0].mxu0 %v1084
        %v1276 = vpop.f32.mrb[0].mxu0
        %v1277 = vadd.f32 %v1217, %v1276
        %v1278 = vpop.f32.mrb[0].mxu0
        %v1279 = vpop.f32.mrb[0].mxu0
        %v1280 = vadd.f32 %v1214, %v1279
        %v1281 = vpop.f32.mrb[0].mxu0
        %1282 = vdwg.mxu0
        %v1285 = vrot.slane %v1204, 1
        %v1286 = vrot.slane %v1207, 1
        %v1287 = vsel %vm757, %v1285, %v1286
        %v1290 = vsel %vm757, %v1286, 0.0
        %v1291 = vadd.f32 %v1277, %v1287
        %v1292 = vadd.f32 %v1280, %v1290
        %v1293 = vld [vmem:[%s9] sm:$0x1]
        %v1295 = vlaneseq
        %v1296 = vshrl.u32 %v1295, 7
        %v1297 = vsub.s32 0, %v1296
        %v1298 = vrot.slane %v1293, %v1297
        %v1300 = vmul.f32 %v1291, %v1298
        %v1301 = vmul.f32 %v1292, %v1298
        %v1302 = vld [vmem:[%s10] sm:$0x1]
        %v1304 = vlaneseq
        %v1305 = vshrl.u32 %v1304, 7
        %v1306 = vsub.s32 0, %v1305
        %v1307 = vrot.slane %v1302, %v1306
        %v1309 = vadd.f32 %v1300, %v1307
        %v1310 = vadd.f32 %v1301, %v1307
        %v1311 = vadd.f32 %v565, %v1309
        %v1312 = vadd.f32 %v566, %v1310
        %v1313 = vsel %vm585, %v1311, 0.0
        %v1314 = vsel %vm585, %v1312, 0.0
        %v1315 = vadd.f32 %v1313, %v1314
        %v1316 = vrot.slane %v1315, 4
        %v1317 = vadd.f32 %v1315, %v1316
        %v1318 = vrot.slane %v1317, 2
        %v1319 = vadd.f32 %v1317, %v1318
        %v1320 = vrot.slane %v1319, 1
        %v1321 = vadd.f32 %v1319, %v1320
        %v1322 = vrcp.pop 16.0
        %v1323 = vmul.f32 %v1321, %v1322
        %v1324 = vsub.f32 %v1311, %v1323
        %v1325 = vsub.f32 %v1312, %v1323
        %v1326 = vmul.f32 %v1324, %v1324
        %v1327 = vmul.f32 %v1325, %v1325
        %v1328 = vsel %vm585, %v1326, 0.0
        %v1329 = vsel %vm585, %v1327, 0.0
        %v1330 = vadd.f32 %v1328, %v1329
        %v1331 = vrot.slane %v1330, 4
        %v1332 = vadd.f32 %v1330, %v1331
        %v1333 = vrot.slane %v1332, 2
        %v1334 = vadd.f32 %v1332, %v1333
        %v1335 = vrot.slane %v1334, 1
        %v1336 = vadd.f32 %v1334, %v1335
        %v1337 = vmul.f32 %v1336, %v1322
        %v1338 = vadd.f32 %v1337, 1e-05
        %v1339 = vrsqrt.pop %v1338
        %v1340 = vmul.f32 %v1324, %v1339
        %v1341 = vmul.f32 %v1325, %v1339
        %v1342 = vmax.f32 %v1340, 0.0
        %v1343 = vmax.f32 %v1341, 0.0
        %1344 = vst.msk [vmem:[#allocation2] sm:$0xff] %vm585, %v1342
        %1345 = vst.msk [vmem:[#allocation2 + $0x8] sm:$0xff] %vm585, %v1343
        %v1346 = vld [vmem:[#allocation2] ss:$2 sm:$0xff]
        %s1347 = scalar_lea.vmem [#allocation2], 1
        %v1348 = vld [vmem:[%s1347] ss:$2 sm:$0xff]
        %v1349 = vmax.f32 %v1346, %v1348
        %v1350 = vld [vmem:[%s11] sm:$0x1]
        %v1352 = vlaneseq
        %v1353 = vshrl.u32 %v1352, 7
        %v1354 = vsub.s32 0, %v1353
        %v1355 = vrot.slane %v1350, %v1354
        %v1357 = vmul.f32 %v1349, %v1355
        %v1358 = vld [vmem:[%s12] sm:$0x1]
        %v1360 = vlaneseq
        %v1361 = vshrl.u32 %v1360, 7
        %v1362 = vsub.s32 0, %v1361
        %v1363 = vrot.slane %v1358, %v1362
        %v1365 = vadd.f32 %v1357, %v1363
        %v1366 = vpack.c.bf16 %v1365, %v1365
        %v1367 = vpack.c.bf16 %v567, %v567
        %v1368 = vld [vmem:[%s13] sm:$0xf]
        %v1369 = vld [vmem:[%s13 + $0x4] sm:$0xf]
        %v1370 = vld [vmem:[%s13 + $0x8] sm:$0xf]
        %v1371 = vld [vmem:[%s13 + $0xc] sm:$0xf]
        %v1376 = vunpack.c.l.b16 %v1368
        %v1377 = vunpack.c.l.b16 %v1369
        %v1378 = vunpack.c.l.b16 %v1370
        %v1379 = vunpack.c.l.b16 %v1371
        %v1380 = vpack.c.b16 %v1377, %v1376
        %v1381 = vpack.c.b16 %v1379, %v1378
        %v1385 = vsel %vm585, %v1366, 0
        %1387 = vmatprep.subr.bf16.mxu0 0
        %1388 = vmatpush1.bf16.msra.mxu0 %v1380
        %1389 = vmatprep.subr.bf16.mxu0 0
        %1390 = vmatpush1.bf16.msra.mxu0 %v1381
        %1391 = vmatprep.subr.bf16.mxu0 0
        %1392 = vmatpush1.bf16.msra.mxu0 0
        %1393 = vmatprep.subr.bf16.mxu0 0
        %1394 = vmatpush1.bf16.msra.mxu0 0
        %1395 = vmatprep.subr.bf16.mxu0 0
        %1396 = vmatpush1.bf16.msra.mxu0 0
        %1397 = vmatprep.subr.bf16.mxu0 0
        %1398 = vmatpush1.bf16.msra.mxu0 0
        %1399 = vmatprep.subr.bf16.mxu0 0
        %1400 = vmatpush1.bf16.msra.mxu0 0
        %1401 = vmatprep.subr.bf16.mxu0 0
        %1402 = vmatpush1.bf16.msra.mxu0 0
        %1403 = vmatprep.subr.bf16.mxu0 0
        %1404 = vmatpush1.bf16.msra.mxu0 0
        %1405 = vmatprep.subr.bf16.mxu0 0
        %1406 = vmatpush1.bf16.msra.mxu0 0
        %1407 = vmatprep.subr.bf16.mxu0 0
        %1408 = vmatpush1.bf16.msra.mxu0 0
        %1409 = vmatprep.subr.bf16.mxu0 0
        %1410 = vmatpush1.bf16.msra.mxu0 0
        %1411 = vmatprep.subr.bf16.mxu0 0
        %1412 = vmatpush1.bf16.msra.mxu0 0
        %1413 = vmatprep.subr.bf16.mxu0 0
        %1414 = vmatpush1.bf16.msra.mxu0 0
        %1415 = vmatprep.subr.bf16.mxu0 0
        %1416 = vmatpush1.bf16.msra.mxu0 0
        %1417 = vmatprep.subr.bf16.mxu0 0
        %1418 = vmatpush1.bf16.msra.mxu0 0
        %1419 = vmatprep.mubr.bf16.mxu0 0
        %1420 = vmatmul.mubr.bf16.gmra.mrb[0].mxu0 %v1385
        %v1421 = vpop.f32.mrb[0].mxu0
        %v1422 = vadd.f32 0.0, %v1421
        %v1423 = vpop.f32.mrb[0].mxu0
        %v1424 = vpop.f32.mrb[0].mxu0
        %v1425 = vpop.f32.mrb[0].mxu0
        %1426 = vdwg.mxu0
        %v1427 = vld [vmem:[%s14] sm:$0xf]
        %v1428 = vld [vmem:[%s14 + $0x4] sm:$0xf]
        %v1429 = vld [vmem:[%s14 + $0x8] sm:$0xf]
        %v1430 = vld [vmem:[%s14 + $0xc] sm:$0xf]
        %v1435 = vunpack.c.l.b16 %v1427
        %v1436 = vunpack.c.l.b16 %v1428
        %v1437 = vunpack.c.l.b16 %v1429
        %v1438 = vunpack.c.l.b16 %v1430
        %v1439 = vpack.c.b16 %v1436, %v1435
        %v1440 = vpack.c.b16 %v1438, %v1437
        %v1444 = vsel %vm585, %v1367, 0
        %1446 = vmatprep.subr.bf16.mxu0 0
        %1447 = vmatpush1.bf16.msra.mxu0 %v1439
        %1448 = vmatprep.subr.bf16.mxu0 0
        %1449 = vmatpush1.bf16.msra.mxu0 %v1440
        %1450 = vmatprep.subr.bf16.mxu0 0
        %1451 = vmatpush1.bf16.msra.mxu0 0
        %1452 = vmatprep.subr.bf16.mxu0 0
        %1453 = vmatpush1.bf16.msra.mxu0 0
        %1454 = vmatprep.subr.bf16.mxu0 0
        %1455 = vmatpush1.bf16.msra.mxu0 0
        %1456 = vmatprep.subr.bf16.mxu0 0
        %1457 = vmatpush1.bf16.msra.mxu0 0
        %1458 = vmatprep.subr.bf16.mxu0 0
        %1459 = vmatpush1.bf16.msra.mxu0 0
        %1460 = vmatprep.subr.bf16.mxu0 0
        %1461 = vmatpush1.bf16.msra.mxu0 0
        %1462 = vmatprep.subr.bf16.mxu0 0
        %1463 = vmatpush1.bf16.msra.mxu0 0
        %1464 = vmatprep.subr.bf16.mxu0 0
        %1465 = vmatpush1.bf16.msra.mxu0 0
        %1466 = vmatprep.subr.bf16.mxu0 0
        %1467 = vmatpush1.bf16.msra.mxu0 0
        %1468 = vmatprep.subr.bf16.mxu0 0
        %1469 = vmatpush1.bf16.msra.mxu0 0
        %1470 = vmatprep.subr.bf16.mxu0 0
        %1471 = vmatpush1.bf16.msra.mxu0 0
        %1472 = vmatprep.subr.bf16.mxu0 0
        %1473 = vmatpush1.bf16.msra.mxu0 0
        %1474 = vmatprep.subr.bf16.mxu0 0
        %1475 = vmatpush1.bf16.msra.mxu0 0
        %1476 = vmatprep.subr.bf16.mxu0 0
        %1477 = vmatpush1.bf16.msra.mxu0 0
        %1478 = vmatprep.mubr.bf16.mxu0 0
        %1479 = vmatmul.mubr.bf16.gmra.mrb[0].mxu0 %v1444
        %v1480 = vpop.f32.mrb[0].mxu0
        %v1481 = vadd.f32 0.0, %v1480
        %v1482 = vpop.f32.mrb[0].mxu0
        %v1483 = vpop.f32.mrb[0].mxu0
        %v1484 = vpop.f32.mrb[0].mxu0
        %1485 = vdwg.mxu0
        %v1486 = vld [vmem:[%s15] sm:$0xf]
        %v1487 = vld [vmem:[%s15 + $0x4] sm:$0xf]
        %v1488 = vld [vmem:[%s15 + $0x8] sm:$0xf]
        %v1489 = vld [vmem:[%s15 + $0xc] sm:$0xf]
        %v1494 = vunpack.c.l.b16 %v1486
        %v1495 = vunpack.c.l.b16 %v1487
        %v1496 = vunpack.c.l.b16 %v1488
        %v1497 = vunpack.c.l.b16 %v1489
        %v1498 = vpack.c.b16 %v1495, %v1494
        %v1499 = vpack.c.b16 %v1497, %v1496
        %1502 = vmatprep.subr.bf16.mxu0 0
        %1503 = vmatpush1.bf16.msra.mxu0 %v1498
        %1504 = vmatprep.subr.bf16.mxu0 0
        %1505 = vmatpush1.bf16.msra.mxu0 %v1499
        %1506 = vmatprep.subr.bf16.mxu0 0
        %1507 = vmatpush1.bf16.msra.mxu0 0
        %1508 = vmatprep.subr.bf16.mxu0 0
        %1509 = vmatpush1.bf16.msra.mxu0 0
        %1510 = vmatprep.subr.bf16.mxu0 0
        %1511 = vmatpush1.bf16.msra.mxu0 0
        %1512 = vmatprep.subr.bf16.mxu0 0
        %1513 = vmatpush1.bf16.msra.mxu0 0
        %1514 = vmatprep.subr.bf16.mxu0 0
        %1515 = vmatpush1.bf16.msra.mxu0 0
        %1516 = vmatprep.subr.bf16.mxu0 0
        %1517 = vmatpush1.bf16.msra.mxu0 0
        %1518 = vmatprep.subr.bf16.mxu0 0
        %1519 = vmatpush1.bf16.msra.mxu0 0
        %1520 = vmatprep.subr.bf16.mxu0 0
        %1521 = vmatpush1.bf16.msra.mxu0 0
        %1522 = vmatprep.subr.bf16.mxu0 0
        %1523 = vmatpush1.bf16.msra.mxu0 0
        %1524 = vmatprep.subr.bf16.mxu0 0
        %1525 = vmatpush1.bf16.msra.mxu0 0
        %1526 = vmatprep.subr.bf16.mxu0 0
        %1527 = vmatpush1.bf16.msra.mxu0 0
        %1528 = vmatprep.subr.bf16.mxu0 0
        %1529 = vmatpush1.bf16.msra.mxu0 0
        %1530 = vmatprep.subr.bf16.mxu0 0
        %1531 = vmatpush1.bf16.msra.mxu0 0
        %1532 = vmatprep.subr.bf16.mxu0 0
        %1533 = vmatpush1.bf16.msra.mxu0 0
        %1534 = vmatprep.mubr.bf16.mxu0 0
        %1535 = vmatmul.mubr.bf16.gmra.mrb[0].mxu0 %v1444
        %v1536 = vpop.f32.mrb[0].mxu0
        %v1537 = vadd.f32 0.0, %v1536
        %v1538 = vpop.f32.mrb[0].mxu0
        %v1539 = vpop.f32.mrb[0].mxu0
        %v1540 = vpop.f32.mrb[0].mxu0
        %1541 = vdwg.mxu0
        %v1542 = vpack.c.bf16 %v1422, %v1422
        %v1543 = vpack.c.bf16 %v1481, %v1481
        %vm1544 = vcmask 64512
        %v1546 = vsel %vm1544, %v1542, 0
        %v1549 = vsel %vm1544, %v1543, 0
        %1551 = vmatprep.subr.bf16.mxu0 0
        %1552 = vmatpush1.bf16.xpose.msra.mxu0 %v1549
        %1553 = vmatprep.subr.bf16.mxu0 0
        %1554 = vmatpush1.bf16.xpose.msra.mxu0 0
        %1555 = vmatprep.subr.bf16.mxu0 0
        %1556 = vmatpush1.bf16.xpose.msra.mxu0 0
        %1557 = vmatprep.subr.bf16.mxu0 0
        %1558 = vmatpush1.bf16.xpose.msra.mxu0 0
        %1559 = vmatprep.subr.bf16.mxu0 0
        %1560 = vmatpush1.bf16.xpose.msra.mxu0 0
        %1561 = vmatprep.subr.bf16.mxu0 0
        %1562 = vmatpush1.bf16.xpose.msra.mxu0 0
        %1563 = vmatprep.subr.bf16.mxu0 0
        %1564 = vmatpush1.bf16.xpose.msra.mxu0 0
        %1565 = vmatprep.subr.bf16.mxu0 0
        %1566 = vmatpush1.bf16.xpose.msra.mxu0 0
        %1567 = vmatprep.subr.bf16.mxu0 0
        %1568 = vmatpush1.bf16.xpose.msra.mxu0 0
        %1569 = vmatprep.subr.bf16.mxu0 0
        %1570 = vmatpush1.bf16.xpose.msra.mxu0 0
        %1571 = vmatprep.subr.bf16.mxu0 0
        %1572 = vmatpush1.bf16.xpose.msra.mxu0 0
        %1573 = vmatprep.subr.bf16.mxu0 0
        %1574 = vmatpush1.bf16.xpose.msra.mxu0 0
        %1575 = vmatprep.subr.bf16.mxu0 0
        %1576 = vmatpush1.bf16.xpose.msra.mxu0 0
        %1577 = vmatprep.subr.bf16.mxu0 0
        %1578 = vmatpush1.bf16.xpose.msra.mxu0 0
        %1579 = vmatprep.subr.bf16.mxu0 0
        %1580 = vmatpush1.bf16.xpose.msra.mxu0 0
        %1581 = vmatprep.subr.bf16.mxu0 0
        %1582 = vmatpush1.bf16.xpose.msra.mxu0 0
        %1583 = vmatprep.mubr.bf16.mxu0 0
        %1584 = vmatmul.mubr.bf16.gmra.mrb[0].mxu0 %v1546
        %v1585 = vpop.f32.mrb[0].mxu0
        %v1586 = vadd.f32 0.0, %v1585
        %v1587 = vpop.f32.mrb[0].mxu0
        %v1588 = vpop.f32.mrb[0].mxu0
        %v1589 = vpop.f32.mrb[0].mxu0
        %1590 = vdwg.mxu0
        %v1591 = vmul.f32 %v1586, 0.17677669
        %v1592 = vsel %vm1544, %v1591, -inf
        %1593 = vmax.xlane.f32.xlu0 %v1592
        %v1594 = vpop.xlane.xlu0 %1593
        %v1595 = vsub.f32 %v1591, %v1594
        %v1596 = vmul.f32 %v1595, 1.442695
        %v1597 = vpow.pop %v1596
        %v1598 = vsel %vm1544, %v1597, 0.0
        %1599 = vadd.xlane.f32.xlu0 %v1598
        %v1600 = vpop.xlane.xlu0 %1599
        %v1601 = vrcp.pop %v1600
        %v1602 = vmul.f32 %v1597, %v1601
        %v1603 = vpack.c.bf16 %v1602, %v1602
        %v1604 = vpack.c.bf16 %v1537, %v1537
        %v1606 = vsel %vm1544, %v1603, 0
        %vm1608 = vcmask 1043456
        %v1610 = vsel %vm1608, %v1604, 0
        %1612 = vmatprep.subr.bf16.mxu0 0
        %1613 = vmatpush1.bf16.msra.mxu0 %v1610
        %1614 = vmatprep.subr.bf16.mxu0 0
        %1615 = vmatpush1.bf16.msra.mxu0 0
        %1616 = vmatprep.subr.bf16.mxu0 0
        %1617 = vmatpush1.bf16.msra.mxu0 0
        %1618 = vmatprep.subr.bf16.mxu0 0
        %1619 = vmatpush1.bf16.msra.mxu0 0
        %1620 = vmatprep.subr.bf16.mxu0 0
        %1621 = vmatpush1.bf16.msra.mxu0 0
        %1622 = vmatprep.subr.bf16.mxu0 0
        %1623 = vmatpush1.bf16.msra.mxu0 0
        %1624 = vmatprep.subr.bf16.mxu0 0
        %1625 = vmatpush1.bf16.msra.mxu0 0
        %1626 = vmatprep.subr.bf16.mxu0 0
        %1627 = vmatpush1.bf16.msra.mxu0 0
        %1628 = vmatprep.subr.bf16.mxu0 0
        %1629 = vmatpush1.bf16.msra.mxu0 0
        %1630 = vmatprep.subr.bf16.mxu0 0
        %1631 = vmatpush1.bf16.msra.mxu0 0
        %1632 = vmatprep.subr.bf16.mxu0 0
        %1633 = vmatpush1.bf16.msra.mxu0 0
        %1634 = vmatprep.subr.bf16.mxu0 0
        %1635 = vmatpush1.bf16.msra.mxu0 0
        %1636 = vmatprep.subr.bf16.mxu0 0
        %1637 = vmatpush1.bf16.msra.mxu0 0
        %1638 = vmatprep.subr.bf16.mxu0 0
        %1639 = vmatpush1.bf16.msra.mxu0 0
        %1640 = vmatprep.subr.bf16.mxu0 0
        %1641 = vmatpush1.bf16.msra.mxu0 0
        %1642 = vmatprep.subr.bf16.mxu0 0
        %1643 = vmatpush1.bf16.msra.mxu0 0
        %1644 = vmatprep.mubr.bf16.mxu0 0
        %1645 = vmatmul.mubr.bf16.gmra.mrb[0].mxu0 %v1606
        %v1646 = vpop.f32.mrb[0].mxu0
        %v1647 = vadd.f32 0.0, %v1646
        %v1648 = vpop.f32.mrb[0].mxu0
        %v1649 = vpop.f32.mrb[0].mxu0
        %v1650 = vpop.f32.mrb[0].mxu0
        %1651 = vdwg.mxu0
        %v1652 = vpack.c.bf16 %v1647, %v1647
        %v1653 = vld [vmem:[%s16] sm:$0xf]
        %s1654 = scalar_lea.vmem %s13, 16
        %v1655 = vld [vmem:[%s1654] sm:$0xf]
        %v1656 = vld [vmem:[%s1654 + $0x4] sm:$0xf]
        %v1657 = vld [vmem:[%s1654 + $0x8] sm:$0xf]
        %v1658 = vld [vmem:[%s1654 + $0xc] sm:$0xf]
        %v1663 = vunpack.c.l.b16 %v1655
        %v1664 = vunpack.c.l.b16 %v1656
        %v1665 = vunpack.c.l.b16 %v1657
        %v1666 = vunpack.c.l.b16 %v1658
        %v1667 = vpack.c.b16 %v1664, %v1663
        %v1668 = vpack.c.b16 %v1666, %v1665
        %1671 = vmatprep.subr.bf16.mxu0 0
        %1672 = vmatpush1.bf16.msra.mxu0 %v1667
        %1673 = vmatprep.subr.bf16.mxu0 0
        %1674 = vmatpush1.bf16.msra.mxu0 %v1668
        %1675 = vmatprep.subr.bf16.mxu0 0
        %1676 = vmatpush1.bf16.msra.mxu0 0
        %1677 = vmatprep.subr.bf16.mxu0 0
        %1678 = vmatpush1.bf16.msra.mxu0 0
        %1679 = vmatprep.subr.bf16.mxu0 0
        %1680 = vmatpush1.bf16.msra.mxu0 0
        %1681 = vmatprep.subr.bf16.mxu0 0
        %1682 = vmatpush1.bf16.msra.mxu0 0
        %1683 = vmatprep.subr.bf16.mxu0 0
        %1684 = vmatpush1.bf16.msra.mxu0 0
        %1685 = vmatprep.subr.bf16.mxu0 0
        %1686 = vmatpush1.bf16.msra.mxu0 0
        %1687 = vmatprep.subr.bf16.mxu0 0
        %1688 = vmatpush1.bf16.msra.mxu0 0
        %1689 = vmatprep.subr.bf16.mxu0 0
        %1690 = vmatpush1.bf16.msra.mxu0 0
        %1691 = vmatprep.subr.bf16.mxu0 0
        %1692 = vmatpush1.bf16.msra.mxu0 0
        %1693 = vmatprep.subr.bf16.mxu0 0
        %1694 = vmatpush1.bf16.msra.mxu0 0
        %1695 = vmatprep.subr.bf16.mxu0 0
        %1696 = vmatpush1.bf16.msra.mxu0 0
        %1697 = vmatprep.subr.bf16.mxu0 0
        %1698 = vmatpush1.bf16.msra.mxu0 0
        %1699 = vmatprep.subr.bf16.mxu0 0
        %1700 = vmatpush1.bf16.msra.mxu0 0
        %1701 = vmatprep.subr.bf16.mxu0 0
        %1702 = vmatpush1.bf16.msra.mxu0 0
        %1703 = vmatprep.mubr.bf16.mxu0 0
        %1704 = vmatmul.mubr.bf16.gmra.mrb[0].mxu0 %v1385
        %v1705 = vpop.f32.mrb[0].mxu0
        %v1706 = vadd.f32 0.0, %v1705
        %v1707 = vpop.f32.mrb[0].mxu0
        %v1708 = vpop.f32.mrb[0].mxu0
        %v1709 = vpop.f32.mrb[0].mxu0
        %1710 = vdwg.mxu0
        %s1711 = scalar_lea.vmem %s14, 16
        %v1712 = vld [vmem:[%s1711] sm:$0xf]
        %v1713 = vld [vmem:[%s1711 + $0x4] sm:$0xf]
        %v1714 = vld [vmem:[%s1711 + $0x8] sm:$0xf]
        %v1715 = vld [vmem:[%s1711 + $0xc] sm:$0xf]
        %v1720 = vunpack.c.l.b16 %v1712
        %v1721 = vunpack.c.l.b16 %v1713
        %v1722 = vunpack.c.l.b16 %v1714
        %v1723 = vunpack.c.l.b16 %v1715
        %v1724 = vpack.c.b16 %v1721, %v1720
        %v1725 = vpack.c.b16 %v1723, %v1722
        %1728 = vmatprep.subr.bf16.mxu0 0
        %1729 = vmatpush1.bf16.msra.mxu0 %v1724
        %1730 = vmatprep.subr.bf16.mxu0 0
        %1731 = vmatpush1.bf16.msra.mxu0 %v1725
        %1732 = vmatprep.subr.bf16.mxu0 0
        %1733 = vmatpush1.bf16.msra.mxu0 0
        %1734 = vmatprep.subr.bf16.mxu0 0
        %1735 = vmatpush1.bf16.msra.mxu0 0
        %1736 = vmatprep.subr.bf16.mxu0 0
        %1737 = vmatpush1.bf16.msra.mxu0 0
        %1738 = vmatprep.subr.bf16.mxu0 0
        %1739 = vmatpush1.bf16.msra.mxu0 0
        %1740 = vmatprep.subr.bf16.mxu0 0
        %1741 = vmatpush1.bf16.msra.mxu0 0
        %1742 = vmatprep.subr.bf16.mxu0 0
        %1743 = vmatpush1.bf16.msra.mxu0 0
        %1744 = vmatprep.subr.bf16.mxu0 0
        %1745 = vmatpush1.bf16.msra.mxu0 0
        %1746 = vmatprep.subr.bf16.mxu0 0
        %1747 = vmatpush1.bf16.msra.mxu0 0
        %1748 = vmatprep.subr.bf16.mxu0 0
        %1749 = vmatpush1.bf16.msra.mxu0 0
        %1750 = vmatprep.subr.bf16.mxu0 0
        %1751 = vmatpush1.bf16.msra.mxu0 0
        %1752 = vmatprep.subr.bf16.mxu0 0
        %1753 = vmatpush1.bf16.msra.mxu0 0
        %1754 = vmatprep.subr.bf16.mxu0 0
        %1755 = vmatpush1.bf16.msra.mxu0 0
        %1756 = vmatprep.subr.bf16.mxu0 0
        %1757 = vmatpush1.bf16.msra.mxu0 0
        %1758 = vmatprep.subr.bf16.mxu0 0
        %1759 = vmatpush1.bf16.msra.mxu0 0
        %1760 = vmatprep.mubr.bf16.mxu0 0
        %1761 = vmatmul.mubr.bf16.gmra.mrb[0].mxu0 %v1444
        %v1762 = vpop.f32.mrb[0].mxu0
        %v1763 = vadd.f32 0.0, %v1762
        %v1764 = vpop.f32.mrb[0].mxu0
        %v1765 = vpop.f32.mrb[0].mxu0
        %v1766 = vpop.f32.mrb[0].mxu0
        %1767 = vdwg.mxu0
        %s1768 = scalar_lea.vmem %s15, 16
        %v1769 = vld [vmem:[%s1768] sm:$0xf]
        %v1770 = vld [vmem:[%s1768 + $0x4] sm:$0xf]
        %v1771 = vld [vmem:[%s1768 + $0x8] sm:$0xf]
        %v1772 = vld [vmem:[%s1768 + $0xc] sm:$0xf]
        %v1777 = vunpack.c.l.b16 %v1769
        %v1778 = vunpack.c.l.b16 %v1770
        %v1779 = vunpack.c.l.b16 %v1771
        %v1780 = vunpack.c.l.b16 %v1772
        %v1781 = vpack.c.b16 %v1778, %v1777
        %v1782 = vpack.c.b16 %v1780, %v1779
        %1785 = vmatprep.subr.bf16.mxu0 0
        %1786 = vmatpush1.bf16.msra.mxu0 %v1781
        %1787 = vmatprep.subr.bf16.mxu0 0
        %1788 = vmatpush1.bf16.msra.mxu0 %v1782
        %1789 = vmatprep.subr.bf16.mxu0 0
        %1790 = vmatpush1.bf16.msra.mxu0 0
        %1791 = vmatprep.subr.bf16.mxu0 0
        %1792 = vmatpush1.bf16.msra.mxu0 0
        %1793 = vmatprep.subr.bf16.mxu0 0
        %1794 = vmatpush1.bf16.msra.mxu0 0
        %1795 = vmatprep.subr.bf16.mxu0 0
        %1796 = vmatpush1.bf16.msra.mxu0 0
        %1797 = vmatprep.subr.bf16.mxu0 0
        %1798 = vmatpush1.bf16.msra.mxu0 0
        %1799 = vmatprep.subr.bf16.mxu0 0
        %1800 = vmatpush1.bf16.msra.mxu0 0
        %1801 = vmatprep.subr.bf16.mxu0 0
        %1802 = vmatpush1.bf16.msra.mxu0 0
        %1803 = vmatprep.subr.bf16.mxu0 0
        %1804 = vmatpush1.bf16.msra.mxu0 0
        %1805 = vmatprep.subr.bf16.mxu0 0
        %1806 = vmatpush1.bf16.msra.mxu0 0
        %1807 = vmatprep.subr.bf16.mxu0 0
        %1808 = vmatpush1.bf16.msra.mxu0 0
        %1809 = vmatprep.subr.bf16.mxu0 0
        %1810 = vmatpush1.bf16.msra.mxu0 0
        %1811 = vmatprep.subr.bf16.mxu0 0
        %1812 = vmatpush1.bf16.msra.mxu0 0
        %1813 = vmatprep.subr.bf16.mxu0 0
        %1814 = vmatpush1.bf16.msra.mxu0 0
        %1815 = vmatprep.subr.bf16.mxu0 0
        %1816 = vmatpush1.bf16.msra.mxu0 0
        %1817 = vmatprep.mubr.bf16.mxu0 0
        %1818 = vmatmul.mubr.bf16.gmra.mrb[0].mxu0 %v1444
        %v1819 = vpop.f32.mrb[0].mxu0
        %v1820 = vadd.f32 0.0, %v1819
        %v1821 = vpop.f32.mrb[0].mxu0
        %v1822 = vpop.f32.mrb[0].mxu0
        %v1823 = vpop.f32.mrb[0].mxu0
        %1824 = vdwg.mxu0
        %v1825 = vpack.c.bf16 %v1706, %v1706
        %v1826 = vpack.c.bf16 %v1763, %v1763
        %v1828 = vsel %vm1544, %v1825, 0
        %v1831 = vsel %vm1544, %v1826, 0
        %1833 = vmatprep.subr.bf16.mxu0 0
        %1834 = vmatpush1.bf16.xpose.msra.mxu0 %v1831
        %1835 = vmatprep.subr.bf16.mxu0 0
        %1836 = vmatpush1.bf16.xpose.msra.mxu0 0
        %1837 = vmatprep.subr.bf16.mxu0 0
        %1838 = vmatpush1.bf16.xpose.msra.mxu0 0
        %1839 = vmatprep.subr.bf16.mxu0 0
        %1840 = vmatpush1.bf16.xpose.msra.mxu0 0
        %1841 = vmatprep.subr.bf16.mxu0 0
        %1842 = vmatpush1.bf16.xpose.msra.mxu0 0
        %1843 = vmatprep.subr.bf16.mxu0 0
        %1844 = vmatpush1.bf16.xpose.msra.mxu0 0
        %1845 = vmatprep.subr.bf16.mxu0 0
        %1846 = vmatpush1.bf16.xpose.msra.mxu0 0
        %1847 = vmatprep.subr.bf16.mxu0 0
        %1848 = vmatpush1.bf16.xpose.msra.mxu0 0
        %1849 = vmatprep.subr.bf16.mxu0 0
        %1850 = vmatpush1.bf16.xpose.msra.mxu0 0
        %1851 = vmatprep.subr.bf16.mxu0 0
        %1852 = vmatpush1.bf16.xpose.msra.mxu0 0
        %1853 = vmatprep.subr.bf16.mxu0 0
        %1854 = vmatpush1.bf16.xpose.msra.mxu0 0
        %1855 = vmatprep.subr.bf16.mxu0 0
        %1856 = vmatpush1.bf16.xpose.msra.mxu0 0
        %1857 = vmatprep.subr.bf16.mxu0 0
        %1858 = vmatpush1.bf16.xpose.msra.mxu0 0
        %1859 = vmatprep.subr.bf16.mxu0 0
        %1860 = vmatpush1.bf16.xpose.msra.mxu0 0
        %1861 = vmatprep.subr.bf16.mxu0 0
        %1862 = vmatpush1.bf16.xpose.msra.mxu0 0
        %1863 = vmatprep.subr.bf16.mxu0 0
        %1864 = vmatpush1.bf16.xpose.msra.mxu0 0
        %1865 = vmatprep.mubr.bf16.mxu0 0
        %1866 = vmatmul.mubr.bf16.gmra.mrb[0].mxu0 %v1828
        %v1867 = vpop.f32.mrb[0].mxu0
        %v1868 = vadd.f32 0.0, %v1867
        %v1869 = vpop.f32.mrb[0].mxu0
        %v1870 = vpop.f32.mrb[0].mxu0
        %v1871 = vpop.f32.mrb[0].mxu0
        %1872 = vdwg.mxu0
        %v1873 = vmul.f32 %v1868, 0.17677669
        %v1874 = vsel %vm1544, %v1873, -inf
        %1875 = vmax.xlane.f32.xlu0 %v1874
        %v1876 = vpop.xlane.xlu0 %1875
        %v1877 = vsub.f32 %v1873, %v1876
        %v1878 = vmul.f32 %v1877, 1.442695
        %v1879 = vpow.pop %v1878
        %v1880 = vsel %vm1544, %v1879, 0.0
        %1881 = vadd.xlane.f32.xlu0 %v1880
        %v1882 = vpop.xlane.xlu0 %1881
        %v1883 = vrcp.pop %v1882
        %v1884 = vmul.f32 %v1879, %v1883
        %v1885 = vpack.c.bf16 %v1884, %v1884
        %v1886 = vpack.c.bf16 %v1820, %v1820
        %v1888 = vsel %vm1544, %v1885, 0
        %v1891 = vsel %vm1608, %v1886, 0
        %1893 = vmatprep.subr.bf16.mxu0 0
        %1894 = vmatpush1.bf16.msra.mxu0 %v1891
        %1895 = vmatprep.subr.bf16.mxu0 0
        %1896 = vmatpush1.bf16.msra.mxu0 0
        %1897 = vmatprep.subr.bf16.mxu0 0
        %1898 = vmatpush1.bf16.msra.mxu0 0
        %1899 = vmatprep.subr.bf16.mxu0 0
        %1900 = vmatpush1.bf16.msra.mxu0 0
        %1901 = vmatprep.subr.bf16.mxu0 0
        %1902 = vmatpush1.bf16.msra.mxu0 0
        %1903 = vmatprep.subr.bf16.mxu0 0
        %1904 = vmatpush1.bf16.msra.mxu0 0
        %1905 = vmatprep.subr.bf16.mxu0 0
        %1906 = vmatpush1.bf16.msra.mxu0 0
        %1907 = vmatprep.subr.bf16.mxu0 0
        %1908 = vmatpush1.bf16.msra.mxu0 0
        %1909 = vmatprep.subr.bf16.mxu0 0
        %1910 = vmatpush1.bf16.msra.mxu0 0
        %1911 = vmatprep.subr.bf16.mxu0 0
        %1912 = vmatpush1.bf16.msra.mxu0 0
        %1913 = vmatprep.subr.bf16.mxu0 0
        %1914 = vmatpush1.bf16.msra.mxu0 0
        %1915 = vmatprep.subr.bf16.mxu0 0
        %1916 = vmatpush1.bf16.msra.mxu0 0
        %1917 = vmatprep.subr.bf16.mxu0 0
        %1918 = vmatpush1.bf16.msra.mxu0 0
        %1919 = vmatprep.subr.bf16.mxu0 0
        %1920 = vmatpush1.bf16.msra.mxu0 0
        %1921 = vmatprep.subr.bf16.mxu0 0
        %1922 = vmatpush1.bf16.msra.mxu0 0
        %1923 = vmatprep.subr.bf16.mxu0 0
        %1924 = vmatpush1.bf16.msra.mxu0 0
        %1925 = vmatprep.mubr.bf16.mxu0 0
        %1926 = vmatmul.mubr.bf16.gmra.mrb[0].mxu0 %v1888
        %v1927 = vpop.f32.mrb[0].mxu0
        %v1928 = vadd.f32 0.0, %v1927
        %v1929 = vpop.f32.mrb[0].mxu0
        %v1930 = vpop.f32.mrb[0].mxu0
        %v1931 = vpop.f32.mrb[0].mxu0
        %1932 = vdwg.mxu0
        %v1933 = vpack.c.bf16 %v1928, %v1928
        %s1934 = scalar_lea.vmem %s16, 4
        %v1935 = vld [vmem:[%s1934] sm:$0xf]
        %v1937 = vsel %vm1544, %v1933, 0
        %v1940 = vsel %vm1608, %v1935, 0
        %1942 = vmatprep.subr.bf16.mxu0 0
        %1943 = vmatpush1.bf16.msra.mxu0 %v1940
        %1944 = vmatprep.subr.bf16.mxu0 0
        %1945 = vmatpush1.bf16.msra.mxu0 0
        %1946 = vmatprep.subr.bf16.mxu0 0
        %1947 = vmatpush1.bf16.msra.mxu0 0
        %1948 = vmatprep.subr.bf16.mxu0 0
        %1949 = vmatpush1.bf16.msra.mxu0 0
        %1950 = vmatprep.subr.bf16.mxu0 0
        %1951 = vmatpush1.bf16.msra.mxu0 0
        %1952 = vmatprep.subr.bf16.mxu0 0
        %1953 = vmatpush1.bf16.msra.mxu0 0
        %1954 = vmatprep.subr.bf16.mxu0 0
        %1955 = vmatpush1.bf16.msra.mxu0 0
        %1956 = vmatprep.subr.bf16.mxu0 0
        %1957 = vmatpush1.bf16.msra.mxu0 0
        %1958 = vmatprep.subr.bf16.mxu0 0
        %1959 = vmatpush1.bf16.msra.mxu0 0
        %1960 = vmatprep.subr.bf16.mxu0 0
        %1961 = vmatpush1.bf16.msra.mxu0 0
        %1962 = vmatprep.subr.bf16.mxu0 0
        %1963 = vmatpush1.bf16.msra.mxu0 0
        %1964 = vmatprep.subr.bf16.mxu0 0
        %1965 = vmatpush1.bf16.msra.mxu0 0
        %1966 = vmatprep.subr.bf16.mxu0 0
        %1967 = vmatpush1.bf16.msra.mxu0 0
        %1968 = vmatprep.subr.bf16.mxu0 0
        %1969 = vmatpush1.bf16.msra.mxu0 0
        %1970 = vmatprep.subr.bf16.mxu0 0
        %1971 = vmatpush1.bf16.msra.mxu0 0
        %1972 = vmatprep.subr.bf16.mxu0 0
        %1973 = vmatpush1.bf16.msra.mxu0 0
        %1974 = vmatprep.mubr.bf16.mxu0 0
        %1975 = vmatmul.mubr.bf16.gmra.mrb[0].mxu0 %v1937
        %v1976 = vpop.f32.mrb[0].mxu0
        %v1977 = vadd.f32 0.0, %v1976
        %v1978 = vpop.f32.mrb[0].mxu0
        %v1979 = vpop.f32.mrb[0].mxu0
        %v1980 = vpop.f32.mrb[0].mxu0
        %1981 = vdwg.mxu0
        %v1983 = vsel %vm1544, %v1652, 0
        %v1986 = vsel %vm1608, %v1653, 0
        %1988 = vmatprep.subr.bf16.mxu0 0
        %1989 = vmatpush1.bf16.msra.mxu0 %v1986
        %1990 = vmatprep.subr.bf16.mxu0 0
        %1991 = vmatpush1.bf16.msra.mxu0 0
        %1992 = vmatprep.subr.bf16.mxu0 0
        %1993 = vmatpush1.bf16.msra.mxu0 0
        %1994 = vmatprep.subr.bf16.mxu0 0
        %1995 = vmatpush1.bf16.msra.mxu0 0
        %1996 = vmatprep.subr.bf16.mxu0 0
        %1997 = vmatpush1.bf16.msra.mxu0 0
        %1998 = vmatprep.subr.bf16.mxu0 0
        %1999 = vmatpush1.bf16.msra.mxu0 0
        %2000 = vmatprep.subr.bf16.mxu0 0
        %2001 = vmatpush1.bf16.msra.mxu0 0
        %2002 = vmatprep.subr.bf16.mxu0 0
        %2003 = vmatpush1.bf16.msra.mxu0 0
        %2004 = vmatprep.subr.bf16.mxu0 0
        %2005 = vmatpush1.bf16.msra.mxu0 0
        %2006 = vmatprep.subr.bf16.mxu0 0
        %2007 = vmatpush1.bf16.msra.mxu0 0
        %2008 = vmatprep.subr.bf16.mxu0 0
        %2009 = vmatpush1.bf16.msra.mxu0 0
        %2010 = vmatprep.subr.bf16.mxu0 0
        %2011 = vmatpush1.bf16.msra.mxu0 0
        %2012 = vmatprep.subr.bf16.mxu0 0
        %2013 = vmatpush1.bf16.msra.mxu0 0
        %2014 = vmatprep.subr.bf16.mxu0 0
        %2015 = vmatpush1.bf16.msra.mxu0 0
        %2016 = vmatprep.subr.bf16.mxu0 0
        %2017 = vmatpush1.bf16.msra.mxu0 0
        %2018 = vmatprep.subr.bf16.mxu0 0
        %2019 = vmatpush1.bf16.msra.mxu0 0
        %2020 = vmatprep.mubr.bf16.mxu0 0
        %2021 = vmatmul.mubr.bf16.gmra.mrb[0].mxu0 %v1983
        %v2022 = vpop.f32.mrb[0].mxu0
        %v2023 = vadd.f32 %v1977, %v2022
        %v2024 = vpop.f32.mrb[0].mxu0
        %v2025 = vpop.f32.mrb[0].mxu0
        %v2026 = vpop.f32.mrb[0].mxu0
        %2027 = vdwg.mxu0
        %s2028 = scalar_lea.vmem %s13, 32
        %v2029 = vld [vmem:[%s2028] sm:$0xf]
        %v2030 = vld [vmem:[%s2028 + $0x4] sm:$0xf]
        %v2031 = vld [vmem:[%s2028 + $0x8] sm:$0xf]
        %v2032 = vld [vmem:[%s2028 + $0xc] sm:$0xf]
        %v2037 = vunpack.c.l.b16 %v2029
        %v2038 = vunpack.c.l.b16 %v2030
        %v2039 = vunpack.c.l.b16 %v2031
        %v2040 = vunpack.c.l.b16 %v2032
        %v2041 = vpack.c.b16 %v2038, %v2037
        %v2042 = vpack.c.b16 %v2040, %v2039
        %2045 = vmatprep.subr.bf16.mxu0 0
        %2046 = vmatpush1.bf16.msra.mxu0 %v2041
        %2047 = vmatprep.subr.bf16.mxu0 0
        %2048 = vmatpush1.bf16.msra.mxu0 %v2042
        %2049 = vmatprep.subr.bf16.mxu0 0
        %2050 = vmatpush1.bf16.msra.mxu0 0
        %2051 = vmatprep.subr.bf16.mxu0 0
        %2052 = vmatpush1.bf16.msra.mxu0 0
        %2053 = vmatprep.subr.bf16.mxu0 0
        %2054 = vmatpush1.bf16.msra.mxu0 0
        %2055 = vmatprep.subr.bf16.mxu0 0
        %2056 = vmatpush1.bf16.msra.mxu0 0
        %2057 = vmatprep.subr.bf16.mxu0 0
        %2058 = vmatpush1.bf16.msra.mxu0 0
        %2059 = vmatprep.subr.bf16.mxu0 0
        %2060 = vmatpush1.bf16.msra.mxu0 0
        %2061 = vmatprep.subr.bf16.mxu0 0
        %2062 = vmatpush1.bf16.msra.mxu0 0
        %2063 = vmatprep.subr.bf16.mxu0 0
        %2064 = vmatpush1.bf16.msra.mxu0 0
        %2065 = vmatprep.subr.bf16.mxu0 0
        %2066 = vmatpush1.bf16.msra.mxu0 0
        %2067 = vmatprep.subr.bf16.mxu0 0
        %2068 = vmatpush1.bf16.msra.mxu0 0
        %2069 = vmatprep.subr.bf16.mxu0 0
        %2070 = vmatpush1.bf16.msra.mxu0 0
        %2071 = vmatprep.subr.bf16.mxu0 0
        %2072 = vmatpush1.bf16.msra.mxu0 0
        %2073 = vmatprep.subr.bf16.mxu0 0
        %2074 = vmatpush1.bf16.msra.mxu0 0
        %2075 = vmatprep.subr.bf16.mxu0 0
        %2076 = vmatpush1.bf16.msra.mxu0 0
        %2077 = vmatprep.mubr.bf16.mxu0 0
        %2078 = vmatmul.mubr.bf16.gmra.mrb[0].mxu0 %v1385
        %v2079 = vpop.f32.mrb[0].mxu0
        %v2080 = vadd.f32 0.0, %v2079
        %v2081 = vpop.f32.mrb[0].mxu0
        %v2082 = vpop.f32.mrb[0].mxu0
        %v2083 = vpop.f32.mrb[0].mxu0
        %2084 = vdwg.mxu0
        %s2085 = scalar_lea.vmem %s14, 32
        %v2086 = vld [vmem:[%s2085] sm:$0xf]
        %v2087 = vld [vmem:[%s2085 + $0x4] sm:$0xf]
        %v2088 = vld [vmem:[%s2085 + $0x8] sm:$0xf]
        %v2089 = vld [vmem:[%s2085 + $0xc] sm:$0xf]
        %v2094 = vunpack.c.l.b16 %v2086
        %v2095 = vunpack.c.l.b16 %v2087
        %v2096 = vunpack.c.l.b16 %v2088
        %v2097 = vunpack.c.l.b16 %v2089
        %v2098 = vpack.c.b16 %v2095, %v2094
        %v2099 = vpack.c.b16 %v2097, %v2096
        %2102 = vmatprep.subr.bf16.mxu0 0
        %2103 = vmatpush1.bf16.msra.mxu0 %v2098
        %2104 = vmatprep.subr.bf16.mxu0 0
        %2105 = vmatpush1.bf16.msra.mxu0 %v2099
        %2106 = vmatprep.subr.bf16.mxu0 0
        %2107 = vmatpush1.bf16.msra.mxu0 0
        %2108 = vmatprep.subr.bf16.mxu0 0
        %2109 = vmatpush1.bf16.msra.mxu0 0
        %2110 = vmatprep.subr.bf16.mxu0 0
        %2111 = vmatpush1.bf16.msra.mxu0 0
        %2112 = vmatprep.subr.bf16.mxu0 0
        %2113 = vmatpush1.bf16.msra.mxu0 0
        %2114 = vmatprep.subr.bf16.mxu0 0
        %2115 = vmatpush1.bf16.msra.mxu0 0
        %2116 = vmatprep.subr.bf16.mxu0 0
        %2117 = vmatpush1.bf16.msra.mxu0 0
        %2118 = vmatprep.subr.bf16.mxu0 0
        %2119 = vmatpush1.bf16.msra.mxu0 0
        %2120 = vmatprep.subr.bf16.mxu0 0
        %2121 = vmatpush1.bf16.msra.mxu0 0
        %2122 = vmatprep.subr.bf16.mxu0 0
        %2123 = vmatpush1.bf16.msra.mxu0 0
        %2124 = vmatprep.subr.bf16.mxu0 0
        %2125 = vmatpush1.bf16.msra.mxu0 0
        %2126 = vmatprep.subr.bf16.mxu0 0
        %2127 = vmatpush1.bf16.msra.mxu0 0
        %2128 = vmatprep.subr.bf16.mxu0 0
        %2129 = vmatpush1.bf16.msra.mxu0 0
        %2130 = vmatprep.subr.bf16.mxu0 0
        %2131 = vmatpush1.bf16.msra.mxu0 0
        %2132 = vmatprep.subr.bf16.mxu0 0
        %2133 = vmatpush1.bf16.msra.mxu0 0
        %2134 = vmatprep.mubr.bf16.mxu0 0
        %2135 = vmatmul.mubr.bf16.gmra.mrb[0].mxu0 %v1444
        %v2136 = vpop.f32.mrb[0].mxu0
        %v2137 = vadd.f32 0.0, %v2136
        %v2138 = vpop.f32.mrb[0].mxu0
        %v2139 = vpop.f32.mrb[0].mxu0
        %v2140 = vpop.f32.mrb[0].mxu0
        %2141 = vdwg.mxu0
        %s2142 = scalar_lea.vmem %s15, 32
        %v2143 = vld [vmem:[%s2142] sm:$0xf]
        %v2144 = vld [vmem:[%s2142 + $0x4] sm:$0xf]
        %v2145 = vld [vmem:[%s2142 + $0x8] sm:$0xf]
        %v2146 = vld [vmem:[%s2142 + $0xc] sm:$0xf]
        %v2151 = vunpack.c.l.b16 %v2143
        %v2152 = vunpack.c.l.b16 %v2144
        %v2153 = vunpack.c.l.b16 %v2145
        %v2154 = vunpack.c.l.b16 %v2146
        %v2155 = vpack.c.b16 %v2152, %v2151
        %v2156 = vpack.c.b16 %v2154, %v2153
        %2159 = vmatprep.subr.bf16.mxu0 0
        %2160 = vmatpush1.bf16.msra.mxu0 %v2155
        %2161 = vmatprep.subr.bf16.mxu0 0
        %2162 = vmatpush1.bf16.msra.mxu0 %v2156
        %2163 = vmatprep.subr.bf16.mxu0 0
        %2164 = vmatpush1.bf16.msra.mxu0 0
        %2165 = vmatprep.subr.bf16.mxu0 0
        %2166 = vmatpush1.bf16.msra.mxu0 0
        %2167 = vmatprep.subr.bf16.mxu0 0
        %2168 = vmatpush1.bf16.msra.mxu0 0
        %2169 = vmatprep.subr.bf16.mxu0 0
        %2170 = vmatpush1.bf16.msra.mxu0 0
        %2171 = vmatprep.subr.bf16.mxu0 0
        %2172 = vmatpush1.bf16.msra.mxu0 0
        %2173 = vmatprep.subr.bf16.mxu0 0
        %2174 = vmatpush1.bf16.msra.mxu0 0
        %2175 = vmatprep.subr.bf16.mxu0 0
        %2176 = vmatpush1.bf16.msra.mxu0 0
        %2177 = vmatprep.subr.bf16.mxu0 0
        %2178 = vmatpush1.bf16.msra.mxu0 0
        %2179 = vmatprep.subr.bf16.mxu0 0
        %2180 = vmatpush1.bf16.msra.mxu0 0
        %2181 = vmatprep.subr.bf16.mxu0 0
        %2182 = vmatpush1.bf16.msra.mxu0 0
        %2183 = vmatprep.subr.bf16.mxu0 0
        %2184 = vmatpush1.bf16.msra.mxu0 0
        %2185 = vmatprep.subr.bf16.mxu0 0
        %2186 = vmatpush1.bf16.msra.mxu0 0
        %2187 = vmatprep.subr.bf16.mxu0 0
        %2188 = vmatpush1.bf16.msra.mxu0 0
        %2189 = vmatprep.subr.bf16.mxu0 0
        %2190 = vmatpush1.bf16.msra.mxu0 0
        %2191 = vmatprep.mubr.bf16.mxu0 0
        %2192 = vmatmul.mubr.bf16.gmra.mrb[0].mxu0 %v1444
        %v2193 = vpop.f32.mrb[0].mxu0
        %v2194 = vadd.f32 0.0, %v2193
        %v2195 = vpop.f32.mrb[0].mxu0
        %v2196 = vpop.f32.mrb[0].mxu0
        %v2197 = vpop.f32.mrb[0].mxu0
        %2198 = vdwg.mxu0
        %v2199 = vpack.c.bf16 %v2080, %v2080
        %v2200 = vpack.c.bf16 %v2137, %v2137
        %v2202 = vsel %vm1544, %v2199, 0
        %v2205 = vsel %vm1544, %v2200, 0
        %2207 = vmatprep.subr.bf16.mxu0 0
        %2208 = vmatpush1.bf16.xpose.msra.mxu0 %v2205
        %2209 = vmatprep.subr.bf16.mxu0 0
        %2210 = vmatpush1.bf16.xpose.msra.mxu0 0
        %2211 = vmatprep.subr.bf16.mxu0 0
        %2212 = vmatpush1.bf16.xpose.msra.mxu0 0
        %2213 = vmatprep.subr.bf16.mxu0 0
        %2214 = vmatpush1.bf16.xpose.msra.mxu0 0
        %2215 = vmatprep.subr.bf16.mxu0 0
        %2216 = vmatpush1.bf16.xpose.msra.mxu0 0
        %2217 = vmatprep.subr.bf16.mxu0 0
        %2218 = vmatpush1.bf16.xpose.msra.mxu0 0
        %2219 = vmatprep.subr.bf16.mxu0 0
        %2220 = vmatpush1.bf16.xpose.msra.mxu0 0
        %2221 = vmatprep.subr.bf16.mxu0 0
        %2222 = vmatpush1.bf16.xpose.msra.mxu0 0
        %2223 = vmatprep.subr.bf16.mxu0 0
        %2224 = vmatpush1.bf16.xpose.msra.mxu0 0
        %2225 = vmatprep.subr.bf16.mxu0 0
        %2226 = vmatpush1.bf16.xpose.msra.mxu0 0
        %2227 = vmatprep.subr.bf16.mxu0 0
        %2228 = vmatpush1.bf16.xpose.msra.mxu0 0
        %2229 = vmatprep.subr.bf16.mxu0 0
        %2230 = vmatpush1.bf16.xpose.msra.mxu0 0
        %2231 = vmatprep.subr.bf16.mxu0 0
        %2232 = vmatpush1.bf16.xpose.msra.mxu0 0
        %2233 = vmatprep.subr.bf16.mxu0 0
        %2234 = vmatpush1.bf16.xpose.msra.mxu0 0
        %2235 = vmatprep.subr.bf16.mxu0 0
        %2236 = vmatpush1.bf16.xpose.msra.mxu0 0
        %2237 = vmatprep.subr.bf16.mxu0 0
        %2238 = vmatpush1.bf16.xpose.msra.mxu0 0
        %2239 = vmatprep.mubr.bf16.mxu0 0
        %2240 = vmatmul.mubr.bf16.gmra.mrb[0].mxu0 %v2202
        %v2241 = vpop.f32.mrb[0].mxu0
        %v2242 = vadd.f32 0.0, %v2241
        %v2243 = vpop.f32.mrb[0].mxu0
        %v2244 = vpop.f32.mrb[0].mxu0
        %v2245 = vpop.f32.mrb[0].mxu0
        %2246 = vdwg.mxu0
        %v2247 = vmul.f32 %v2242, 0.17677669
        %v2248 = vsel %vm1544, %v2247, -inf
        %2249 = vmax.xlane.f32.xlu0 %v2248
        %v2250 = vpop.xlane.xlu0 %2249
        %v2251 = vsub.f32 %v2247, %v2250
        %v2252 = vmul.f32 %v2251, 1.442695
        %v2253 = vpow.pop %v2252
        %v2254 = vsel %vm1544, %v2253, 0.0
        %2255 = vadd.xlane.f32.xlu0 %v2254
        %v2256 = vpop.xlane.xlu0 %2255
        %v2257 = vrcp.pop %v2256
        %v2258 = vmul.f32 %v2253, %v2257
        %v2259 = vpack.c.bf16 %v2258, %v2258
        %v2260 = vpack.c.bf16 %v2194, %v2194
        %v2262 = vsel %vm1544, %v2259, 0
        %v2265 = vsel %vm1608, %v2260, 0
        %2267 = vmatprep.subr.bf16.mxu0 0
        %2268 = vmatpush1.bf16.msra.mxu0 %v2265
        %2269 = vmatprep.subr.bf16.mxu0 0
        %2270 = vmatpush1.bf16.msra.mxu0 0
        %2271 = vmatprep.subr.bf16.mxu0 0
        %2272 = vmatpush1.bf16.msra.mxu0 0
        %2273 = vmatprep.subr.bf16.mxu0 0
        %2274 = vmatpush1.bf16.msra.mxu0 0
        %2275 = vmatprep.subr.bf16.mxu0 0
        %2276 = vmatpush1.bf16.msra.mxu0 0
        %2277 = vmatprep.subr.bf16.mxu0 0
        %2278 = vmatpush1.bf16.msra.mxu0 0
        %2279 = vmatprep.subr.bf16.mxu0 0
        %2280 = vmatpush1.bf16.msra.mxu0 0
        %2281 = vmatprep.subr.bf16.mxu0 0
        %2282 = vmatpush1.bf16.msra.mxu0 0
        %2283 = vmatprep.subr.bf16.mxu0 0
        %2284 = vmatpush1.bf16.msra.mxu0 0
        %2285 = vmatprep.subr.bf16.mxu0 0
        %2286 = vmatpush1.bf16.msra.mxu0 0
        %2287 = vmatprep.subr.bf16.mxu0 0
        %2288 = vmatpush1.bf16.msra.mxu0 0
        %2289 = vmatprep.subr.bf16.mxu0 0
        %2290 = vmatpush1.bf16.msra.mxu0 0
        %2291 = vmatprep.subr.bf16.mxu0 0
        %2292 = vmatpush1.bf16.msra.mxu0 0
        %2293 = vmatprep.subr.bf16.mxu0 0
        %2294 = vmatpush1.bf16.msra.mxu0 0
        %2295 = vmatprep.subr.bf16.mxu0 0
        %2296 = vmatpush1.bf16.msra.mxu0 0
        %2297 = vmatprep.subr.bf16.mxu0 0
        %2298 = vmatpush1.bf16.msra.mxu0 0
        %2299 = vmatprep.mubr.bf16.mxu0 0
        %2300 = vmatmul.mubr.bf16.gmra.mrb[0].mxu0 %v2262
        %v2301 = vpop.f32.mrb[0].mxu0
        %v2302 = vadd.f32 0.0, %v2301
        %v2303 = vpop.f32.mrb[0].mxu0
        %v2304 = vpop.f32.mrb[0].mxu0
        %v2305 = vpop.f32.mrb[0].mxu0
        %2306 = vdwg.mxu0
        %v2307 = vpack.c.bf16 %v2302, %v2302
        %s2308 = scalar_lea.vmem %s16, 8
        %v2309 = vld [vmem:[%s2308] sm:$0xf]
        %v2311 = vsel %vm1544, %v2307, 0
        %v2314 = vsel %vm1608, %v2309, 0
        %2316 = vmatprep.subr.bf16.mxu0 0
        %2317 = vmatpush1.bf16.msra.mxu0 %v2314
        %2318 = vmatprep.subr.bf16.mxu0 0
        %2319 = vmatpush1.bf16.msra.mxu0 0
        %2320 = vmatprep.subr.bf16.mxu0 0
        %2321 = vmatpush1.bf16.msra.mxu0 0
        %2322 = vmatprep.subr.bf16.mxu0 0
        %2323 = vmatpush1.bf16.msra.mxu0 0
        %2324 = vmatprep.subr.bf16.mxu0 0
        %2325 = vmatpush1.bf16.msra.mxu0 0
        %2326 = vmatprep.subr.bf16.mxu0 0
        %2327 = vmatpush1.bf16.msra.mxu0 0
        %2328 = vmatprep.subr.bf16.mxu0 0
        %2329 = vmatpush1.bf16.msra.mxu0 0
        %2330 = vmatprep.subr.bf16.mxu0 0
        %2331 = vmatpush1.bf16.msra.mxu0 0
        %2332 = vmatprep.subr.bf16.mxu0 0
        %2333 = vmatpush1.bf16.msra.mxu0 0
        %2334 = vmatprep.subr.bf16.mxu0 0
        %2335 = vmatpush1.bf16.msra.mxu0 0
        %2336 = vmatprep.subr.bf16.mxu0 0
        %2337 = vmatpush1.bf16.msra.mxu0 0
        %2338 = vmatprep.subr.bf16.mxu0 0
        %2339 = vmatpush1.bf16.msra.mxu0 0
        %2340 = vmatprep.subr.bf16.mxu0 0
        %2341 = vmatpush1.bf16.msra.mxu0 0
        %2342 = vmatprep.subr.bf16.mxu0 0
        %2343 = vmatpush1.bf16.msra.mxu0 0
        %2344 = vmatprep.subr.bf16.mxu0 0
        %2345 = vmatpush1.bf16.msra.mxu0 0
        %2346 = vmatprep.subr.bf16.mxu0 0
        %2347 = vmatpush1.bf16.msra.mxu0 0
        %2348 = vmatprep.mubr.bf16.mxu0 0
        %2349 = vmatmul.mubr.bf16.gmra.mrb[0].mxu0 %v2311
        %v2350 = vpop.f32.mrb[0].mxu0
        %v2351 = vadd.f32 0.0, %v2350
        %v2352 = vpop.f32.mrb[0].mxu0
        %v2353 = vpop.f32.mrb[0].mxu0
        %v2354 = vpop.f32.mrb[0].mxu0
        %2355 = vdwg.mxu0
        %v2356 = vadd.f32 %v2023, %v2351
        %s2357 = scalar_lea.vmem %s13, 48
        %v2358 = vld [vmem:[%s2357] sm:$0xf]
        %v2359 = vld [vmem:[%s2357 + $0x4] sm:$0xf]
        %v2360 = vld [vmem:[%s2357 + $0x8] sm:$0xf]
        %v2361 = vld [vmem:[%s2357 + $0xc] sm:$0xf]
        %v2366 = vunpack.c.l.b16 %v2358
        %v2367 = vunpack.c.l.b16 %v2359
        %v2368 = vunpack.c.l.b16 %v2360
        %v2369 = vunpack.c.l.b16 %v2361
        %v2370 = vpack.c.b16 %v2367, %v2366
        %v2371 = vpack.c.b16 %v2369, %v2368
        %2374 = vmatprep.subr.bf16.mxu0 0
        %2375 = vmatpush1.bf16.msra.mxu0 %v2370
        %2376 = vmatprep.subr.bf16.mxu0 0
        %2377 = vmatpush1.bf16.msra.mxu0 %v2371
        %2378 = vmatprep.subr.bf16.mxu0 0
        %2379 = vmatpush1.bf16.msra.mxu0 0
        %2380 = vmatprep.subr.bf16.mxu0 0
        %2381 = vmatpush1.bf16.msra.mxu0 0
        %2382 = vmatprep.subr.bf16.mxu0 0
        %2383 = vmatpush1.bf16.msra.mxu0 0
        %2384 = vmatprep.subr.bf16.mxu0 0
        %2385 = vmatpush1.bf16.msra.mxu0 0
        %2386 = vmatprep.subr.bf16.mxu0 0
        %2387 = vmatpush1.bf16.msra.mxu0 0
        %2388 = vmatprep.subr.bf16.mxu0 0
        %2389 = vmatpush1.bf16.msra.mxu0 0
        %2390 = vmatprep.subr.bf16.mxu0 0
        %2391 = vmatpush1.bf16.msra.mxu0 0
        %2392 = vmatprep.subr.bf16.mxu0 0
        %2393 = vmatpush1.bf16.msra.mxu0 0
        %2394 = vmatprep.subr.bf16.mxu0 0
        %2395 = vmatpush1.bf16.msra.mxu0 0
        %2396 = vmatprep.subr.bf16.mxu0 0
        %2397 = vmatpush1.bf16.msra.mxu0 0
        %2398 = vmatprep.subr.bf16.mxu0 0
        %2399 = vmatpush1.bf16.msra.mxu0 0
        %2400 = vmatprep.subr.bf16.mxu0 0
        %2401 = vmatpush1.bf16.msra.mxu0 0
        %2402 = vmatprep.subr.bf16.mxu0 0
        %2403 = vmatpush1.bf16.msra.mxu0 0
        %2404 = vmatprep.subr.bf16.mxu0 0
        %2405 = vmatpush1.bf16.msra.mxu0 0
        %2406 = vmatprep.mubr.bf16.mxu0 0
        %2407 = vmatmul.mubr.bf16.gmra.mrb[0].mxu0 %v1385
        %v2408 = vpop.f32.mrb[0].mxu0
        %v2409 = vadd.f32 0.0, %v2408
        %v2410 = vpop.f32.mrb[0].mxu0
        %v2411 = vpop.f32.mrb[0].mxu0
        %v2412 = vpop.f32.mrb[0].mxu0
        %2413 = vdwg.mxu0
        %s2414 = scalar_lea.vmem %s14, 48
        %v2415 = vld [vmem:[%s2414] sm:$0xf]
        %v2416 = vld [vmem:[%s2414 + $0x4] sm:$0xf]
        %v2417 = vld [vmem:[%s2414 + $0x8] sm:$0xf]
        %v2418 = vld [vmem:[%s2414 + $0xc] sm:$0xf]
        %v2423 = vunpack.c.l.b16 %v2415
        %v2424 = vunpack.c.l.b16 %v2416
        %v2425 = vunpack.c.l.b16 %v2417
        %v2426 = vunpack.c.l.b16 %v2418
        %v2427 = vpack.c.b16 %v2424, %v2423
        %v2428 = vpack.c.b16 %v2426, %v2425
        %2431 = vmatprep.subr.bf16.mxu0 0
        %2432 = vmatpush1.bf16.msra.mxu0 %v2427
        %2433 = vmatprep.subr.bf16.mxu0 0
        %2434 = vmatpush1.bf16.msra.mxu0 %v2428
        %2435 = vmatprep.subr.bf16.mxu0 0
        %2436 = vmatpush1.bf16.msra.mxu0 0
        %2437 = vmatprep.subr.bf16.mxu0 0
        %2438 = vmatpush1.bf16.msra.mxu0 0
        %2439 = vmatprep.subr.bf16.mxu0 0
        %2440 = vmatpush1.bf16.msra.mxu0 0
        %2441 = vmatprep.subr.bf16.mxu0 0
        %2442 = vmatpush1.bf16.msra.mxu0 0
        %2443 = vmatprep.subr.bf16.mxu0 0
        %2444 = vmatpush1.bf16.msra.mxu0 0
        %2445 = vmatprep.subr.bf16.mxu0 0
        %2446 = vmatpush1.bf16.msra.mxu0 0
        %2447 = vmatprep.subr.bf16.mxu0 0
        %2448 = vmatpush1.bf16.msra.mxu0 0
        %2449 = vmatprep.subr.bf16.mxu0 0
        %2450 = vmatpush1.bf16.msra.mxu0 0
        %2451 = vmatprep.subr.bf16.mxu0 0
        %2452 = vmatpush1.bf16.msra.mxu0 0
        %2453 = vmatprep.subr.bf16.mxu0 0
        %2454 = vmatpush1.bf16.msra.mxu0 0
        %2455 = vmatprep.subr.bf16.mxu0 0
        %2456 = vmatpush1.bf16.msra.mxu0 0
        %2457 = vmatprep.subr.bf16.mxu0 0
        %2458 = vmatpush1.bf16.msra.mxu0 0
        %2459 = vmatprep.subr.bf16.mxu0 0
        %2460 = vmatpush1.bf16.msra.mxu0 0
        %2461 = vmatprep.subr.bf16.mxu0 0
        %2462 = vmatpush1.bf16.msra.mxu0 0
        %2463 = vmatprep.mubr.bf16.mxu0 0
        %2464 = vmatmul.mubr.bf16.gmra.mrb[0].mxu0 %v1444
        %v2465 = vpop.f32.mrb[0].mxu0
        %v2466 = vadd.f32 0.0, %v2465
        %v2467 = vpop.f32.mrb[0].mxu0
        %v2468 = vpop.f32.mrb[0].mxu0
        %v2469 = vpop.f32.mrb[0].mxu0
        %2470 = vdwg.mxu0
        %s2471 = scalar_lea.vmem %s15, 48
        %v2472 = vld [vmem:[%s2471] sm:$0xf]
        %v2473 = vld [vmem:[%s2471 + $0x4] sm:$0xf]
        %v2474 = vld [vmem:[%s2471 + $0x8] sm:$0xf]
        %v2475 = vld [vmem:[%s2471 + $0xc] sm:$0xf]
        %v2480 = vunpack.c.l.b16 %v2472
        %v2481 = vunpack.c.l.b16 %v2473
        %v2482 = vunpack.c.l.b16 %v2474
        %v2483 = vunpack.c.l.b16 %v2475
        %v2484 = vpack.c.b16 %v2481, %v2480
        %v2485 = vpack.c.b16 %v2483, %v2482
        %2488 = vmatprep.subr.bf16.mxu0 0
        %2489 = vmatpush1.bf16.msra.mxu0 %v2484
        %2490 = vmatprep.subr.bf16.mxu0 0
        %2491 = vmatpush1.bf16.msra.mxu0 %v2485
        %2492 = vmatprep.subr.bf16.mxu0 0
        %2493 = vmatpush1.bf16.msra.mxu0 0
        %2494 = vmatprep.subr.bf16.mxu0 0
        %2495 = vmatpush1.bf16.msra.mxu0 0
        %2496 = vmatprep.subr.bf16.mxu0 0
        %2497 = vmatpush1.bf16.msra.mxu0 0
        %2498 = vmatprep.subr.bf16.mxu0 0
        %2499 = vmatpush1.bf16.msra.mxu0 0
        %2500 = vmatprep.subr.bf16.mxu0 0
        %2501 = vmatpush1.bf16.msra.mxu0 0
        %2502 = vmatprep.subr.bf16.mxu0 0
        %2503 = vmatpush1.bf16.msra.mxu0 0
        %2504 = vmatprep.subr.bf16.mxu0 0
        %2505 = vmatpush1.bf16.msra.mxu0 0
        %2506 = vmatprep.subr.bf16.mxu0 0
        %2507 = vmatpush1.bf16.msra.mxu0 0
        %2508 = vmatprep.subr.bf16.mxu0 0
        %2509 = vmatpush1.bf16.msra.mxu0 0
        %2510 = vmatprep.subr.bf16.mxu0 0
        %2511 = vmatpush1.bf16.msra.mxu0 0
        %2512 = vmatprep.subr.bf16.mxu0 0
        %2513 = vmatpush1.bf16.msra.mxu0 0
        %2514 = vmatprep.subr.bf16.mxu0 0
        %2515 = vmatpush1.bf16.msra.mxu0 0
        %2516 = vmatprep.subr.bf16.mxu0 0
        %2517 = vmatpush1.bf16.msra.mxu0 0
        %2518 = vmatprep.subr.bf16.mxu0 0
        %2519 = vmatpush1.bf16.msra.mxu0 0
        %2520 = vmatprep.mubr.bf16.mxu0 0
        %2521 = vmatmul.mubr.bf16.gmra.mrb[0].mxu0 %v1444
        %v2522 = vpop.f32.mrb[0].mxu0
        %v2523 = vadd.f32 0.0, %v2522
        %v2524 = vpop.f32.mrb[0].mxu0
        %v2525 = vpop.f32.mrb[0].mxu0
        %v2526 = vpop.f32.mrb[0].mxu0
        %2527 = vdwg.mxu0
        %v2528 = vpack.c.bf16 %v2409, %v2409
        %v2529 = vpack.c.bf16 %v2466, %v2466
        %v2531 = vsel %vm1544, %v2528, 0
        %v2534 = vsel %vm1544, %v2529, 0
        %2536 = vmatprep.subr.bf16.mxu0 0
        %2537 = vmatpush1.bf16.xpose.msra.mxu0 %v2534
        %2538 = vmatprep.subr.bf16.mxu0 0
        %2539 = vmatpush1.bf16.xpose.msra.mxu0 0
        %2540 = vmatprep.subr.bf16.mxu0 0
        %2541 = vmatpush1.bf16.xpose.msra.mxu0 0
        %2542 = vmatprep.subr.bf16.mxu0 0
        %2543 = vmatpush1.bf16.xpose.msra.mxu0 0
        %2544 = vmatprep.subr.bf16.mxu0 0
        %2545 = vmatpush1.bf16.xpose.msra.mxu0 0
        %2546 = vmatprep.subr.bf16.mxu0 0
        %2547 = vmatpush1.bf16.xpose.msra.mxu0 0
        %2548 = vmatprep.subr.bf16.mxu0 0
        %2549 = vmatpush1.bf16.xpose.msra.mxu0 0
        %2550 = vmatprep.subr.bf16.mxu0 0
        %2551 = vmatpush1.bf16.xpose.msra.mxu0 0
        %2552 = vmatprep.subr.bf16.mxu0 0
        %2553 = vmatpush1.bf16.xpose.msra.mxu0 0
        %2554 = vmatprep.subr.bf16.mxu0 0
        %2555 = vmatpush1.bf16.xpose.msra.mxu0 0
        %2556 = vmatprep.subr.bf16.mxu0 0
        %2557 = vmatpush1.bf16.xpose.msra.mxu0 0
        %2558 = vmatprep.subr.bf16.mxu0 0
        %2559 = vmatpush1.bf16.xpose.msra.mxu0 0
        %2560 = vmatprep.subr.bf16.mxu0 0
        %2561 = vmatpush1.bf16.xpose.msra.mxu0 0
        %2562 = vmatprep.subr.bf16.mxu0 0
        %2563 = vmatpush1.bf16.xpose.msra.mxu0 0
        %2564 = vmatprep.subr.bf16.mxu0 0
        %2565 = vmatpush1.bf16.xpose.msra.mxu0 0
        %2566 = vmatprep.subr.bf16.mxu0 0
        %2567 = vmatpush1.bf16.xpose.msra.mxu0 0
        %2568 = vmatprep.mubr.bf16.mxu0 0
        %2569 = vmatmul.mubr.bf16.gmra.mrb[0].mxu0 %v2531
        %v2570 = vpop.f32.mrb[0].mxu0
        %v2571 = vadd.f32 0.0, %v2570
        %v2572 = vpop.f32.mrb[0].mxu0
        %v2573 = vpop.f32.mrb[0].mxu0
        %v2574 = vpop.f32.mrb[0].mxu0
        %2575 = vdwg.mxu0
        %v2576 = vmul.f32 %v2571, 0.17677669
        %v2577 = vsel %vm1544, %v2576, -inf
        %2578 = vmax.xlane.f32.xlu0 %v2577
        %v2579 = vpop.xlane.xlu0 %2578
        %v2580 = vsub.f32 %v2576, %v2579
        %v2581 = vmul.f32 %v2580, 1.442695
        %v2582 = vpow.pop %v2581
        %v2583 = vsel %vm1544, %v2582, 0.0
        %2584 = vadd.xlane.f32.xlu0 %v2583
        %v2585 = vpop.xlane.xlu0 %2584
        %v2586 = vrcp.pop %v2585
        %v2587 = vmul.f32 %v2582, %v2586
        %v2588 = vpack.c.bf16 %v2587, %v2587
        %v2589 = vpack.c.bf16 %v2523, %v2523
        %v2591 = vsel %vm1544, %v2588, 0
        %v2594 = vsel %vm1608, %v2589, 0
        %2596 = vmatprep.subr.bf16.mxu0 0
        %2597 = vmatpush1.bf16.msra.mxu0 %v2594
        %2598 = vmatprep.subr.bf16.mxu0 0
        %2599 = vmatpush1.bf16.msra.mxu0 0
        %2600 = vmatprep.subr.bf16.mxu0 0
        %2601 = vmatpush1.bf16.msra.mxu0 0
        %2602 = vmatprep.subr.bf16.mxu0 0
        %2603 = vmatpush1.bf16.msra.mxu0 0
        %2604 = vmatprep.subr.bf16.mxu0 0
        %2605 = vmatpush1.bf16.msra.mxu0 0
        %2606 = vmatprep.subr.bf16.mxu0 0
        %2607 = vmatpush1.bf16.msra.mxu0 0
        %2608 = vmatprep.subr.bf16.mxu0 0
        %2609 = vmatpush1.bf16.msra.mxu0 0
        %2610 = vmatprep.subr.bf16.mxu0 0
        %2611 = vmatpush1.bf16.msra.mxu0 0
        %2612 = vmatprep.subr.bf16.mxu0 0
        %2613 = vmatpush1.bf16.msra.mxu0 0
        %2614 = vmatprep.subr.bf16.mxu0 0
        %2615 = vmatpush1.bf16.msra.mxu0 0
        %2616 = vmatprep.subr.bf16.mxu0 0
        %2617 = vmatpush1.bf16.msra.mxu0 0
        %2618 = vmatprep.subr.bf16.mxu0 0
        %2619 = vmatpush1.bf16.msra.mxu0 0
        %2620 = vmatprep.subr.bf16.mxu0 0
        %2621 = vmatpush1.bf16.msra.mxu0 0
        %2622 = vmatprep.subr.bf16.mxu0 0
        %2623 = vmatpush1.bf16.msra.mxu0 0
        %2624 = vmatprep.subr.bf16.mxu0 0
        %2625 = vmatpush1.bf16.msra.mxu0 0
        %2626 = vmatprep.subr.bf16.mxu0 0
        %2627 = vmatpush1.bf16.msra.mxu0 0
        %2628 = vmatprep.mubr.bf16.mxu0 0
        %2629 = vmatmul.mubr.bf16.gmra.mrb[0].mxu0 %v2591
        %v2630 = vpop.f32.mrb[0].mxu0
        %v2631 = vadd.f32 0.0, %v2630
        %v2632 = vpop.f32.mrb[0].mxu0
        %v2633 = vpop.f32.mrb[0].mxu0
        %v2634 = vpop.f32.mrb[0].mxu0
        %2635 = vdwg.mxu0
        %v2636 = vpack.c.bf16 %v2631, %v2631
        %s2637 = scalar_lea.vmem %s16, 12
        %v2638 = vld [vmem:[%s2637] sm:$0xf]
        %v2640 = vsel %vm1544, %v2636, 0
        %v2643 = vsel %vm1608, %v2638, 0
        %2645 = vmatprep.subr.bf16.mxu0 0
        %2646 = vmatpush1.bf16.msra.mxu0 %v2643
        %2647 = vmatprep.subr.bf16.mxu0 0
        %2648 = vmatpush1.bf16.msra.mxu0 0
        %2649 = vmatprep.subr.bf16.mxu0 0
        %2650 = vmatpush1.bf16.msra.mxu0 0
        %2651 = vmatprep.subr.bf16.mxu0 0
        %2652 = vmatpush1.bf16.msra.mxu0 0
        %2653 = vmatprep.subr.bf16.mxu0 0
        %2654 = vmatpush1.bf16.msra.mxu0 0
        %2655 = vmatprep.subr.bf16.mxu0 0
        %2656 = vmatpush1.bf16.msra.mxu0 0
        %2657 = vmatprep.subr.bf16.mxu0 0
        %2658 = vmatpush1.bf16.msra.mxu0 0
        %2659 = vmatprep.subr.bf16.mxu0 0
        %2660 = vmatpush1.bf16.msra.mxu0 0
        %2661 = vmatprep.subr.bf16.mxu0 0
        %2662 = vmatpush1.bf16.msra.mxu0 0
        %2663 = vmatprep.subr.bf16.mxu0 0
        %2664 = vmatpush1.bf16.msra.mxu0 0
        %2665 = vmatprep.subr.bf16.mxu0 0
        %2666 = vmatpush1.bf16.msra.mxu0 0
        %2667 = vmatprep.subr.bf16.mxu0 0
        %2668 = vmatpush1.bf16.msra.mxu0 0
        %2669 = vmatprep.subr.bf16.mxu0 0
        %2670 = vmatpush1.bf16.msra.mxu0 0
        %2671 = vmatprep.subr.bf16.mxu0 0
        %2672 = vmatpush1.bf16.msra.mxu0 0
        %2673 = vmatprep.subr.bf16.mxu0 0
        %2674 = vmatpush1.bf16.msra.mxu0 0
        %2675 = vmatprep.subr.bf16.mxu0 0
        %2676 = vmatpush1.bf16.msra.mxu0 0
        %2677 = vmatprep.mubr.bf16.mxu0 0
        %2678 = vmatmul.mubr.bf16.gmra.mrb[0].mxu0 %v2640
        %v2679 = vpop.f32.mrb[0].mxu0
        %v2680 = vadd.f32 0.0, %v2679
        %v2681 = vpop.f32.mrb[0].mxu0
        %v2682 = vpop.f32.mrb[0].mxu0
        %v2683 = vpop.f32.mrb[0].mxu0
        %2684 = vdwg.mxu0
        %v2685 = vadd.f32 %v2356, %v2680
        %v2686 = vadd.f32 %v1365, %v2685
        %2687 = vst.msk [vmem:[%s554] sm:$0xff] %vm585, %v2686
        %s2688 = sand.u32 %s406, 1
        %s2689 = scalar_lea.sflag [#allocation4], %s2688
        %s2690 = sand.u32 %s406, 1
        %s2691 = smul.addr %s2690, 8
        %s2692 = scalar_lea.vmem [#allocation3], %s2691
        // Predicated region
        $region89: #{tpu_custom_call.1} parent=87 // pred_check
          %p2693 = pneg %p416
        $region90: #{tpu_custom_call.1} parent=87 // pred_check_branch
          %2695 = sbr.rel (%p2693) target = $region92
        $region91: #{tpu_custom_call.1} parent=87 // pred_region
          %s2697 = ssub.s32 128, 128
          %2698 = vsyncadd %s2689, %s2697
          %s2699 = smul.addr %s31, 128
          %s2700 = scalar_lea.hbm %s17, %s2699
          %s2702 = sshll.u32 %s2692, 4
          %s2703 = int_to_ptr.vmem [resolvable:$true] %s2702
          %2705 = dma.vmem_to_hbm [thread:$0]  %s2703, 128, %s2700, %s2689
        $region92: #{tpu_custom_call.1} parent=87 // pred_fallthru
          _
      $region88: #{tpu_custom_call.1} parent=5 // pred_fallthru
        _
      %p2706 = scmp.le.s32.totalorder 2, %s26
      // Predicated region
      $region93: #{tpu_custom_call.1} parent=5 // pred_check
        %p2707 = pneg %p2706
      $region94: #{tpu_custom_call.1} parent=5 // pred_check_branch
        %2709 = sbr.rel (%p2707) target = $region96
      $region95: #{tpu_custom_call.1} parent=5 // pred_region
        %s2710 = ssub.s32 %s26, 2
        // Predicated region
        $region97: #{tpu_custom_call.1} parent=95 // pred_check
          %p2711 = pneg %p422
        $region98: #{tpu_custom_call.1} parent=95 // pred_check_branch
          %2713 = sbr.rel (%p2711) target = $region100
        $region99: #{tpu_custom_call.1} parent=95 // pred_region
          %s2714 = sand.u32 %s407, 1
          %s2715 = scalar_lea.sflag [#allocation4], %s2714
          %s2716 = sand.u32 %s407, 1
          %s2717 = smul.addr %s2716, 8
          %s2718 = scalar_lea.vmem [#allocation3], %s2717
          %2719 = dma.done %s2715, 128
        $region100: #{tpu_custom_call.1} parent=95 // pred_fallthru
          _
      $region96: #{tpu_custom_call.1} parent=5 // pred_fallthru
        _
    $region6: #{tpu_custom_call.1} parent=1 // loop_footer
      %s30 = sadd.s32 1, %s26
    $region7: #{tpu_custom_call.1} parent=1 // loop_footer_branch
      %25 = sbr.rel target = $region3
    $region8: #{tpu_custom_call.1} parent=1 // loop_exit
      _
    %2720 = vsyncpa [#allocation4], 1
    %s2721 = scalar_lea.sflag [#allocation4], 1
    %2722 = vsyncpa %s2721, 1

</llo_original>
